<compile_context>
chip_gen: v7x
topology: tpu7x:2x2x1
jax: 0.10.0
libtpu: 0.0.40
codegen_flags: <defaults>
</compile_context>

<pallas_src>
import math
import jax
import jax.numpy as jnp
from jax.experimental import pallas as pl
from jax.experimental.pallas import tpu as pltpu

# ---------------- model dims (small, synthetic) ----------------
B = 2              # batch
S = 8              # sequence length
H = 64             # hidden size        (real xlm-roberta-base: 768)
NUM_HEADS = 4      # attention heads    (real: 12)
HEAD_DIM = H // NUM_HEADS
FFN = 128          # intermediate size  (real: 3072)
NUM_LAYERS = 2     # encoder layers     (real: 12)
VOCAB = 128
NUM_LABELS = 4
PAD_LABELS = 128   # lane-dense classifier width (real logits = first NUM_LABELS columns)
LN_EPS = 1e-5
PAD_IDX = 1        # RoBERTa position-embedding padding index
ROWS = B * S       # flattened token rows

# rows of the packed per-layer vector array (6, H)
_BO, _LN1G, _LN1B, _B2, _LN2G, _LN2B = range(6)


def _ln(x, g, b, eps=LN_EPS):
    mu = jnp.mean(x, axis=-1, keepdims=True)
    var = jnp.mean((x - mu) ** 2, axis=-1, keepdims=True)
    return (x - mu) * jax.lax.rsqrt(var + eps) * g + b


def _erf(x):
    # Abramowitz & Stegun 7.1.26 (max abs err 1.5e-7): exact-GELU behaviour using only
    # exp / compare / select / mul / add (no reliance on an erf lowering).
    a1, a2, a3, a4, a5 = 0.254829592, -0.284496736, 1.421413741, -1.453152027, 1.061405429
    p = 0.3275911
    sgn = jnp.where(x >= 0.0, 1.0, -1.0)
    ax = jnp.abs(x)
    t = 1.0 / (1.0 + p * ax)
    poly = ((((a5 * t + a4) * t + a3) * t + a2) * t + a1) * t
    return sgn * (1.0 - poly * jnp.exp(-ax * ax))


def _gelu_exact(x):
    return 0.5 * x * (1.0 + _erf(x * 0.7071067811865476))


# ---------------- fused forward kernel ----------------

def fused_forward_kernel(x_ref, maskb_ref, labels_ref,
                         embln_ref, wqkv_ref, wo_ref, w1_ref, w2_ref,
                         bqkv_ref, vecs_ref, b1_ref, wc_ref, bc_ref,
                         logits_ref, loss_ref):
    """Whole CustomModel forward for the full batch in one invocation.

    x_ref:      (B*S, H)                 embedding sum (word + pos + type), f32
    maskb_ref:  (NUM_HEADS*B*S, B*S)     block-diagonal + key-padding additive bias
    labels_ref: (B, 1)                   int32 labels
    embln_ref:  (2, H)                   embedding LayerNorm gamma/beta
    wqkv_ref:   (L, H, 3H)   bf16        fused Q|K|V projection
    wo_ref:     (L, H, H)    bf16        attention output projection
    w1_ref:     (L, H, FFN)  bf16        FFN up
    w2_ref:     (L, FFN, H)  bf16        FFN down
    bqkv_ref:   (L, 1, 3H)   f32         packed Q|K|V bias
    vecs_ref:   (L, 6, H)    f32         packed bo / ln1 / b2 / ln2 vectors
    b1_ref:     (L, 1, FFN)  f32         FFN up bias
    wc_ref:     (H, PAD_LABELS) bf16     classifier weight (zero-padded past NUM_LABELS)
    bc_ref:     (1, PAD_LABELS) f32      classifier bias
    """
    scale = 1.0 / math.sqrt(HEAD_DIM)

    x = x_ref[...].astype(jnp.float32)                       # (ROWS, H)
    embln = embln_ref[...]
    h = _ln(x, embln[0:1, :], embln[1:2, :])                 # embedding LayerNorm (f32)

    mask_bias = maskb_ref[...]                               # hoisted: loaded once, reused per layer

    for l in range(NUM_LAYERS):                              # static unrolled layer loop
        wqkv = wqkv_ref[l]                                   # (H, 3H)  bf16
        wo = wo_ref[l]                                       # (H, H)   bf16
        w1 = w1_ref[l]                                       # (H, FFN) bf16
        w2 = w2_ref[l]                                       # (FFN, H) bf16
        bqkv = bqkv_ref[l]                                   # (1, 3H)  f32
        vecs = vecs_ref[l]                                   # (6, H)   f32
        b1 = b1_ref[l]                                       # (1, FFN) f32

        # fused QKV projection for the whole batch + single full-width bias add
        qkv = jnp.dot(h.astype(jnp.bfloat16), wqkv,
                      preferred_element_type=jnp.float32) + bqkv          # (ROWS, 3H) f32
        q = (qkv[:, 0:H] * scale).astype(jnp.bfloat16)
        k = qkv[:, H:2 * H].astype(jnp.bfloat16)
        v = qkv[:, 2 * H:3 * H].astype(jnp.bfloat16)

        # flattened-batch attention: one (ROWS, ROWS) score matmul per head
        score_blocks = []
        for hh in range(NUM_HEADS):
            c0 = hh * HEAD_DIM
            score_blocks.append(jax.lax.dot_general(
                q[:, c0:c0 + HEAD_DIM], k[:, c0:c0 + HEAD_DIM],
                (((1,), (1,)), ((), ())),
                preferred_element_type=jnp.float32))                       # (ROWS, ROWS)
        # stack heads along sublanes and apply block-diagonal mask, ONE softmax per layer
        scores = jnp.concatenate(score_blocks, axis=0) + mask_bias         # (NH*ROWS, ROWS)
        probs = jax.nn.softmax(scores, axis=-1).astype(jnp.bfloat16)

        # per-head context, then lane-concat and a single K=H Wo matmul
        ctx_blocks = []
        for hh in range(NUM_HEADS):
            c0 = hh * HEAD_DIM
            ctx_blocks.append(jnp.dot(probs[hh * ROWS:(hh + 1) * ROWS, :],
                                      v[:, c0:c0 + HEAD_DIM],
                                      preferred_element_type=jnp.float32))  # (ROWS, HEAD_DIM)
        ctx = jnp.concatenate(ctx_blocks, axis=1)                           # (ROWS, H)

        attn = jnp.dot(ctx.astype(jnp.bfloat16), wo,
                       preferred_element_type=jnp.float32) + vecs[_BO:_BO + 1, :]
        h1 = _ln(h + attn, vecs[_LN1G:_LN1G + 1, :], vecs[_LN1B:_LN1B + 1, :])

        # FFN on the flattened batch (exact erf GELU, as in HF XLM-RoBERTa)
        ff = jnp.dot(h1.astype(jnp.bfloat16), w1,
                     preferred_element_type=jnp.float32) + b1
        ff = _gelu_exact(ff)
        ff = jnp.dot(ff.astype(jnp.bfloat16), w2,
                     preferred_element_type=jnp.float32) + vecs[_B2:_B2 + 1, :]
        h = _ln(h1 + ff, vecs[_LN2G:_LN2G + 1, :], vecs[_LN2B:_LN2B + 1, :])

    # --- CLS pooling (Dropout(0.1) is identity in eval mode); stays in vregs ---
    pooled = jnp.concatenate([h[b * S:b * S + 1, :] for b in range(B)], axis=0)   # (B, H)

    # --- classifier (lane-dense, padded to 128 columns) ---
    logits = jnp.dot(pooled.astype(jnp.bfloat16), wc_ref[...],
                     preferred_element_type=jnp.float32) + bc_ref[...]    # (B, PAD_LABELS)
    logits_ref[...] = logits.astype(logits_ref.dtype)        # single full unmasked store

    # --- vectorized mean cross-entropy over the real NUM_LABELS columns ---
    col = jax.lax.broadcasted_iota(jnp.int32, (B, PAD_LABELS), 1)
    masked = jnp.where(col < NUM_LABELS, logits, -1e30)
    m = jnp.max(masked, axis=-1, keepdims=True)                            # (B, 1)
    lse = jnp.log(jnp.sum(jnp.exp(masked - m), axis=-1, keepdims=True)) + m
    lbl = labels_ref[...]                                                  # (B, 1) int32
    label_logit = jnp.sum(jnp.where(col == lbl, logits, 0.0), axis=-1, keepdims=True)
    per_ex = lse - label_logit                                             # (B, 1)
    loss_ref[...] = (jnp.sum(per_ex, axis=0, keepdims=True) * (1.0 / B)).astype(loss_ref.dtype)
    # TODO(synk): loss could be emitted via SMEM to avoid the 1-lane masked store.


# ---------------- wrapper ----------------

def fused_forward(x_flat, mask_bias, labels_col, p):
    vmem = pl.BlockSpec(memory_space=pltpu.MemorySpace.VMEM)
    return pl.pallas_call(
        fused_forward_kernel,
        out_shape=(jax.ShapeDtypeStruct((B, PAD_LABELS), jnp.float32),
                   jax.ShapeDtypeStruct((1, 1), jnp.float32)),
        in_specs=[vmem] * 13,
        out_specs=(vmem, vmem),
    )(x_flat, mask_bias, labels_col,
      p["emb_ln"], p["wqkv"], p["wo"], p["w1"], p["w2"],
      p["bqkv"], p["vecs"], p["b1"], p["wc_pad"], p["bc_pad"])


def init_params(key):
    ks = iter(jax.random.split(key, 64))
    std = 0.02
    wqkv_l, wo_l, w1_l, w2_l, bqkv_l, vecs_l, b1_l = [], [], [], [], [], [], []
    for _ in range(NUM_LAYERS):
        wq = std * jax.random.normal(next(ks), (H, H), jnp.float32)
        wk = std * jax.random.normal(next(ks), (H, H), jnp.float32)
        wv = std * jax.random.normal(next(ks), (H, H), jnp.float32)
        wo = std * jax.random.normal(next(ks), (H, H), jnp.float32)
        w1 = std * jax.random.normal(next(ks), (H, FFN), jnp.float32)
        w2 = std * jax.random.normal(next(ks), (FFN, H), jnp.float32)
        zeros_h = jnp.zeros((H,), jnp.float32)
        ones_h = jnp.ones((H,), jnp.float32)
        wqkv_l.append(jnp.concatenate([wq, wk, wv], axis=1).astype(jnp.bfloat16))  # (H, 3H)
        wo_l.append(wo.astype(jnp.bfloat16))
        w1_l.append(w1.astype(jnp.bfloat16))
        w2_l.append(w2.astype(jnp.bfloat16))
        bqkv_l.append(jnp.zeros((1, 3 * H), jnp.float32))
        # rows: bo, ln1g, ln1b, b2, ln2g, ln2b
        vecs_l.append(jnp.stack([zeros_h, ones_h, zeros_h, zeros_h, ones_h, zeros_h], axis=0))
        b1_l.append(jnp.zeros((1, FFN), jnp.float32))
    wc = std * jax.random.normal(next(ks), (H, NUM_LABELS), jnp.float32)
    p = {
        "word_emb": std * jax.random.normal(next(ks), (VOCAB, H), jnp.float32),
        "pos_emb": std * jax.random.normal(next(ks), (PAD_IDX + S + 1, H), jnp.float32),
        "type_emb": std * jax.random.normal(next(ks), (1, H), jnp.float32),
        "emb_ln": jnp.stack([jnp.ones((H,), jnp.float32),
                             jnp.zeros((H,), jnp.float32)], axis=0),   # (2, H)
        "wqkv": jnp.stack(wqkv_l, axis=0),    # (L, H, 3H)   bf16
        "wo": jnp.stack(wo_l, axis=0),        # (L, H, H)    bf16
        "w1": jnp.stack(w1_l, axis=0),        # (L, H, FFN)  bf16
        "w2": jnp.stack(w2_l, axis=0),        # (L, FFN, H)  bf16
        "bqkv": jnp.stack(bqkv_l, axis=0),    # (L, 1, 3H)   f32
        "vecs": jnp.stack(vecs_l, axis=0),    # (L, 6, H)    f32
        "b1": jnp.stack(b1_l, axis=0),        # (L, 1, FFN)  f32
        "wc_pad": jnp.pad(wc, ((0, 0), (0, PAD_LABELS - NUM_LABELS))).astype(jnp.bfloat16),
        "bc_pad": jnp.zeros((1, PAD_LABELS), jnp.float32),
    }
    return p


def custom_model_forward(params, input_ids, attention_mask, labels=None):
    # --- embeddings (gathers are XLA glue; everything else runs in the fused Pallas kernel) ---
    mask_f = attention_mask.astype(jnp.float32)
    mask_i = attention_mask.astype(jnp.int32)
    # RoBERTa padding-aware position ids: non-pad tokens get cumsum+pad_idx, pads get pad_idx
    position_ids = jnp.cumsum(mask_i, axis=1) * mask_i + PAD_IDX
    emb = (params["word_emb"][input_ids]
           + params["pos_emb"][position_ids]
           + params["type_emb"][0][None, None, :])
    x_flat = emb.reshape(B * S, H).astype(jnp.float32)

    # block-diagonal (within-example) + key-padding additive bias, pre-tiled per head
    ex_id = jnp.repeat(jnp.arange(B), S)                                   # (B*S,)
    same_ex = ex_id[:, None] == ex_id[None, :]
    key_valid = mask_f.reshape(B * S)[None, :] > 0.5
    bias = jnp.where(same_ex & key_valid, 0.0, -1e9).astype(jnp.float32)   # (B*S, B*S)
    mask_bias = jnp.tile(bias, (NUM_HEADS, 1))                             # (NH*B*S, B*S)

    if labels is not None:
        labels_col = labels.astype(jnp.int32).reshape(B, 1)
    else:
        labels_col = jnp.zeros((B, 1), jnp.int32)

    logits_pad, loss = fused_forward(x_flat, mask_bias, labels_col, params)
    logits = logits_pad[:, :NUM_LABELS]
    return {"logits": logits, "loss": loss[0, 0] if labels is not None else None}


if __name__ == "__main__":
    key = jax.random.PRNGKey(0)
    k_params, k_ids = jax.random.split(key)

    params = init_params(k_params)

    input_ids = jax.random.randint(k_ids, (B, S), 0, VOCAB, dtype=jnp.int32)
    attention_mask = jnp.ones((B, S), jnp.float32).at[1, 6:].set(0.0)  # pad last 2 tokens of ex 1
    labels = jnp.array([1, 3], dtype=jnp.int32)

    out = custom_model_forward(params, input_ids, attention_mask, labels)
    logits = jax.block_until_ready(out["logits"])
    loss = jax.block_until_ready(out["loss"])

    assert logits.shape == (B, NUM_LABELS)
    assert loss.shape == ()
    assert bool(jnp.isfinite(loss)) and bool(jnp.all(jnp.isfinite(logits)))
    print("KERNEL_OK")
</pallas_src>

<mosaic_0001>
module attributes {stable_mosaic.version = 11 : i64} {
  func.func @fused_forward_kernel(%arg0: memref<16x64xf32, #tpu.memory_space<vmem>>, %arg1: memref<64x16xf32, #tpu.memory_space<vmem>>, %arg2: memref<2x1xi32, #tpu.memory_space<vmem>>, %arg3: memref<2x64xf32, #tpu.memory_space<vmem>>, %arg4: memref<2x64x192xbf16, #tpu.memory_space<vmem>>, %arg5: memref<2x64x64xbf16, #tpu.memory_space<vmem>>, %arg6: memref<2x64x128xbf16, #tpu.memory_space<vmem>>, %arg7: memref<2x128x64xbf16, #tpu.memory_space<vmem>>, %arg8: memref<2x1x192xf32, #tpu.memory_space<vmem>>, %arg9: memref<2x6x64xf32, #tpu.memory_space<vmem>>, %arg10: memref<2x1x128xf32, #tpu.memory_space<vmem>>, %arg11: memref<64x128xbf16, #tpu.memory_space<vmem>>, %arg12: memref<1x128xf32, #tpu.memory_space<vmem>>, %arg13: memref<2x128xf32, #tpu.memory_space<vmem>>, %arg14: memref<1x1xf32, #tpu.memory_space<vmem>>) attributes {dimension_semantics = [], scalar_prefetch = 0 : i64, scratch_operands = 0 : i64, tpu.core_type = #tpu.core_type<tc>} {
    %c0 = arith.constant 0 : index
    %c0_0 = arith.constant 0 : index
    %0 = vector.load %arg0[%c0, %c0_0] : memref<16x64xf32, #tpu.memory_space<vmem>>, vector<16x64xf32>
    %c0_1 = arith.constant 0 : index
    %c0_2 = arith.constant 0 : index
    %1 = vector.load %arg3[%c0_1, %c0_2] : memref<2x64xf32, #tpu.memory_space<vmem>>, vector<2x64xf32>
    %2 = vector.extract_strided_slice %1 {offsets = [0, 0], sizes = [1, 64], strides = [1, 1]} : vector<2x64xf32> to vector<1x64xf32>
    %3 = vector.extract_strided_slice %1 {offsets = [1, 0], sizes = [1, 64], strides = [1, 1]} : vector<2x64xf32> to vector<1x64xf32>
    %cst = arith.constant dense<0.000000e+00> : vector<16xf32>
    %4 = vector.multi_reduction <add>, %0, %cst [1] : vector<16x64xf32> to vector<16xf32>
    %5 = vector.shape_cast %4 : vector<16xf32> to vector<16x1xf32>
    %cst_3 = arith.constant 6.400000e+01 : f32
    %6 = vector.broadcast %cst_3 : f32 to vector<16x1xf32>
    %7 = arith.divf %5, %6 : vector<16x1xf32>
    %8 = vector.broadcast %7 : vector<16x1xf32> to vector<16x64xf32>
    %9 = arith.subf %0, %8 : vector<16x64xf32>
    %10 = arith.mulf %9, %9 : vector<16x64xf32>
    %cst_4 = arith.constant dense<0.000000e+00> : vector<16xf32>
    %11 = vector.multi_reduction <add>, %10, %cst_4 [1] : vector<16x64xf32> to vector<16xf32>
    %12 = vector.shape_cast %11 : vector<16xf32> to vector<16x1xf32>
    %cst_5 = arith.constant 6.400000e+01 : f32
    %13 = vector.broadcast %cst_5 : f32 to vector<16x1xf32>
    %14 = arith.divf %12, %13 : vector<16x1xf32>
    %15 = vector.broadcast %7 : vector<16x1xf32> to vector<16x64xf32>
    %16 = arith.subf %0, %15 : vector<16x64xf32>
    %cst_6 = arith.constant 9.99999974E-6 : f32
    %17 = vector.broadcast %cst_6 : f32 to vector<16x1xf32>
    %18 = arith.addf %14, %17 : vector<16x1xf32>
    %19 = math.rsqrt %18 : vector<16x1xf32>
    %20 = vector.broadcast %19 : vector<16x1xf32> to vector<16x64xf32>
    %21 = arith.mulf %16, %20 : vector<16x64xf32>
    %22 = vector.broadcast %2 : vector<1x64xf32> to vector<16x64xf32>
    %23 = arith.mulf %21, %22 : vector<16x64xf32>
    %24 = vector.broadcast %3 : vector<1x64xf32> to vector<16x64xf32>
    %25 = arith.addf %23, %24 : vector<16x64xf32>
    %c0_7 = arith.constant 0 : index
    %c0_8 = arith.constant 0 : index
    %26 = vector.load %arg1[%c0_7, %c0_8] : memref<64x16xf32, #tpu.memory_space<vmem>>, vector<64x16xf32>
    %c0_9 = arith.constant 0 : index
    %c0_10 = arith.constant 0 : index
    %c0_11 = arith.constant 0 : index
    %27 = vector.load %arg4[%c0_9, %c0_10, %c0_11] : memref<2x64x192xbf16, #tpu.memory_space<vmem>>, vector<1x64x192xbf16>
    %28 = vector.shape_cast %27 : vector<1x64x192xbf16> to vector<64x192xbf16>
    %c0_12 = arith.constant 0 : index
    %c0_13 = arith.constant 0 : index
    %c0_14 = arith.constant 0 : index
    %29 = vector.load %arg5[%c0_12, %c0_13, %c0_14] : memref<2x64x64xbf16, #tpu.memory_space<vmem>>, vector<1x64x64xbf16>
    %30 = vector.shape_cast %29 : vector<1x64x64xbf16> to vector<64x64xbf16>
    %c0_15 = arith.constant 0 : index
    %c0_16 = arith.constant 0 : index
    %c0_17 = arith.constant 0 : index
    %31 = vector.load %arg6[%c0_15, %c0_16, %c0_17] : memref<2x64x128xbf16, #tpu.memory_space<vmem>>, vector<1x64x128xbf16>
    %32 = vector.shape_cast %31 : vector<1x64x128xbf16> to vector<64x128xbf16>
    %c0_18 = arith.constant 0 : index
    %c0_19 = arith.constant 0 : index
    %c0_20 = arith.constant 0 : index
    %33 = vector.load %arg7[%c0_18, %c0_19, %c0_20] : memref<2x128x64xbf16, #tpu.memory_space<vmem>>, vector<1x128x64xbf16>
    %34 = vector.shape_cast %33 : vector<1x128x64xbf16> to vector<128x64xbf16>
    %c0_21 = arith.constant 0 : index
    %c0_22 = arith.constant 0 : index
    %c0_23 = arith.constant 0 : index
    %35 = vector.load %arg8[%c0_21, %c0_22, %c0_23] : memref<2x1x192xf32, #tpu.memory_space<vmem>>, vector<1x1x192xf32>
    %36 = vector.shape_cast %35 : vector<1x1x192xf32> to vector<1x192xf32>
    %c0_24 = arith.constant 0 : index
    %c0_25 = arith.constant 0 : index
    %c0_26 = arith.constant 0 : index
    %37 = vector.load %arg9[%c0_24, %c0_25, %c0_26] : memref<2x6x64xf32, #tpu.memory_space<vmem>>, vector<1x6x64xf32>
    %38 = vector.shape_cast %37 : vector<1x6x64xf32> to vector<6x64xf32>
    %c0_27 = arith.constant 0 : index
    %c0_28 = arith.constant 0 : index
    %c0_29 = arith.constant 0 : index
    %39 = vector.load %arg10[%c0_27, %c0_28, %c0_29] : memref<2x1x128xf32, #tpu.memory_space<vmem>>, vector<1x1x128xf32>
    %40 = vector.shape_cast %39 : vector<1x1x128xf32> to vector<1x128xf32>
    %41 = arith.truncf %25 : vector<16x64xf32> to vector<16x64xbf16>
    %cst_30 = arith.constant dense<0.000000e+00> : vector<16x192xf32>
    %42 = tpu.matmul %41, %28, %cst_30 {dimension_numbers = #tpu.dot_dimension_numbers<[1], [0], [0], [1], [0, 0, 1, 1], [], []>} : vector<16x64xbf16>, vector<64x192xbf16>, vector<16x192xf32> -> vector<16x192xf32>
    %43 = vector.broadcast %36 : vector<1x192xf32> to vector<16x192xf32>
    %44 = arith.addf %42, %43 : vector<16x192xf32>
    %45 = vector.extract_strided_slice %44 {offsets = [0, 0], sizes = [16, 64], strides = [1, 1]} : vector<16x192xf32> to vector<16x64xf32>
    %cst_31 = arith.constant 2.500000e-01 : f32
    %46 = vector.broadcast %cst_31 : f32 to vector<16x64xf32>
    %47 = arith.mulf %45, %46 : vector<16x64xf32>
    %48 = arith.truncf %47 : vector<16x64xf32> to vector<16x64xbf16>
    %49 = vector.extract_strided_slice %44 {offsets = [0, 64], sizes = [16, 64], strides = [1, 1]} : vector<16x192xf32> to vector<16x64xf32>
    %50 = arith.truncf %49 : vector<16x64xf32> to vector<16x64xbf16>
    %51 = vector.extract_strided_slice %44 {offsets = [0, 128], sizes = [16, 64], strides = [1, 1]} : vector<16x192xf32> to vector<16x64xf32>
    %52 = arith.truncf %51 : vector<16x64xf32> to vector<16x64xbf16>
    %53 = vector.extract_strided_slice %48 {offsets = [0, 0], sizes = [16, 16], strides = [1, 1]} : vector<16x64xbf16> to vector<16x16xbf16>
    %54 = vector.extract_strided_slice %50 {offsets = [0, 0], sizes = [16, 16], strides = [1, 1]} : vector<16x64xbf16> to vector<16x16xbf16>
    %cst_32 = arith.constant dense<0.000000e+00> : vector<16x16xf32>
    %55 = tpu.matmul %53, %54, %cst_32 {dimension_numbers = #tpu.dot_dimension_numbers<[1], [1], [0], [0], [0, 0, 1, 0], [], []>} : vector<16x16xbf16>, vector<16x16xbf16>, vector<16x16xf32> -> vector<16x16xf32>
    %56 = vector.extract_strided_slice %48 {offsets = [0, 16], sizes = [16, 16], strides = [1, 1]} : vector<16x64xbf16> to vector<16x16xbf16>
    %57 = vector.extract_strided_slice %50 {offsets = [0, 16], sizes = [16, 16], strides = [1, 1]} : vector<16x64xbf16> to vector<16x16xbf16>
    %cst_33 = arith.constant dense<0.000000e+00> : vector<16x16xf32>
    %58 = tpu.matmul %56, %57, %cst_33 {dimension_numbers = #tpu.dot_dimension_numbers<[1], [1], [0], [0], [0, 0, 1, 0], [], []>} : vector<16x16xbf16>, vector<16x16xbf16>, vector<16x16xf32> -> vector<16x16xf32>
    %59 = vector.extract_strided_slice %48 {offsets = [0, 32], sizes = [16, 16], strides = [1, 1]} : vector<16x64xbf16> to vector<16x16xbf16>
    %60 = vector.extract_strided_slice %50 {offsets = [0, 32], sizes = [16, 16], strides = [1, 1]} : vector<16x64xbf16> to vector<16x16xbf16>
    %cst_34 = arith.constant dense<0.000000e+00> : vector<16x16xf32>
    %61 = tpu.matmul %59, %60, %cst_34 {dimension_numbers = #tpu.dot_dimension_numbers<[1], [1], [0], [0], [0, 0, 1, 0], [], []>} : vector<16x16xbf16>, vector<16x16xbf16>, vector<16x16xf32> -> vector<16x16xf32>
    %62 = vector.extract_strided_slice %48 {offsets = [0, 48], sizes = [16, 16], strides = [1, 1]} : vector<16x64xbf16> to vector<16x16xbf16>
    %63 = vector.extract_strided_slice %50 {offsets = [0, 48], sizes = [16, 16], strides = [1, 1]} : vector<16x64xbf16> to vector<16x16xbf16>
    %cst_35 = arith.constant dense<0.000000e+00> : vector<16x16xf32>
    %64 = tpu.matmul %62, %63, %cst_35 {dimension_numbers = #tpu.dot_dimension_numbers<[1], [1], [0], [0], [0, 0, 1, 0], [], []>} : vector<16x16xbf16>, vector<16x16xbf16>, vector<16x16xf32> -> vector<16x16xf32>
    %65 = tpu.concatenate %55, %58, %61, %64 in 0 : vector<16x16xf32>, vector<16x16xf32>, vector<16x16xf32>, vector<16x16xf32> -> vector<64x16xf32>
    %66 = arith.addf %65, %26 : vector<64x16xf32>
    %cst_36 = arith.constant dense<0xFF800000> : vector<64xf32>
    %67 = vector.multi_reduction <maximumf>, %66, %cst_36 [1] : vector<64x16xf32> to vector<64xf32>
    %cst_37 = arith.constant 0xFF800000 : f32
    %68 = vector.broadcast %cst_37 : f32 to vector<64xf32>
    %69 = arith.maximumf %68, %67 : vector<64xf32>
    %70 = vector.shape_cast %69 : vector<64xf32> to vector<64x1xf32>
    %71 = vector.broadcast %70 : vector<64x1xf32> to vector<64x16xf32>
    %72 = arith.subf %66, %71 : vector<64x16xf32>
    %73 = math.exp %72 : vector<64x16xf32>
    %cst_38 = arith.constant dense<0.000000e+00> : vector<64xf32>
    %74 = vector.multi_reduction <add>, %73, %cst_38 [1] : vector<64x16xf32> to vector<64xf32>
    %75 = vector.shape_cast %74 : vector<64xf32> to vector<64x1xf32>
    %76 = vector.broadcast %75 : vector<64x1xf32> to vector<64x16xf32>
    %77 = arith.divf %73, %76 : vector<64x16xf32>
    %78 = arith.truncf %77 : vector<64x16xf32> to vector<64x16xbf16>
    %79 = vector.extract_strided_slice %78 {offsets = [0, 0], sizes = [16, 16], strides = [1, 1]} : vector<64x16xbf16> to vector<16x16xbf16>
    %80 = vector.extract_strided_slice %52 {offsets = [0, 0], sizes = [16, 16], strides = [1, 1]} : vector<16x64xbf16> to vector<16x16xbf16>
    %cst_39 = arith.constant dense<0.000000e+00> : vector<16x16xf32>
    %81 = tpu.matmul %79, %80, %cst_39 {dimension_numbers = #tpu.dot_dimension_numbers<[1], [0], [0], [1], [0, 0, 1, 1], [], []>} : vector<16x16xbf16>, vector<16x16xbf16>, vector<16x16xf32> -> vector<16x16xf32>
    %82 = vector.extract_strided_slice %78 {offsets = [16, 0], sizes = [16, 16], strides = [1, 1]} : vector<64x16xbf16> to vector<16x16xbf16>
    %83 = vector.extract_strided_slice %52 {offsets = [0, 16], sizes = [16, 16], strides = [1, 1]} : vector<16x64xbf16> to vector<16x16xbf16>
    %cst_40 = arith.constant dense<0.000000e+00> : vector<16x16xf32>
    %84 = tpu.matmul %82, %83, %cst_40 {dimension_numbers = #tpu.dot_dimension_numbers<[1], [0], [0], [1], [0, 0, 1, 1], [], []>} : vector<16x16xbf16>, vector<16x16xbf16>, vector<16x16xf32> -> vector<16x16xf32>
    %85 = vector.extract_strided_slice %78 {offsets = [32, 0], sizes = [16, 16], strides = [1, 1]} : vector<64x16xbf16> to vector<16x16xbf16>
    %86 = vector.extract_strided_slice %52 {offsets = [0, 32], sizes = [16, 16], strides = [1, 1]} : vector<16x64xbf16> to vector<16x16xbf16>
    %cst_41 = arith.constant dense<0.000000e+00> : vector<16x16xf32>
    %87 = tpu.matmul %85, %86, %cst_41 {dimension_numbers = #tpu.dot_dimension_numbers<[1], [0], [0], [1], [0, 0, 1, 1], [], []>} : vector<16x16xbf16>, vector<16x16xbf16>, vector<16x16xf32> -> vector<16x16xf32>
    %88 = vector.extract_strided_slice %78 {offsets = [48, 0], sizes = [16, 16], strides = [1, 1]} : vector<64x16xbf16> to vector<16x16xbf16>
    %89 = vector.extract_strided_slice %52 {offsets = [0, 48], sizes = [16, 16], strides = [1, 1]} : vector<16x64xbf16> to vector<16x16xbf16>
    %cst_42 = arith.constant dense<0.000000e+00> : vector<16x16xf32>
    %90 = tpu.matmul %88, %89, %cst_42 {dimension_numbers = #tpu.dot_dimension_numbers<[1], [0], [0], [1], [0, 0, 1, 1], [], []>} : vector<16x16xbf16>, vector<16x16xbf16>, vector<16x16xf32> -> vector<16x16xf32>
    %91 = tpu.concatenate %81, %84, %87, %90 in 1 : vector<16x16xf32>, vector<16x16xf32>, vector<16x16xf32>, vector<16x16xf32> -> vector<16x64xf32>
    %92 = arith.truncf %91 : vector<16x64xf32> to vector<16x64xbf16>
    %cst_43 = arith.constant dense<0.000000e+00> : vector<16x64xf32>
    %93 = tpu.matmul %92, %30, %cst_43 {dimension_numbers = #tpu.dot_dimension_numbers<[1], [0], [0], [1], [0, 0, 1, 1], [], []>} : vector<16x64xbf16>, vector<64x64xbf16>, vector<16x64xf32> -> vector<16x64xf32>
    %94 = vector.extract_strided_slice %38 {offsets = [0, 0], sizes = [1, 64], strides = [1, 1]} : vector<6x64xf32> to vector<1x64xf32>
    %95 = vector.broadcast %94 : vector<1x64xf32> to vector<16x64xf32>
    %96 = arith.addf %93, %95 : vector<16x64xf32>
    %97 = arith.addf %25, %96 : vector<16x64xf32>
    %98 = vector.extract_strided_slice %38 {offsets = [1, 0], sizes = [1, 64], strides = [1, 1]} : vector<6x64xf32> to vector<1x64xf32>
    %99 = vector.extract_strided_slice %38 {offsets = [2, 0], sizes = [1, 64], strides = [1, 1]} : vector<6x64xf32> to vector<1x64xf32>
    %cst_44 = arith.constant dense<0.000000e+00> : vector<16xf32>
    %100 = vector.multi_reduction <add>, %97, %cst_44 [1] : vector<16x64xf32> to vector<16xf32>
    %101 = vector.shape_cast %100 : vector<16xf32> to vector<16x1xf32>
    %cst_45 = arith.constant 6.400000e+01 : f32
    %102 = vector.broadcast %cst_45 : f32 to vector<16x1xf32>
    %103 = arith.divf %101, %102 : vector<16x1xf32>
    %104 = vector.broadcast %103 : vector<16x1xf32> to vector<16x64xf32>
    %105 = arith.subf %97, %104 : vector<16x64xf32>
    %106 = arith.mulf %105, %105 : vector<16x64xf32>
    %cst_46 = arith.constant dense<0.000000e+00> : vector<16xf32>
    %107 = vector.multi_reduction <add>, %106, %cst_46 [1] : vector<16x64xf32> to vector<16xf32>
    %108 = vector.shape_cast %107 : vector<16xf32> to vector<16x1xf32>
    %cst_47 = arith.constant 6.400000e+01 : f32
    %109 = vector.broadcast %cst_47 : f32 to vector<16x1xf32>
    %110 = arith.divf %108, %109 : vector<16x1xf32>
    %111 = vector.broadcast %103 : vector<16x1xf32> to vector<16x64xf32>
    %112 = arith.subf %97, %111 : vector<16x64xf32>
    %cst_48 = arith.constant 9.99999974E-6 : f32
    %113 = vector.broadcast %cst_48 : f32 to vector<16x1xf32>
    %114 = arith.addf %110, %113 : vector<16x1xf32>
    %115 = math.rsqrt %114 : vector<16x1xf32>
    %116 = vector.broadcast %115 : vector<16x1xf32> to vector<16x64xf32>
    %117 = arith.mulf %112, %116 : vector<16x64xf32>
    %118 = vector.broadcast %98 : vector<1x64xf32> to vector<16x64xf32>
    %119 = arith.mulf %117, %118 : vector<16x64xf32>
    %120 = vector.broadcast %99 : vector<1x64xf32> to vector<16x64xf32>
    %121 = arith.addf %119, %120 : vector<16x64xf32>
    %122 = arith.truncf %121 : vector<16x64xf32> to vector<16x64xbf16>
    %cst_49 = arith.constant dense<0.000000e+00> : vector<16x128xf32>
    %123 = tpu.matmul %122, %32, %cst_49 {dimension_numbers = #tpu.dot_dimension_numbers<[1], [0], [0], [1], [0, 0, 1, 1], [], []>} : vector<16x64xbf16>, vector<64x128xbf16>, vector<16x128xf32> -> vector<16x128xf32>
    %124 = vector.broadcast %40 : vector<1x128xf32> to vector<16x128xf32>
    %125 = arith.addf %123, %124 : vector<16x128xf32>
    %cst_50 = arith.constant 5.000000e-01 : f32
    %126 = vector.broadcast %cst_50 : f32 to vector<16x128xf32>
    %127 = arith.mulf %126, %125 : vector<16x128xf32>
    %cst_51 = arith.constant 0.707106769 : f32
    %128 = vector.broadcast %cst_51 : f32 to vector<16x128xf32>
    %129 = arith.mulf %125, %128 : vector<16x128xf32>
    %cst_52 = arith.constant 0.000000e+00 : f32
    %130 = vector.broadcast %cst_52 : f32 to vector<16x128xf32>
    %131 = arith.cmpf oge, %129, %130 : vector<16x128xf32>
    %cst_53 = arith.constant 1.000000e+00 : f32
    %cst_54 = arith.constant -1.000000e+00 : f32
    %132 = vector.broadcast %cst_53 : f32 to vector<16x128xf32>
    %133 = vector.broadcast %cst_54 : f32 to vector<16x128xf32>
    %134 = arith.select %131, %132, %133 : vector<16x128xi1>, vector<16x128xf32>
    %135 = math.absf %129 : vector<16x128xf32>
    %cst_55 = arith.constant 0.327591091 : f32
    %136 = vector.broadcast %cst_55 : f32 to vector<16x128xf32>
    %137 = arith.mulf %136, %135 : vector<16x128xf32>
    %cst_56 = arith.constant 1.000000e+00 : f32
    %138 = vector.broadcast %cst_56 : f32 to vector<16x128xf32>
    %139 = arith.addf %138, %137 : vector<16x128xf32>
    %cst_57 = arith.constant 1.000000e+00 : f32
    %140 = vector.broadcast %cst_57 : f32 to vector<16x128xf32>
    %141 = arith.divf %140, %139 : vector<16x128xf32>
    %cst_58 = arith.constant 1.06140542 : f32
    %142 = vector.broadcast %cst_58 : f32 to vector<16x128xf32>
    %143 = arith.mulf %142, %141 : vector<16x128xf32>
    %cst_59 = arith.constant -1.45315206 : f32
    %144 = vector.broadcast %cst_59 : f32 to vector<16x128xf32>
    %145 = arith.addf %143, %144 : vector<16x128xf32>
    %146 = arith.mulf %145, %141 : vector<16x128xf32>
    %cst_60 = arith.constant 1.42141378 : f32
    %147 = vector.broadcast %cst_60 : f32 to vector<16x128xf32>
    %148 = arith.addf %146, %147 : vector<16x128xf32>
    %149 = arith.mulf %148, %141 : vector<16x128xf32>
    %cst_61 = arith.constant -0.284496725 : f32
    %150 = vector.broadcast %cst_61 : f32 to vector<16x128xf32>
    %151 = arith.addf %149, %150 : vector<16x128xf32>
    %152 = arith.mulf %151, %141 : vector<16x128xf32>
    %cst_62 = arith.constant 0.254829586 : f32
    %153 = vector.broadcast %cst_62 : f32 to vector<16x128xf32>
    %154 = arith.addf %152, %153 : vector<16x128xf32>
    %155 = arith.mulf %154, %141 : vector<16x128xf32>
    %cst_63 = arith.constant 0.000000e+00 : f32
    %156 = vector.broadcast %cst_63 : f32 to vector<16x128xf32>
    %157 = arith.subf %156, %135 : vector<16x128xf32>
    %158 = arith.mulf %157, %135 : vector<16x128xf32>
    %159 = math.exp %158 : vector<16x128xf32>
    %160 = arith.mulf %155, %159 : vector<16x128xf32>
    %cst_64 = arith.constant 1.000000e+00 : f32
    %161 = vector.broadcast %cst_64 : f32 to vector<16x128xf32>
    %162 = arith.subf %161, %160 : vector<16x128xf32>
    %163 = arith.mulf %134, %162 : vector<16x128xf32>
    %cst_65 = arith.constant 1.000000e+00 : f32
    %164 = vector.broadcast %cst_65 : f32 to vector<16x128xf32>
    %165 = arith.addf %164, %163 : vector<16x128xf32>
    %166 = arith.mulf %127, %165 : vector<16x128xf32>
    %167 = arith.truncf %166 : vector<16x128xf32> to vector<16x128xbf16>
    %cst_66 = arith.constant dense<0.000000e+00> : vector<16x64xf32>
    %168 = tpu.matmul %167, %34, %cst_66 {dimension_numbers = #tpu.dot_dimension_numbers<[1], [0], [0], [1], [0, 0, 1, 1], [], []>} : vector<16x128xbf16>, vector<128x64xbf16>, vector<16x64xf32> -> vector<16x64xf32>
    %169 = vector.extract_strided_slice %38 {offsets = [3, 0], sizes = [1, 64], strides = [1, 1]} : vector<6x64xf32> to vector<1x64xf32>
    %170 = vector.broadcast %169 : vector<1x64xf32> to vector<16x64xf32>
    %171 = arith.addf %168, %170 : vector<16x64xf32>
    %172 = arith.addf %121, %171 : vector<16x64xf32>
    %173 = vector.extract_strided_slice %38 {offsets = [4, 0], sizes = [1, 64], strides = [1, 1]} : vector<6x64xf32> to vector<1x64xf32>
    %174 = vector.extract_strided_slice %38 {offsets = [5, 0], sizes = [1, 64], strides = [1, 1]} : vector<6x64xf32> to vector<1x64xf32>
    %cst_67 = arith.constant dense<0.000000e+00> : vector<16xf32>
    %175 = vector.multi_reduction <add>, %172, %cst_67 [1] : vector<16x64xf32> to vector<16xf32>
    %176 = vector.shape_cast %175 : vector<16xf32> to vector<16x1xf32>
    %cst_68 = arith.constant 6.400000e+01 : f32
    %177 = vector.broadcast %cst_68 : f32 to vector<16x1xf32>
    %178 = arith.divf %176, %177 : vector<16x1xf32>
    %179 = vector.broadcast %178 : vector<16x1xf32> to vector<16x64xf32>
    %180 = arith.subf %172, %179 : vector<16x64xf32>
    %181 = arith.mulf %180, %180 : vector<16x64xf32>
    %cst_69 = arith.constant dense<0.000000e+00> : vector<16xf32>
    %182 = vector.multi_reduction <add>, %181, %cst_69 [1] : vector<16x64xf32> to vector<16xf32>
    %183 = vector.shape_cast %182 : vector<16xf32> to vector<16x1xf32>
    %cst_70 = arith.constant 6.400000e+01 : f32
    %184 = vector.broadcast %cst_70 : f32 to vector<16x1xf32>
    %185 = arith.divf %183, %184 : vector<16x1xf32>
    %186 = vector.broadcast %178 : vector<16x1xf32> to vector<16x64xf32>
    %187 = arith.subf %172, %186 : vector<16x64xf32>
    %cst_71 = arith.constant 9.99999974E-6 : f32
    %188 = vector.broadcast %cst_71 : f32 to vector<16x1xf32>
    %189 = arith.addf %185, %188 : vector<16x1xf32>
    %190 = math.rsqrt %189 : vector<16x1xf32>
    %191 = vector.broadcast %190 : vector<16x1xf32> to vector<16x64xf32>
    %192 = arith.mulf %187, %191 : vector<16x64xf32>
    %193 = vector.broadcast %173 : vector<1x64xf32> to vector<16x64xf32>
    %194 = arith.mulf %192, %193 : vector<16x64xf32>
    %195 = vector.broadcast %174 : vector<1x64xf32> to vector<16x64xf32>
    %196 = arith.addf %194, %195 : vector<16x64xf32>
    %c1 = arith.constant 1 : index
    %c0_72 = arith.constant 0 : index
    %c0_73 = arith.constant 0 : index
    %197 = vector.load %arg4[%c1, %c0_72, %c0_73] : memref<2x64x192xbf16, #tpu.memory_space<vmem>>, vector<1x64x192xbf16>
    %198 = vector.shape_cast %197 : vector<1x64x192xbf16> to vector<64x192xbf16>
    %c1_74 = arith.constant 1 : index
    %c0_75 = arith.constant 0 : index
    %c0_76 = arith.constant 0 : index
    %199 = vector.load %arg5[%c1_74, %c0_75, %c0_76] : memref<2x64x64xbf16, #tpu.memory_space<vmem>>, vector<1x64x64xbf16>
    %200 = vector.shape_cast %199 : vector<1x64x64xbf16> to vector<64x64xbf16>
    %c1_77 = arith.constant 1 : index
    %c0_78 = arith.constant 0 : index
    %c0_79 = arith.constant 0 : index
    %201 = vector.load %arg6[%c1_77, %c0_78, %c0_79] : memref<2x64x128xbf16, #tpu.memory_space<vmem>>, vector<1x64x128xbf16>
    %202 = vector.shape_cast %201 : vector<1x64x128xbf16> to vector<64x128xbf16>
    %c1_80 = arith.constant 1 : index
    %c0_81 = arith.constant 0 : index
    %c0_82 = arith.constant 0 : index
    %203 = vector.load %arg7[%c1_80, %c0_81, %c0_82] : memref<2x128x64xbf16, #tpu.memory_space<vmem>>, vector<1x128x64xbf16>
    %204 = vector.shape_cast %203 : vector<1x128x64xbf16> to vector<128x64xbf16>
    %c1_83 = arith.constant 1 : index
    %c0_84 = arith.constant 0 : index
    %c0_85 = arith.constant 0 : index
    %205 = vector.load %arg8[%c1_83, %c0_84, %c0_85] : memref<2x1x192xf32, #tpu.memory_space<vmem>>, vector<1x1x192xf32>
    %206 = vector.shape_cast %205 : vector<1x1x192xf32> to vector<1x192xf32>
    %c1_86 = arith.constant 1 : index
    %c0_87 = arith.constant 0 : index
    %c0_88 = arith.constant 0 : index
    %207 = vector.load %arg9[%c1_86, %c0_87, %c0_88] : memref<2x6x64xf32, #tpu.memory_space<vmem>>, vector<1x6x64xf32>
    %208 = vector.shape_cast %207 : vector<1x6x64xf32> to vector<6x64xf32>
    %c1_89 = arith.constant 1 : index
    %c0_90 = arith.constant 0 : index
    %c0_91 = arith.constant 0 : index
    %209 = vector.load %arg10[%c1_89, %c0_90, %c0_91] : memref<2x1x128xf32, #tpu.memory_space<vmem>>, vector<1x1x128xf32>
    %210 = vector.shape_cast %209 : vector<1x1x128xf32> to vector<1x128xf32>
    %211 = arith.truncf %196 : vector<16x64xf32> to vector<16x64xbf16>
    %cst_92 = arith.constant dense<0.000000e+00> : vector<16x192xf32>
    %212 = tpu.matmul %211, %198, %cst_92 {dimension_numbers = #tpu.dot_dimension_numbers<[1], [0], [0], [1], [0, 0, 1, 1], [], []>} : vector<16x64xbf16>, vector<64x192xbf16>, vector<16x192xf32> -> vector<16x192xf32>
    %213 = vector.broadcast %206 : vector<1x192xf32> to vector<16x192xf32>
    %214 = arith.addf %212, %213 : vector<16x192xf32>
    %215 = vector.extract_strided_slice %214 {offsets = [0, 0], sizes = [16, 64], strides = [1, 1]} : vector<16x192xf32> to vector<16x64xf32>
    %cst_93 = arith.constant 2.500000e-01 : f32
    %216 = vector.broadcast %cst_93 : f32 to vector<16x64xf32>
    %217 = arith.mulf %215, %216 : vector<16x64xf32>
    %218 = arith.truncf %217 : vector<16x64xf32> to vector<16x64xbf16>
    %219 = vector.extract_strided_slice %214 {offsets = [0, 64], sizes = [16, 64], strides = [1, 1]} : vector<16x192xf32> to vector<16x64xf32>
    %220 = arith.truncf %219 : vector<16x64xf32> to vector<16x64xbf16>
    %221 = vector.extract_strided_slice %214 {offsets = [0, 128], sizes = [16, 64], strides = [1, 1]} : vector<16x192xf32> to vector<16x64xf32>
    %222 = arith.truncf %221 : vector<16x64xf32> to vector<16x64xbf16>
    %223 = vector.extract_strided_slice %218 {offsets = [0, 0], sizes = [16, 16], strides = [1, 1]} : vector<16x64xbf16> to vector<16x16xbf16>
    %224 = vector.extract_strided_slice %220 {offsets = [0, 0], sizes = [16, 16], strides = [1, 1]} : vector<16x64xbf16> to vector<16x16xbf16>
    %cst_94 = arith.constant dense<0.000000e+00> : vector<16x16xf32>
    %225 = tpu.matmul %223, %224, %cst_94 {dimension_numbers = #tpu.dot_dimension_numbers<[1], [1], [0], [0], [0, 0, 1, 0], [], []>} : vector<16x16xbf16>, vector<16x16xbf16>, vector<16x16xf32> -> vector<16x16xf32>
    %226 = vector.extract_strided_slice %218 {offsets = [0, 16], sizes = [16, 16], strides = [1, 1]} : vector<16x64xbf16> to vector<16x16xbf16>
    %227 = vector.extract_strided_slice %220 {offsets = [0, 16], sizes = [16, 16], strides = [1, 1]} : vector<16x64xbf16> to vector<16x16xbf16>
    %cst_95 = arith.constant dense<0.000000e+00> : vector<16x16xf32>
    %228 = tpu.matmul %226, %227, %cst_95 {dimension_numbers = #tpu.dot_dimension_numbers<[1], [1], [0], [0], [0, 0, 1, 0], [], []>} : vector<16x16xbf16>, vector<16x16xbf16>, vector<16x16xf32> -> vector<16x16xf32>
    %229 = vector.extract_strided_slice %218 {offsets = [0, 32], sizes = [16, 16], strides = [1, 1]} : vector<16x64xbf16> to vector<16x16xbf16>
    %230 = vector.extract_strided_slice %220 {offsets = [0, 32], sizes = [16, 16], strides = [1, 1]} : vector<16x64xbf16> to vector<16x16xbf16>
    %cst_96 = arith.constant dense<0.000000e+00> : vector<16x16xf32>
    %231 = tpu.matmul %229, %230, %cst_96 {dimension_numbers = #tpu.dot_dimension_numbers<[1], [1], [0], [0], [0, 0, 1, 0], [], []>} : vector<16x16xbf16>, vector<16x16xbf16>, vector<16x16xf32> -> vector<16x16xf32>
    %232 = vector.extract_strided_slice %218 {offsets = [0, 48], sizes = [16, 16], strides = [1, 1]} : vector<16x64xbf16> to vector<16x16xbf16>
    %233 = vector.extract_strided_slice %220 {offsets = [0, 48], sizes = [16, 16], strides = [1, 1]} : vector<16x64xbf16> to vector<16x16xbf16>
    %cst_97 = arith.constant dense<0.000000e+00> : vector<16x16xf32>
    %234 = tpu.matmul %232, %233, %cst_97 {dimension_numbers = #tpu.dot_dimension_numbers<[1], [1], [0], [0], [0, 0, 1, 0], [], []>} : vector<16x16xbf16>, vector<16x16xbf16>, vector<16x16xf32> -> vector<16x16xf32>
    %235 = tpu.concatenate %225, %228, %231, %234 in 0 : vector<16x16xf32>, vector<16x16xf32>, vector<16x16xf32>, vector<16x16xf32> -> vector<64x16xf32>
    %236 = arith.addf %235, %26 : vector<64x16xf32>
    %cst_98 = arith.constant dense<0xFF800000> : vector<64xf32>
    %237 = vector.multi_reduction <maximumf>, %236, %cst_98 [1] : vector<64x16xf32> to vector<64xf32>
    %cst_99 = arith.constant 0xFF800000 : f32
    %238 = vector.broadcast %cst_99 : f32 to vector<64xf32>
    %239 = arith.maximumf %238, %237 : vector<64xf32>
    %240 = vector.shape_cast %239 : vector<64xf32> to vector<64x1xf32>
    %241 = vector.broadcast %240 : vector<64x1xf32> to vector<64x16xf32>
    %242 = arith.subf %236, %241 : vector<64x16xf32>
    %243 = math.exp %242 : vector<64x16xf32>
    %cst_100 = arith.constant dense<0.000000e+00> : vector<64xf32>
    %244 = vector.multi_reduction <add>, %243, %cst_100 [1] : vector<64x16xf32> to vector<64xf32>
    %245 = vector.shape_cast %244 : vector<64xf32> to vector<64x1xf32>
    %246 = vector.broadcast %245 : vector<64x1xf32> to vector<64x16xf32>
    %247 = arith.divf %243, %246 : vector<64x16xf32>
    %248 = arith.truncf %247 : vector<64x16xf32> to vector<64x16xbf16>
    %249 = vector.extract_strided_slice %248 {offsets = [0, 0], sizes = [16, 16], strides = [1, 1]} : vector<64x16xbf16> to vector<16x16xbf16>
    %250 = vector.extract_strided_slice %222 {offsets = [0, 0], sizes = [16, 16], strides = [1, 1]} : vector<16x64xbf16> to vector<16x16xbf16>
    %cst_101 = arith.constant dense<0.000000e+00> : vector<16x16xf32>
    %251 = tpu.matmul %249, %250, %cst_101 {dimension_numbers = #tpu.dot_dimension_numbers<[1], [0], [0], [1], [0, 0, 1, 1], [], []>} : vector<16x16xbf16>, vector<16x16xbf16>, vector<16x16xf32> -> vector<16x16xf32>
    %252 = vector.extract_strided_slice %248 {offsets = [16, 0], sizes = [16, 16], strides = [1, 1]} : vector<64x16xbf16> to vector<16x16xbf16>
    %253 = vector.extract_strided_slice %222 {offsets = [0, 16], sizes = [16, 16], strides = [1, 1]} : vector<16x64xbf16> to vector<16x16xbf16>
    %cst_102 = arith.constant dense<0.000000e+00> : vector<16x16xf32>
    %254 = tpu.matmul %252, %253, %cst_102 {dimension_numbers = #tpu.dot_dimension_numbers<[1], [0], [0], [1], [0, 0, 1, 1], [], []>} : vector<16x16xbf16>, vector<16x16xbf16>, vector<16x16xf32> -> vector<16x16xf32>
    %255 = vector.extract_strided_slice %248 {offsets = [32, 0], sizes = [16, 16], strides = [1, 1]} : vector<64x16xbf16> to vector<16x16xbf16>
    %256 = vector.extract_strided_slice %222 {offsets = [0, 32], sizes = [16, 16], strides = [1, 1]} : vector<16x64xbf16> to vector<16x16xbf16>
    %cst_103 = arith.constant dense<0.000000e+00> : vector<16x16xf32>
    %257 = tpu.matmul %255, %256, %cst_103 {dimension_numbers = #tpu.dot_dimension_numbers<[1], [0], [0], [1], [0, 0, 1, 1], [], []>} : vector<16x16xbf16>, vector<16x16xbf16>, vector<16x16xf32> -> vector<16x16xf32>
    %258 = vector.extract_strided_slice %248 {offsets = [48, 0], sizes = [16, 16], strides = [1, 1]} : vector<64x16xbf16> to vector<16x16xbf16>
    %259 = vector.extract_strided_slice %222 {offsets = [0, 48], sizes = [16, 16], strides = [1, 1]} : vector<16x64xbf16> to vector<16x16xbf16>
    %cst_104 = arith.constant dense<0.000000e+00> : vector<16x16xf32>
    %260 = tpu.matmul %258, %259, %cst_104 {dimension_numbers = #tpu.dot_dimension_numbers<[1], [0], [0], [1], [0, 0, 1, 1], [], []>} : vector<16x16xbf16>, vector<16x16xbf16>, vector<16x16xf32> -> vector<16x16xf32>
    %261 = tpu.concatenate %251, %254, %257, %260 in 1 : vector<16x16xf32>, vector<16x16xf32>, vector<16x16xf32>, vector<16x16xf32> -> vector<16x64xf32>
    %262 = arith.truncf %261 : vector<16x64xf32> to vector<16x64xbf16>
    %cst_105 = arith.constant dense<0.000000e+00> : vector<16x64xf32>
    %263 = tpu.matmul %262, %200, %cst_105 {dimension_numbers = #tpu.dot_dimension_numbers<[1], [0], [0], [1], [0, 0, 1, 1], [], []>} : vector<16x64xbf16>, vector<64x64xbf16>, vector<16x64xf32> -> vector<16x64xf32>
    %264 = vector.extract_strided_slice %208 {offsets = [0, 0], sizes = [1, 64], strides = [1, 1]} : vector<6x64xf32> to vector<1x64xf32>
    %265 = vector.broadcast %264 : vector<1x64xf32> to vector<16x64xf32>
    %266 = arith.addf %263, %265 : vector<16x64xf32>
    %267 = arith.addf %196, %266 : vector<16x64xf32>
    %268 = vector.extract_strided_slice %208 {offsets = [1, 0], sizes = [1, 64], strides = [1, 1]} : vector<6x64xf32> to vector<1x64xf32>
    %269 = vector.extract_strided_slice %208 {offsets = [2, 0], sizes = [1, 64], strides = [1, 1]} : vector<6x64xf32> to vector<1x64xf32>
    %cst_106 = arith.constant dense<0.000000e+00> : vector<16xf32>
    %270 = vector.multi_reduction <add>, %267, %cst_106 [1] : vector<16x64xf32> to vector<16xf32>
    %271 = vector.shape_cast %270 : vector<16xf32> to vector<16x1xf32>
    %cst_107 = arith.constant 6.400000e+01 : f32
    %272 = vector.broadcast %cst_107 : f32 to vector<16x1xf32>
    %273 = arith.divf %271, %272 : vector<16x1xf32>
    %274 = vector.broadcast %273 : vector<16x1xf32> to vector<16x64xf32>
    %275 = arith.subf %267, %274 : vector<16x64xf32>
    %276 = arith.mulf %275, %275 : vector<16x64xf32>
    %cst_108 = arith.constant dense<0.000000e+00> : vector<16xf32>
    %277 = vector.multi_reduction <add>, %276, %cst_108 [1] : vector<16x64xf32> to vector<16xf32>
    %278 = vector.shape_cast %277 : vector<16xf32> to vector<16x1xf32>
    %cst_109 = arith.constant 6.400000e+01 : f32
    %279 = vector.broadcast %cst_109 : f32 to vector<16x1xf32>
    %280 = arith.divf %278, %279 : vector<16x1xf32>
    %281 = vector.broadcast %273 : vector<16x1xf32> to vector<16x64xf32>
    %282 = arith.subf %267, %281 : vector<16x64xf32>
    %cst_110 = arith.constant 9.99999974E-6 : f32
    %283 = vector.broadcast %cst_110 : f32 to vector<16x1xf32>
    %284 = arith.addf %280, %283 : vector<16x1xf32>
    %285 = math.rsqrt %284 : vector<16x1xf32>
    %286 = vector.broadcast %285 : vector<16x1xf32> to vector<16x64xf32>
    %287 = arith.mulf %282, %286 : vector<16x64xf32>
    %288 = vector.broadcast %268 : vector<1x64xf32> to vector<16x64xf32>
    %289 = arith.mulf %287, %288 : vector<16x64xf32>
    %290 = vector.broadcast %269 : vector<1x64xf32> to vector<16x64xf32>
    %291 = arith.addf %289, %290 : vector<16x64xf32>
    %292 = arith.truncf %291 : vector<16x64xf32> to vector<16x64xbf16>
    %cst_111 = arith.constant dense<0.000000e+00> : vector<16x128xf32>
    %293 = tpu.matmul %292, %202, %cst_111 {dimension_numbers = #tpu.dot_dimension_numbers<[1], [0], [0], [1], [0, 0, 1, 1], [], []>} : vector<16x64xbf16>, vector<64x128xbf16>, vector<16x128xf32> -> vector<16x128xf32>
    %294 = vector.broadcast %210 : vector<1x128xf32> to vector<16x128xf32>
    %295 = arith.addf %293, %294 : vector<16x128xf32>
    %cst_112 = arith.constant 5.000000e-01 : f32
    %296 = vector.broadcast %cst_112 : f32 to vector<16x128xf32>
    %297 = arith.mulf %296, %295 : vector<16x128xf32>
    %cst_113 = arith.constant 0.707106769 : f32
    %298 = vector.broadcast %cst_113 : f32 to vector<16x128xf32>
    %299 = arith.mulf %295, %298 : vector<16x128xf32>
    %cst_114 = arith.constant 0.000000e+00 : f32
    %300 = vector.broadcast %cst_114 : f32 to vector<16x128xf32>
    %301 = arith.cmpf oge, %299, %300 : vector<16x128xf32>
    %cst_115 = arith.constant 1.000000e+00 : f32
    %cst_116 = arith.constant -1.000000e+00 : f32
    %302 = vector.broadcast %cst_115 : f32 to vector<16x128xf32>
    %303 = vector.broadcast %cst_116 : f32 to vector<16x128xf32>
    %304 = arith.select %301, %302, %303 : vector<16x128xi1>, vector<16x128xf32>
    %305 = math.absf %299 : vector<16x128xf32>
    %cst_117 = arith.constant 0.327591091 : f32
    %306 = vector.broadcast %cst_117 : f32 to vector<16x128xf32>
    %307 = arith.mulf %306, %305 : vector<16x128xf32>
    %cst_118 = arith.constant 1.000000e+00 : f32
    %308 = vector.broadcast %cst_118 : f32 to vector<16x128xf32>
    %309 = arith.addf %308, %307 : vector<16x128xf32>
    %cst_119 = arith.constant 1.000000e+00 : f32
    %310 = vector.broadcast %cst_119 : f32 to vector<16x128xf32>
    %311 = arith.divf %310, %309 : vector<16x128xf32>
    %cst_120 = arith.constant 1.06140542 : f32
    %312 = vector.broadcast %cst_120 : f32 to vector<16x128xf32>
    %313 = arith.mulf %312, %311 : vector<16x128xf32>
    %cst_121 = arith.constant -1.45315206 : f32
    %314 = vector.broadcast %cst_121 : f32 to vector<16x128xf32>
    %315 = arith.addf %313, %314 : vector<16x128xf32>
    %316 = arith.mulf %315, %311 : vector<16x128xf32>
    %cst_122 = arith.constant 1.42141378 : f32
    %317 = vector.broadcast %cst_122 : f32 to vector<16x128xf32>
    %318 = arith.addf %316, %317 : vector<16x128xf32>
    %319 = arith.mulf %318, %311 : vector<16x128xf32>
    %cst_123 = arith.constant -0.284496725 : f32
    %320 = vector.broadcast %cst_123 : f32 to vector<16x128xf32>
    %321 = arith.addf %319, %320 : vector<16x128xf32>
    %322 = arith.mulf %321, %311 : vector<16x128xf32>
    %cst_124 = arith.constant 0.254829586 : f32
    %323 = vector.broadcast %cst_124 : f32 to vector<16x128xf32>
    %324 = arith.addf %322, %323 : vector<16x128xf32>
    %325 = arith.mulf %324, %311 : vector<16x128xf32>
    %cst_125 = arith.constant 0.000000e+00 : f32
    %326 = vector.broadcast %cst_125 : f32 to vector<16x128xf32>
    %327 = arith.subf %326, %305 : vector<16x128xf32>
    %328 = arith.mulf %327, %305 : vector<16x128xf32>
    %329 = math.exp %328 : vector<16x128xf32>
    %330 = arith.mulf %325, %329 : vector<16x128xf32>
    %cst_126 = arith.constant 1.000000e+00 : f32
    %331 = vector.broadcast %cst_126 : f32 to vector<16x128xf32>
    %332 = arith.subf %331, %330 : vector<16x128xf32>
    %333 = arith.mulf %304, %332 : vector<16x128xf32>
    %cst_127 = arith.constant 1.000000e+00 : f32
    %334 = vector.broadcast %cst_127 : f32 to vector<16x128xf32>
    %335 = arith.addf %334, %333 : vector<16x128xf32>
    %336 = arith.mulf %297, %335 : vector<16x128xf32>
    %337 = arith.truncf %336 : vector<16x128xf32> to vector<16x128xbf16>
    %cst_128 = arith.constant dense<0.000000e+00> : vector<16x64xf32>
    %338 = tpu.matmul %337, %204, %cst_128 {dimension_numbers = #tpu.dot_dimension_numbers<[1], [0], [0], [1], [0, 0, 1, 1], [], []>} : vector<16x128xbf16>, vector<128x64xbf16>, vector<16x64xf32> -> vector<16x64xf32>
    %339 = vector.extract_strided_slice %208 {offsets = [3, 0], sizes = [1, 64], strides = [1, 1]} : vector<6x64xf32> to vector<1x64xf32>
    %340 = vector.broadcast %339 : vector<1x64xf32> to vector<16x64xf32>
    %341 = arith.addf %338, %340 : vector<16x64xf32>
    %342 = arith.addf %291, %341 : vector<16x64xf32>
    %343 = vector.extract_strided_slice %208 {offsets = [4, 0], sizes = [1, 64], strides = [1, 1]} : vector<6x64xf32> to vector<1x64xf32>
    %344 = vector.extract_strided_slice %208 {offsets = [5, 0], sizes = [1, 64], strides = [1, 1]} : vector<6x64xf32> to vector<1x64xf32>
    %cst_129 = arith.constant dense<0.000000e+00> : vector<16xf32>
    %345 = vector.multi_reduction <add>, %342, %cst_129 [1] : vector<16x64xf32> to vector<16xf32>
    %346 = vector.shape_cast %345 : vector<16xf32> to vector<16x1xf32>
    %cst_130 = arith.constant 6.400000e+01 : f32
    %347 = vector.broadcast %cst_130 : f32 to vector<16x1xf32>
    %348 = arith.divf %346, %347 : vector<16x1xf32>
    %349 = vector.broadcast %348 : vector<16x1xf32> to vector<16x64xf32>
    %350 = arith.subf %342, %349 : vector<16x64xf32>
    %351 = arith.mulf %350, %350 : vector<16x64xf32>
    %cst_131 = arith.constant dense<0.000000e+00> : vector<16xf32>
    %352 = vector.multi_reduction <add>, %351, %cst_131 [1] : vector<16x64xf32> to vector<16xf32>
    %353 = vector.shape_cast %352 : vector<16xf32> to vector<16x1xf32>
    %cst_132 = arith.constant 6.400000e+01 : f32
    %354 = vector.broadcast %cst_132 : f32 to vector<16x1xf32>
    %355 = arith.divf %353, %354 : vector<16x1xf32>
    %356 = vector.broadcast %348 : vector<16x1xf32> to vector<16x64xf32>
    %357 = arith.subf %342, %356 : vector<16x64xf32>
    %cst_133 = arith.constant 9.99999974E-6 : f32
    %358 = vector.broadcast %cst_133 : f32 to vector<16x1xf32>
    %359 = arith.addf %355, %358 : vector<16x1xf32>
    %360 = math.rsqrt %359 : vector<16x1xf32>
    %361 = vector.broadcast %360 : vector<16x1xf32> to vector<16x64xf32>
    %362 = arith.mulf %357, %361 : vector<16x64xf32>
    %363 = vector.broadcast %343 : vector<1x64xf32> to vector<16x64xf32>
    %364 = arith.mulf %362, %363 : vector<16x64xf32>
    %365 = vector.broadcast %344 : vector<1x64xf32> to vector<16x64xf32>
    %366 = arith.addf %364, %365 : vector<16x64xf32>
    %367 = vector.extract_strided_slice %366 {offsets = [0, 0], sizes = [1, 64], strides = [1, 1]} : vector<16x64xf32> to vector<1x64xf32>
    %368 = vector.extract_strided_slice %366 {offsets = [8, 0], sizes = [1, 64], strides = [1, 1]} : vector<16x64xf32> to vector<1x64xf32>
    %369 = tpu.concatenate %367, %368 in 0 : vector<1x64xf32>, vector<1x64xf32> -> vector<2x64xf32>
    %370 = arith.truncf %369 : vector<2x64xf32> to vector<2x64xbf16>
    %c0_134 = arith.constant 0 : index
    %c0_135 = arith.constant 0 : index
    %371 = vector.load %arg11[%c0_134, %c0_135] : memref<64x128xbf16, #tpu.memory_space<vmem>>, vector<64x128xbf16>
    %cst_136 = arith.constant dense<0.000000e+00> : vector<2x128xf32>
    %372 = tpu.matmul %370, %371, %cst_136 {dimension_numbers = #tpu.dot_dimension_numbers<[1], [0], [0], [1], [0, 0, 1, 1], [], []>} : vector<2x64xbf16>, vector<64x128xbf16>, vector<2x128xf32> -> vector<2x128xf32>
    %c0_137 = arith.constant 0 : index
    %c0_138 = arith.constant 0 : index
    %373 = vector.load %arg12[%c0_137, %c0_138] : memref<1x128xf32, #tpu.memory_space<vmem>>, vector<1x128xf32>
    %374 = vector.broadcast %373 : vector<1x128xf32> to vector<2x128xf32>
    %375 = arith.addf %372, %374 : vector<2x128xf32>
    %c0_139 = arith.constant 0 : index
    %c0_140 = arith.constant 0 : index
    %376 = vector.load %arg13[%c0_139, %c0_140] : memref<2x128xf32, #tpu.memory_space<vmem>>, vector<2x128xf32>
    tpu.vector_store %arg13[%c0_139, %c0_140], %375 {strides = array<i32>} : memref<2x128xf32, #tpu.memory_space<vmem>>, vector<2x128xf32>,
    %377 = tpu.iota {dimensions = array<i32: 1>} : vector<2x128xi32>
    %c4_i32 = arith.constant 4 : i32
    %378 = vector.broadcast %c4_i32 : i32 to vector<2x128xi32>
    %379 = arith.cmpi slt, %377, %378 : vector<2x128xi32>
    %cst_141 = arith.constant -1.000000e+30 : f32
    %380 = vector.broadcast %cst_141 : f32 to vector<2x128xf32>
    %381 = arith.select %379, %375, %380 : vector<2x128xi1>, vector<2x128xf32>
    %cst_142 = arith.constant dense<0xFF800000> : vector<2xf32>
    %382 = vector.multi_reduction <maximumf>, %381, %cst_142 [1] : vector<2x128xf32> to vector<2xf32>
    %383 = vector.shape_cast %382 : vector<2xf32> to vector<2x1xf32>
    %384 = vector.broadcast %383 : vector<2x1xf32> to vector<2x128xf32>
    %385 = arith.subf %381, %384 : vector<2x128xf32>
    %386 = math.exp %385 : vector<2x128xf32>
    %cst_143 = arith.constant dense<0.000000e+00> : vector<2xf32>
    %387 = vector.multi_reduction <add>, %386, %cst_143 [1] : vector<2x128xf32> to vector<2xf32>
    %388 = vector.shape_cast %387 : vector<2xf32> to vector<2x1xf32>
    %389 = math.log %388 : vector<2x1xf32>
    %390 = arith.addf %389, %383 : vector<2x1xf32>
    %c0_144 = arith.constant 0 : index
    %c0_145 = arith.constant 0 : index
    %391 = vector.load %arg2[%c0_144, %c0_145] : memref<2x1xi32, #tpu.memory_space<vmem>>, vector<2x1xi32>
    %392 = vector.broadcast %391 : vector<2x1xi32> to vector<2x128xi32>
    %393 = arith.cmpi eq, %377, %392 : vector<2x128xi32>
    %cst_146 = arith.constant 0.000000e+00 : f32
    %394 = vector.broadcast %cst_146 : f32 to vector<2x128xf32>
    %395 = arith.select %393, %375, %394 : vector<2x128xi1>, vector<2x128xf32>
    %cst_147 = arith.constant dense<0.000000e+00> : vector<2xf32>
    %396 = vector.multi_reduction <add>, %395, %cst_147 [1] : vector<2x128xf32> to vector<2xf32>
    %397 = vector.shape_cast %396 : vector<2xf32> to vector<2x1xf32>
    %398 = arith.subf %390, %397 : vector<2x1xf32>
    %cst_148 = arith.constant dense<0.000000e+00> : vector<1xf32>
    %399 = vector.multi_reduction <add>, %398, %cst_148 [0] : vector<2x1xf32> to vector<1xf32>
    %400 = vector.shape_cast %399 : vector<1xf32> to vector<1x1xf32>
    %cst_149 = arith.constant 5.000000e-01 : f32
    %401 = vector.broadcast %cst_149 : f32 to vector<1x1xf32>
    %402 = arith.mulf %400, %401 : vector<1x1xf32>
    %c0_150 = arith.constant 0 : index
    %c0_151 = arith.constant 0 : index
    %403 = vector.load %arg14[%c0_150, %c0_151] : memref<1x1xf32, #tpu.memory_space<vmem>>, vector<1x1xf32>
    tpu.vector_store %arg14[%c0_150, %c0_151], %402 {strides = array<i32>} : memref<1x1xf32, #tpu.memory_space<vmem>>, vector<1x1xf32>,
    return
  }
}

</mosaic_0001>

<llo_original>
// kernel: tpu_custom_call.1
$region0: #{tpu_custom_call.1}
  #allocation0 [shape = 'u32[]', space=smem, size = 0x4, offset = 0x4, fixed_abs, tag = 'smem constant byte address 0x4 - core index']
  #allocation1 [shape = 'u32[144,128]{1,0:T(1,128)}', space=vmem, size = 0x12000, scoped, tag = 'internal scratch']
  %s0 = inlined_call_operand.hbm [shape: f32[16,64], index: 0, kind: input, shape index: {}]
  %s1 = inlined_call_operand.vmem [shape: f32[64,16], index: 1, kind: input, shape index: {}]
  %s2 = inlined_call_operand.vmem [shape: s32[2,1], index: 2, kind: input, shape index: {}]
  %s3 = inlined_call_operand.vmem [shape: f32[2,64], index: 3, kind: input, shape index: {}]
  %s4 = inlined_call_operand.vmem [shape: bf16[2,64,192], index: 4, kind: input, shape index: {}]
  %s5 = inlined_call_operand.vmem [shape: bf16[2,64,64], index: 5, kind: input, shape index: {}]
  %s6 = inlined_call_operand.vmem [shape: bf16[2,64,128], index: 6, kind: input, shape index: {}]
  %s7 = inlined_call_operand.vmem [shape: bf16[2,128,64], index: 7, kind: input, shape index: {}]
  %s8 = inlined_call_operand.hbm [shape: f32[2,1,192], index: 8, kind: input, shape index: {}]
  %s9 = inlined_call_operand.vmem [shape: f32[2,6,64], index: 9, kind: input, shape index: {}]
  %s10 = inlined_call_operand.vmem [shape: f32[2,1,128], index: 10, kind: input, shape index: {}]
  %s11 = inlined_call_operand.hbm [shape: bf16[64,128], index: 11, kind: input, shape index: {}]
  %s12 = inlined_call_operand.vmem [shape: f32[1,128], index: 12, kind: input, shape index: {}]
  %s13 = inlined_call_operand.hbm [shape: f32[2,128], index: 13, kind: output, shape index: {0}]
  %s14 = inlined_call_operand.hbm [shape: f32[1,1], index: 14, kind: output, shape index: {1}]
  %15 = xla_tuple %s13, %s14
  %s16 = sld [smem:[#allocation0]]
  $region82: #{tpu_custom_call.1} parent=0
    _
  %s18 = ssub.s32 1, %s16
  %s19 = scalar_select 0, %s18, %s16
  $region1: #{tpu_custom_call.1} parent=0
    #allocation2 [shape = 'u8[8192]{0}', space=vmem, size = 0x2000, scoped, tag = 'input window, operand 0, single buffered']
    #allocation3 [shape = 's32[1]{0}', space=sflag, size = 0x4, scoped, tag = 'scoped memory for tpu_custom_call.1']
    #allocation4 [shape = 's32[1]{0}', space=sflag, size = 0x4, scoped, tag = 'scoped memory for tpu_custom_call.1']
    #allocation5 [shape = 'u8[2048]{0}', space=vmem, size = 0x800, scoped, tag = 'input window, operand 8, single buffered']
    #allocation6 [shape = 's32[1]{0}', space=sflag, size = 0x4, scoped, tag = 'scoped memory for tpu_custom_call.1']
    #allocation7 [shape = 'u8[16384]{0}', space=vmem, size = 0x4000, scoped, tag = 'input window, operand 11, single buffered']
    #allocation8 [shape = 'u8[1024]{0}', space=vmem, size = 0x400, scoped, tag = 'output window, operand 0, single buffered']
    #allocation9 [shape = 'u8[512]{0}', space=vmem, size = 0x400, scoped, tag = 'output window, operand 1, single buffered']
    #allocation10 [shape = 's32[1]{0}', space=sflag, size = 0x4, scoped, tag = 'scoped memory for tpu_custom_call.1']
    %20 = vsyncpa [#allocation3], 0
    %21 = vsyncpa [#allocation6], 0
    %22 = vsyncpa [#allocation4], 0
    %23 = vsyncpa [#allocation10], 0
    // Predicated region
    $region2: #{tpu_custom_call.1} parent=1 // pred_check
      _
    $region3: #{tpu_custom_call.1} parent=1 // pred_check_branch
      %25 = sbr.rel (0) target = $region5
    $region4: #{tpu_custom_call.1} parent=1 // pred_region
      %s27 = ssub.s32 256, 256
      %28 = vsyncadd [#allocation3], %s27
      %s29 = sshll.u32 [#allocation2], 4
      %s30 = int_to_ptr.vmem [resolvable:$true] %s29
      %35 = dma.hbm_to_vmem [thread:$0]  %s0, 256, %s30, [#allocation3], 128, 128, 8
    $region5: #{tpu_custom_call.1} parent=1 // pred_fallthru
      _
    // Predicated region
    $region6: #{tpu_custom_call.1} parent=1 // pred_check
      _
    $region7: #{tpu_custom_call.1} parent=1 // pred_check_branch
      %37 = sbr.rel (0) target = $region9
    $region8: #{tpu_custom_call.1} parent=1 // pred_region
      _
    $region9: #{tpu_custom_call.1} parent=1 // pred_fallthru
      _
    // Predicated region
    $region10: #{tpu_custom_call.1} parent=1 // pred_check
      _
    $region11: #{tpu_custom_call.1} parent=1 // pred_check_branch
      %39 = sbr.rel (0) target = $region13
    $region12: #{tpu_custom_call.1} parent=1 // pred_region
      _
    $region13: #{tpu_custom_call.1} parent=1 // pred_fallthru
      _
    // Predicated region
    $region14: #{tpu_custom_call.1} parent=1 // pred_check
      _
    $region15: #{tpu_custom_call.1} parent=1 // pred_check_branch
      %41 = sbr.rel (0) target = $region17
    $region16: #{tpu_custom_call.1} parent=1 // pred_region
      _
    $region17: #{tpu_custom_call.1} parent=1 // pred_fallthru
      _
    // Predicated region
    $region18: #{tpu_custom_call.1} parent=1 // pred_check
      _
    $region19: #{tpu_custom_call.1} parent=1 // pred_check_branch
      %43 = sbr.rel (0) target = $region21
    $region20: #{tpu_custom_call.1} parent=1 // pred_region
      _
    $region21: #{tpu_custom_call.1} parent=1 // pred_fallthru
      _
    // Predicated region
    $region22: #{tpu_custom_call.1} parent=1 // pred_check
      _
    $region23: #{tpu_custom_call.1} parent=1 // pred_check_branch
      %45 = sbr.rel (0) target = $region25
    $region24: #{tpu_custom_call.1} parent=1 // pred_region
      _
    $region25: #{tpu_custom_call.1} parent=1 // pred_fallthru
      _
    // Predicated region
    $region26: #{tpu_custom_call.1} parent=1 // pred_check
      _
    $region27: #{tpu_custom_call.1} parent=1 // pred_check_branch
      %47 = sbr.rel (0) target = $region29
    $region28: #{tpu_custom_call.1} parent=1 // pred_region
      _
    $region29: #{tpu_custom_call.1} parent=1 // pred_fallthru
      _
    // Predicated region
    $region30: #{tpu_custom_call.1} parent=1 // pred_check
      _
    $region31: #{tpu_custom_call.1} parent=1 // pred_check_branch
      %49 = sbr.rel (0) target = $region33
    $region32: #{tpu_custom_call.1} parent=1 // pred_region
      _
    $region33: #{tpu_custom_call.1} parent=1 // pred_fallthru
      _
    // Predicated region
    $region34: #{tpu_custom_call.1} parent=1 // pred_check
      _
    $region35: #{tpu_custom_call.1} parent=1 // pred_check_branch
      %51 = sbr.rel (0) target = $region37
    $region36: #{tpu_custom_call.1} parent=1 // pred_region
      %s53 = ssub.s32 64, 64
      %54 = vsyncadd [#allocation6], %s53
      %s55 = sshll.u32 [#allocation5], 4
      %s56 = int_to_ptr.vmem [resolvable:$true] %s55
      %61 = dma.hbm_to_vmem [thread:$0]  %s8, 64, %s56, [#allocation6], 32, 32, 2
    $region37: #{tpu_custom_call.1} parent=1 // pred_fallthru
      _
    // Predicated region
    $region38: #{tpu_custom_call.1} parent=1 // pred_check
      _
    $region39: #{tpu_custom_call.1} parent=1 // pred_check_branch
      %63 = sbr.rel (0) target = $region41
    $region40: #{tpu_custom_call.1} parent=1 // pred_region
      _
    $region41: #{tpu_custom_call.1} parent=1 // pred_fallthru
      _
    // Predicated region
    $region42: #{tpu_custom_call.1} parent=1 // pred_check
      _
    $region43: #{tpu_custom_call.1} parent=1 // pred_check_branch
      %65 = sbr.rel (0) target = $region45
    $region44: #{tpu_custom_call.1} parent=1 // pred_region
      _
    $region45: #{tpu_custom_call.1} parent=1 // pred_fallthru
      _
    // Predicated region
    $region46: #{tpu_custom_call.1} parent=1 // pred_check
      _
    $region47: #{tpu_custom_call.1} parent=1 // pred_check_branch
      %67 = sbr.rel (0) target = $region49
    $region48: #{tpu_custom_call.1} parent=1 // pred_region
      %s69 = ssub.s32 512, 512
      %70 = vsyncadd [#allocation6], %s69
      %s71 = sshll.u32 [#allocation7], 4
      %s72 = int_to_ptr.vmem [resolvable:$true] %s71
      %77 = dma.hbm_to_vmem [thread:$0]  %s11, 512, %s72, [#allocation6], 64, 64, 4
    $region49: #{tpu_custom_call.1} parent=1 // pred_fallthru
      _
    // Predicated region
    $region50: #{tpu_custom_call.1} parent=1 // pred_check
      _
    $region51: #{tpu_custom_call.1} parent=1 // pred_check_branch
      %79 = sbr.rel (0) target = $region53
    $region52: #{tpu_custom_call.1} parent=1 // pred_region
      _
    $region53: #{tpu_custom_call.1} parent=1 // pred_fallthru
      _
    // Predicated region
    $region54: #{tpu_custom_call.1} parent=1 // pred_check
      _
    $region55: #{tpu_custom_call.1} parent=1 // pred_check_branch
      %81 = sbr.rel (0) target = $region57
    $region56: #{tpu_custom_call.1} parent=1 // pred_region
      %82 = dma.done [#allocation3], 256
    $region57: #{tpu_custom_call.1} parent=1 // pred_fallthru
      _
    // Predicated region
    $region58: #{tpu_custom_call.1} parent=1 // pred_check
      _
    $region59: #{tpu_custom_call.1} parent=1 // pred_check_branch
      %84 = sbr.rel (0) target = $region61
    $region60: #{tpu_custom_call.1} parent=1 // pred_region
      %85 = dma.done [#allocation6], 64
    $region61: #{tpu_custom_call.1} parent=1 // pred_fallthru
      _
    // Predicated region
    $region62: #{tpu_custom_call.1} parent=1 // pred_check
      _
    $region63: #{tpu_custom_call.1} parent=1 // pred_check_branch
      %87 = sbr.rel (0) target = $region65
    $region64: #{tpu_custom_call.1} parent=1 // pred_region
      %88 = dma.done [#allocation6], 512
    $region65: #{tpu_custom_call.1} parent=1 // pred_fallthru
      _
    %v90 = vld [vmem:[#allocation2] sm:$0xff]
    %v91 = vld [vmem:[#allocation2 + $0x8] sm:$0xff]
    %v92 = vld [vmem:[%s3] sm:$0x3]
    %vm93 = vcmask 523264
    %v94 = vsel %vm93, %v90, 0.0
    %95 = vadd.xlane.f32.xlu0 %v94
    %v96 = vpop.xlane.xlu0 %95
    %v97 = vsel %vm93, %v91, 0.0
    %98 = vadd.xlane.f32.xlu0 %v97
    %v99 = vpop.xlane.xlu0 %98
    %v100 = vrcp.pop 64.0
    %v101 = vmul.f32 %v96, %v100
    %v102 = vmul.f32 %v99, %v100
    %v103 = vsub.f32 %v90, %v101
    %v104 = vsub.f32 %v91, %v102
    %v105 = vmul.f32 %v103, %v103
    %v106 = vmul.f32 %v104, %v104
    %v107 = vsel %vm93, %v105, 0.0
    %108 = vadd.xlane.f32.xlu0 %v107
    %v109 = vpop.xlane.xlu0 %108
    %v110 = vsel %vm93, %v106, 0.0
    %111 = vadd.xlane.f32.xlu0 %v110
    %v112 = vpop.xlane.xlu0 %111
    %v113 = vmul.f32 %v109, %v100
    %v114 = vmul.f32 %v112, %v100
    %v115 = vadd.f32 %v113, 1e-05
    %v116 = vadd.f32 %v114, 1e-05
    %v117 = vrsqrt.pop %v115
    %v118 = vrsqrt.pop %v116
    %v119 = vmul.f32 %v103, %v117
    %v120 = vmul.f32 %v104, %v118
    %v121 = vlaneseq
    %v122 = vshrl.u32 %v121, 7
    %v123 = vsub.s32 0, %v122
    %v124 = vrot.slane %v92, %v123
    %v125 = vmul.f32 %v119, %v124
    %v126 = vmul.f32 %v120, %v124
    %v127 = vlaneseq
    %v128 = vshrl.u32 %v127, 7
    %v129 = vsub.s32 1, %v128
    %v130 = vrot.slane %v92, %v129
    %v131 = vadd.f32 %v125, %v130
    %v132 = vadd.f32 %v126, %v130
    %v133 = vld [vmem:[%s1] sm:$0xff]
    %v134 = vld [vmem:[%s1 + $0x8] sm:$0xff]
    %v135 = vld [vmem:[%s1 + $0x10] sm:$0xff]
    %v136 = vld [vmem:[%s1 + $0x18] sm:$0xff]
    %v137 = vld [vmem:[%s1 + $0x20] sm:$0xff]
    %v138 = vld [vmem:[%s1 + $0x28] sm:$0xff]
    %v139 = vld [vmem:[%s1 + $0x30] sm:$0xff]
    %v140 = vld [vmem:[%s1 + $0x38] sm:$0xff]
    %v141 = vld [vmem:[%s4] sm:$0xff]
    %v142 = vld [vmem:[%s4 + $0x8] sm:$0xff]
    %v143 = vld [vmem:[%s4 + $0x10] sm:$0xff]
    %v144 = vld [vmem:[%s4 + $0x18] sm:$0xff]
    %v145 = vld [vmem:[%s4 + $0x20] sm:$0xff]
    %v146 = vld [vmem:[%s4 + $0x28] sm:$0xff]
    %v147 = vld [vmem:[%s4 + $0x30] sm:$0xff]
    %v148 = vld [vmem:[%s4 + $0x38] sm:$0xff]
    %v149 = vld [vmem:[%s5] sm:$0xf]
    %v150 = vld [vmem:[%s5 + $0x4] sm:$0xf]
    %v151 = vld [vmem:[%s5 + $0x8] sm:$0xf]
    %v152 = vld [vmem:[%s5 + $0xc] sm:$0xf]
    %v153 = vld [vmem:[%s5 + $0x10] sm:$0xf]
    %v154 = vld [vmem:[%s5 + $0x14] sm:$0xf]
    %v155 = vld [vmem:[%s5 + $0x18] sm:$0xf]
    %v156 = vld [vmem:[%s5 + $0x1c] sm:$0xf]
    %v157 = vld [vmem:[%s6] sm:$0xf]
    %v158 = vld [vmem:[%s6 + $0x4] sm:$0xf]
    %v159 = vld [vmem:[%s6 + $0x8] sm:$0xf]
    %v160 = vld [vmem:[%s6 + $0xc] sm:$0xf]
    %v161 = vld [vmem:[%s6 + $0x10] sm:$0xf]
    %v162 = vld [vmem:[%s6 + $0x14] sm:$0xf]
    %v163 = vld [vmem:[%s6 + $0x18] sm:$0xf]
    %v164 = vld [vmem:[%s6 + $0x1c] sm:$0xf]
    %v165 = vld [vmem:[%s7] sm:$0xf]
    %v166 = vld [vmem:[%s7 + $0x4] sm:$0xf]
    %v167 = vld [vmem:[%s7 + $0x8] sm:$0xf]
    %v168 = vld [vmem:[%s7 + $0xc] sm:$0xf]
    %v169 = vld [vmem:[%s7 + $0x10] sm:$0xf]
    %v170 = vld [vmem:[%s7 + $0x14] sm:$0xf]
    %v171 = vld [vmem:[%s7 + $0x18] sm:$0xf]
    %v172 = vld [vmem:[%s7 + $0x1c] sm:$0xf]
    %v173 = vld [vmem:[%s7 + $0x20] sm:$0xf]
    %v174 = vld [vmem:[%s7 + $0x24] sm:$0xf]
    %v175 = vld [vmem:[%s7 + $0x28] sm:$0xf]
    %v176 = vld [vmem:[%s7 + $0x2c] sm:$0xf]
    %v177 = vld [vmem:[%s7 + $0x30] sm:$0xf]
    %v178 = vld [vmem:[%s7 + $0x34] sm:$0xf]
    %v179 = vld [vmem:[%s7 + $0x38] sm:$0xf]
    %v180 = vld [vmem:[%s7 + $0x3c] sm:$0xf]
    %v181 = vld [vmem:[#allocation5] sm:$0x3]
    %v182 = vld [vmem:[%s9] sm:$0x3f]
    %v183 = vld [vmem:[%s10] sm:$0x1]
    %v184 = vpack.c.bf16 %v132, %v131
    %v186 = vlaneseq
    %v187 = vshrl.u32 %v186, 7
    %v188 = vsub.s32 0, %v187
    %v189 = vrot.slane %v181, %v188
    %v190 = vlaneseq
    %v191 = vshrl.u32 %v190, 7
    %v192 = vsub.s32 1, %v191
    %v193 = vrot.slane %v181, %v192
    %v204 = vunpack.c.l.b16 %v141
    %v205 = vunpack.c.h.b16 %v141
    %v206 = vunpack.c.l.b16 %v142
    %v207 = vunpack.c.h.b16 %v142
    %v208 = vunpack.c.l.b16 %v143
    %v209 = vunpack.c.h.b16 %v143
    %v210 = vunpack.c.l.b16 %v144
    %v211 = vunpack.c.h.b16 %v144
    %v212 = vunpack.c.l.b16 %v145
    %v213 = vunpack.c.h.b16 %v145
    %v214 = vunpack.c.l.b16 %v146
    %v215 = vunpack.c.h.b16 %v146
    %v216 = vunpack.c.l.b16 %v147
    %v217 = vunpack.c.h.b16 %v147
    %v218 = vunpack.c.l.b16 %v148
    %v219 = vunpack.c.h.b16 %v148
    %v220 = vpack.c.b16 %v206, %v204
    %v221 = vpack.c.b16 %v207, %v205
    %v222 = vpack.c.b16 %v210, %v208
    %v223 = vpack.c.b16 %v211, %v209
    %v224 = vpack.c.b16 %v214, %v212
    %v225 = vpack.c.b16 %v215, %v213
    %v226 = vpack.c.b16 %v218, %v216
    %v227 = vpack.c.b16 %v219, %v217
    %v237 = vsel %vm93, %v184, 0
    %239 = vmatprep.subr.bf16.mxu0 %v221
    %240 = vmatpush1.bf16.msra.mxu0 %v220
    %241 = vmatprep.subr.bf16.mxu0 %v223
    %242 = vmatpush1.bf16.msra.mxu0 %v222
    %243 = vmatprep.subr.bf16.mxu0 %v225
    %244 = vmatpush1.bf16.msra.mxu0 %v224
    %245 = vmatprep.subr.bf16.mxu0 %v227
    %246 = vmatpush1.bf16.msra.mxu0 %v226
    %247 = vmatprep.subr.bf16.mxu0 0
    %248 = vmatpush1.bf16.msra.mxu0 0
    %249 = vmatprep.subr.bf16.mxu0 0
    %250 = vmatpush1.bf16.msra.mxu0 0
    %251 = vmatprep.subr.bf16.mxu0 0
    %252 = vmatpush1.bf16.msra.mxu0 0
    %253 = vmatprep.subr.bf16.mxu0 0
    %254 = vmatpush1.bf16.msra.mxu0 0
    %255 = vmatprep.subr.bf16.mxu0 0
    %256 = vmatpush1.bf16.msra.mxu0 0
    %257 = vmatprep.subr.bf16.mxu0 0
    %258 = vmatpush1.bf16.msra.mxu0 0
    %259 = vmatprep.subr.bf16.mxu0 0
    %260 = vmatpush1.bf16.msra.mxu0 0
    %261 = vmatprep.subr.bf16.mxu0 0
    %262 = vmatpush1.bf16.msra.mxu0 0
    %263 = vmatprep.subr.bf16.mxu0 0
    %264 = vmatpush1.bf16.msra.mxu0 0
    %265 = vmatprep.subr.bf16.mxu0 0
    %266 = vmatpush1.bf16.msra.mxu0 0
    %267 = vmatprep.subr.bf16.mxu0 0
    %268 = vmatpush1.bf16.msra.mxu0 0
    %269 = vmatprep.subr.bf16.mxu0 0
    %270 = vmatpush1.bf16.msra.mxu0 0
    %271 = vmatprep.mubr.bf16.mxu0 0
    %272 = vmatmul.mubr.bf16.gmra.mrb[0].mxu0 %v237
    %v273 = vpop.f32.mrb[0].mxu0
    %v274 = vadd.f32 %v189, %v273
    %v275 = vpop.f32.mrb[0].mxu0
    %v276 = vadd.f32 %v193, %v275
    %v277 = vpop.f32.mrb[0].mxu0
    %v278 = vadd.f32 %v189, %v277
    %v279 = vpop.f32.mrb[0].mxu0
    %v280 = vadd.f32 %v193, %v279
    %281 = vdwg.mxu0
    %v282 = vmul.f32 %v274, 0.25
    %v283 = vmul.f32 %v278, 0.25
    %v284 = vpack.c.bf16 %v283, %v282
    %v285 = vpack.c.bf16 %v278, %v274
    %v286 = vpack.c.bf16 %v280, %v276
    %288 = vrot.lane.b32.xlu0 %v285, 64
    %v289 = vpop.permute.xlu0 %288
    %vm290 = vcmask 130048
    %v292 = vsel %vm290, %v284, 0
    %v295 = vsel %vm290, %v289, 0
    %297 = vmatprep.subr.bf16.mxu0 0
    %298 = vmatpush1.bf16.xpose.msra.mxu0 %v295
    %299 = vmatprep.subr.bf16.mxu0 0
    %300 = vmatpush1.bf16.xpose.msra.mxu0 0
    %301 = vmatprep.subr.bf16.mxu0 0
    %302 = vmatpush1.bf16.xpose.msra.mxu0 0
    %303 = vmatprep.subr.bf16.mxu0 0
    %304 = vmatpush1.bf16.xpose.msra.mxu0 0
    %305 = vmatprep.subr.bf16.mxu0 0
    %306 = vmatpush1.bf16.xpose.msra.mxu0 0
    %307 = vmatprep.subr.bf16.mxu0 0
    %308 = vmatpush1.bf16.xpose.msra.mxu0 0
    %309 = vmatprep.subr.bf16.mxu0 0
    %310 = vmatpush1.bf16.xpose.msra.mxu0 0
    %311 = vmatprep.subr.bf16.mxu0 0
    %312 = vmatpush1.bf16.xpose.msra.mxu0 0
    %313 = vmatprep.subr.bf16.mxu0 0
    %314 = vmatpush1.bf16.xpose.msra.mxu0 0
    %315 = vmatprep.subr.bf16.mxu0 0
    %316 = vmatpush1.bf16.xpose.msra.mxu0 0
    %317 = vmatprep.subr.bf16.mxu0 0
    %318 = vmatpush1.bf16.xpose.msra.mxu0 0
    %319 = vmatprep.subr.bf16.mxu0 0
    %320 = vmatpush1.bf16.xpose.msra.mxu0 0
    %321 = vmatprep.subr.bf16.mxu0 0
    %322 = vmatpush1.bf16.xpose.msra.mxu0 0
    %323 = vmatprep.subr.bf16.mxu0 0
    %324 = vmatpush1.bf16.xpose.msra.mxu0 0
    %325 = vmatprep.subr.bf16.mxu0 0
    %326 = vmatpush1.bf16.xpose.msra.mxu0 0
    %327 = vmatprep.subr.bf16.mxu0 0
    %328 = vmatpush1.bf16.xpose.msra.mxu0 0
    %329 = vmatprep.mubr.bf16.mxu0 0
    %330 = vmatmul.mubr.bf16.gmra.mrb[0].mxu0 %v292
    %v331 = vpop.f32.mrb[0].mxu0
    %v332 = vadd.f32 0.0, %v331
    %v333 = vpop.f32.mrb[0].mxu0
    %v334 = vpop.f32.mrb[0].mxu0
    %v335 = vadd.f32 0.0, %v334
    %v336 = vpop.f32.mrb[0].mxu0
    %337 = vdwg.mxu0
    %339 = vrot.lane.b32.xlu0 %v284, 112
    %v340 = vpop.permute.xlu0 %339
    %341 = vrot.lane.b32.xlu0 %v285, 48
    %v342 = vpop.permute.xlu0 %341
    %v344 = vsel %vm290, %v340, 0
    %v347 = vsel %vm290, %v342, 0
    %349 = vmatprep.subr.bf16.mxu0 0
    %350 = vmatpush1.bf16.xpose.msra.mxu0 %v347
    %351 = vmatprep.subr.bf16.mxu0 0
    %352 = vmatpush1.bf16.xpose.msra.mxu0 0
    %353 = vmatprep.subr.bf16.mxu0 0
    %354 = vmatpush1.bf16.xpose.msra.mxu0 0
    %355 = vmatprep.subr.bf16.mxu0 0
    %356 = vmatpush1.bf16.xpose.msra.mxu0 0
    %357 = vmatprep.subr.bf16.mxu0 0
    %358 = vmatpush1.bf16.xpose.msra.mxu0 0
    %359 = vmatprep.subr.bf16.mxu0 0
    %360 = vmatpush1.bf16.xpose.msra.mxu0 0
    %361 = vmatprep.subr.bf16.mxu0 0
    %362 = vmatpush1.bf16.xpose.msra.mxu0 0
    %363 = vmatprep.subr.bf16.mxu0 0
    %364 = vmatpush1.bf16.xpose.msra.mxu0 0
    %365 = vmatprep.subr.bf16.mxu0 0
    %366 = vmatpush1.bf16.xpose.msra.mxu0 0
    %367 = vmatprep.subr.bf16.mxu0 0
    %368 = vmatpush1.bf16.xpose.msra.mxu0 0
    %369 = vmatprep.subr.bf16.mxu0 0
    %370 = vmatpush1.bf16.xpose.msra.mxu0 0
    %371 = vmatprep.subr.bf16.mxu0 0
    %372 = vmatpush1.bf16.xpose.msra.mxu0 0
    %373 = vmatprep.subr.bf16.mxu0 0
    %374 = vmatpush1.bf16.xpose.msra.mxu0 0
    %375 = vmatprep.subr.bf16.mxu0 0
    %376 = vmatpush1.bf16.xpose.msra.mxu0 0
    %377 = vmatprep.subr.bf16.mxu0 0
    %378 = vmatpush1.bf16.xpose.msra.mxu0 0
    %379 = vmatprep.subr.bf16.mxu0 0
    %380 = vmatpush1.bf16.xpose.msra.mxu0 0
    %381 = vmatprep.mubr.bf16.mxu0 0
    %382 = vmatmul.mubr.bf16.gmra.mrb[0].mxu0 %v344
    %v383 = vpop.f32.mrb[0].mxu0
    %v384 = vadd.f32 0.0, %v383
    %v385 = vpop.f32.mrb[0].mxu0
    %v386 = vpop.f32.mrb[0].mxu0
    %v387 = vadd.f32 0.0, %v386
    %v388 = vpop.f32.mrb[0].mxu0
    %389 = vdwg.mxu0
    %390 = vrot.lane.b32.xlu0 %v284, 96
    %v391 = vpop.permute.xlu0 %390
    %392 = vrot.lane.b32.xlu0 %v285, 32
    %v393 = vpop.permute.xlu0 %392
    %v395 = vsel %vm290, %v391, 0
    %v398 = vsel %vm290, %v393, 0
    %400 = vmatprep.subr.bf16.mxu0 0
    %401 = vmatpush1.bf16.xpose.msra.mxu0 %v398
    %402 = vmatprep.subr.bf16.mxu0 0
    %403 = vmatpush1.bf16.xpose.msra.mxu0 0
    %404 = vmatprep.subr.bf16.mxu0 0
    %405 = vmatpush1.bf16.xpose.msra.mxu0 0
    %406 = vmatprep.subr.bf16.mxu0 0
    %407 = vmatpush1.bf16.xpose.msra.mxu0 0
    %408 = vmatprep.subr.bf16.mxu0 0
    %409 = vmatpush1.bf16.xpose.msra.mxu0 0
    %410 = vmatprep.subr.bf16.mxu0 0
    %411 = vmatpush1.bf16.xpose.msra.mxu0 0
    %412 = vmatprep.subr.bf16.mxu0 0
    %413 = vmatpush1.bf16.xpose.msra.mxu0 0
    %414 = vmatprep.subr.bf16.mxu0 0
    %415 = vmatpush1.bf16.xpose.msra.mxu0 0
    %416 = vmatprep.subr.bf16.mxu0 0
    %417 = vmatpush1.bf16.xpose.msra.mxu0 0
    %418 = vmatprep.subr.bf16.mxu0 0
    %419 = vmatpush1.bf16.xpose.msra.mxu0 0
    %420 = vmatprep.subr.bf16.mxu0 0
    %421 = vmatpush1.bf16.xpose.msra.mxu0 0
    %422 = vmatprep.subr.bf16.mxu0 0
    %423 = vmatpush1.bf16.xpose.msra.mxu0 0
    %424 = vmatprep.subr.bf16.mxu0 0
    %425 = vmatpush1.bf16.xpose.msra.mxu0 0
    %426 = vmatprep.subr.bf16.mxu0 0
    %427 = vmatpush1.bf16.xpose.msra.mxu0 0
    %428 = vmatprep.subr.bf16.mxu0 0
    %429 = vmatpush1.bf16.xpose.msra.mxu0 0
    %430 = vmatprep.subr.bf16.mxu0 0
    %431 = vmatpush1.bf16.xpose.msra.mxu0 0
    %432 = vmatprep.mubr.bf16.mxu0 0
    %433 = vmatmul.mubr.bf16.gmra.mrb[0].mxu0 %v395
    %v434 = vpop.f32.mrb[0].mxu0
    %v435 = vadd.f32 0.0, %v434
    %v436 = vpop.f32.mrb[0].mxu0
    %v437 = vpop.f32.mrb[0].mxu0
    %v438 = vadd.f32 0.0, %v437
    %v439 = vpop.f32.mrb[0].mxu0
    %440 = vdwg.mxu0
    %441 = vrot.lane.b32.xlu0 %v284, 80
    %v442 = vpop.permute.xlu0 %441
    %443 = vrot.lane.b32.xlu0 %v285, 16
    %v444 = vpop.permute.xlu0 %443
    %v446 = vsel %vm290, %v442, 0
    %v449 = vsel %vm290, %v444, 0
    %451 = vmatprep.subr.bf16.mxu0 0
    %452 = vmatpush1.bf16.xpose.msra.mxu0 %v449
    %453 = vmatprep.subr.bf16.mxu0 0
    %454 = vmatpush1.bf16.xpose.msra.mxu0 0
    %455 = vmatprep.subr.bf16.mxu0 0
    %456 = vmatpush1.bf16.xpose.msra.mxu0 0
    %457 = vmatprep.subr.bf16.mxu0 0
    %458 = vmatpush1.bf16.xpose.msra.mxu0 0
    %459 = vmatprep.subr.bf16.mxu0 0
    %460 = vmatpush1.bf16.xpose.msra.mxu0 0
    %461 = vmatprep.subr.bf16.mxu0 0
    %462 = vmatpush1.bf16.xpose.msra.mxu0 0
    %463 = vmatprep.subr.bf16.mxu0 0
    %464 = vmatpush1.bf16.xpose.msra.mxu0 0
    %465 = vmatprep.subr.bf16.mxu0 0
    %466 = vmatpush1.bf16.xpose.msra.mxu0 0
    %467 = vmatprep.subr.bf16.mxu0 0
    %468 = vmatpush1.bf16.xpose.msra.mxu0 0
    %469 = vmatprep.subr.bf16.mxu0 0
    %470 = vmatpush1.bf16.xpose.msra.mxu0 0
    %471 = vmatprep.subr.bf16.mxu0 0
    %472 = vmatpush1.bf16.xpose.msra.mxu0 0
    %473 = vmatprep.subr.bf16.mxu0 0
    %474 = vmatpush1.bf16.xpose.msra.mxu0 0
    %475 = vmatprep.subr.bf16.mxu0 0
    %476 = vmatpush1.bf16.xpose.msra.mxu0 0
    %477 = vmatprep.subr.bf16.mxu0 0
    %478 = vmatpush1.bf16.xpose.msra.mxu0 0
    %479 = vmatprep.subr.bf16.mxu0 0
    %480 = vmatpush1.bf16.xpose.msra.mxu0 0
    %481 = vmatprep.subr.bf16.mxu0 0
    %482 = vmatpush1.bf16.xpose.msra.mxu0 0
    %483 = vmatprep.mubr.bf16.mxu0 0
    %484 = vmatmul.mubr.bf16.gmra.mrb[0].mxu0 %v446
    %v485 = vpop.f32.mrb[0].mxu0
    %v486 = vadd.f32 0.0, %v485
    %v487 = vpop.f32.mrb[0].mxu0
    %v488 = vpop.f32.mrb[0].mxu0
    %v489 = vadd.f32 0.0, %v488
    %v490 = vpop.f32.mrb[0].mxu0
    %491 = vdwg.mxu0
    %v492 = vadd.f32 %v332, %v133
    %v493 = vadd.f32 %v335, %v134
    %v494 = vadd.f32 %v384, %v135
    %v495 = vadd.f32 %v387, %v136
    %v496 = vadd.f32 %v435, %v137
    %v497 = vadd.f32 %v438, %v138
    %v498 = vadd.f32 %v486, %v139
    %v499 = vadd.f32 %v489, %v140
    %v500 = vsel %vm290, %v492, -inf
    %501 = vmax.xlane.f32.xlu0 %v500
    %v502 = vpop.xlane.xlu0 %501
    %v503 = vsel %vm290, %v493, -inf
    %504 = vmax.xlane.f32.xlu0 %v503
    %v505 = vpop.xlane.xlu0 %504
    %v506 = vsel %vm290, %v494, -inf
    %507 = vmax.xlane.f32.xlu0 %v506
    %v508 = vpop.xlane.xlu0 %507
    %v509 = vsel %vm290, %v495, -inf
    %510 = vmax.xlane.f32.xlu0 %v509
    %v511 = vpop.xlane.xlu0 %510
    %v512 = vsel %vm290, %v496, -inf
    %513 = vmax.xlane.f32.xlu0 %v512
    %v514 = vpop.xlane.xlu0 %513
    %v515 = vsel %vm290, %v497, -inf
    %516 = vmax.xlane.f32.xlu0 %v515
    %v517 = vpop.xlane.xlu0 %516
    %v518 = vsel %vm290, %v498, -inf
    %519 = vmax.xlane.f32.xlu0 %v518
    %v520 = vpop.xlane.xlu0 %519
    %v521 = vsel %vm290, %v499, -inf
    %522 = vmax.xlane.f32.xlu0 %v521
    %v523 = vpop.xlane.xlu0 %522
    %v524 = vsub.f32 %v492, %v502
    %v525 = vsub.f32 %v493, %v505
    %v526 = vsub.f32 %v494, %v508
    %v527 = vsub.f32 %v495, %v511
    %v528 = vsub.f32 %v496, %v514
    %v529 = vsub.f32 %v497, %v517
    %v530 = vsub.f32 %v498, %v520
    %v531 = vsub.f32 %v499, %v523
    %v532 = vmul.f32 %v524, 1.442695
    %v533 = vpow.pop %v532
    %v534 = vmul.f32 %v525, 1.442695
    %v535 = vpow.pop %v534
    %v536 = vmul.f32 %v526, 1.442695
    %v537 = vpow.pop %v536
    %v538 = vmul.f32 %v527, 1.442695
    %v539 = vpow.pop %v538
    %v540 = vmul.f32 %v528, 1.442695
    %v541 = vpow.pop %v540
    %v542 = vmul.f32 %v529, 1.442695
    %v543 = vpow.pop %v542
    %v544 = vmul.f32 %v530, 1.442695
    %v545 = vpow.pop %v544
    %v546 = vmul.f32 %v531, 1.442695
    %v547 = vpow.pop %v546
    %v548 = vsel %vm290, %v533, 0.0
    %549 = vadd.xlane.f32.xlu0 %v548
    %v550 = vpop.xlane.xlu0 %549
    %v551 = vsel %vm290, %v535, 0.0
    %552 = vadd.xlane.f32.xlu0 %v551
    %v553 = vpop.xlane.xlu0 %552
    %v554 = vsel %vm290, %v537, 0.0
    %555 = vadd.xlane.f32.xlu0 %v554
    %v556 = vpop.xlane.xlu0 %555
    %v557 = vsel %vm290, %v539, 0.0
    %558 = vadd.xlane.f32.xlu0 %v557
    %v559 = vpop.xlane.xlu0 %558
    %v560 = vsel %vm290, %v541, 0.0
    %561 = vadd.xlane.f32.xlu0 %v560
    %v562 = vpop.xlane.xlu0 %561
    %v563 = vsel %vm290, %v543, 0.0
    %564 = vadd.xlane.f32.xlu0 %v563
    %v565 = vpop.xlane.xlu0 %564
    %v566 = vsel %vm290, %v545, 0.0
    %567 = vadd.xlane.f32.xlu0 %v566
    %v568 = vpop.xlane.xlu0 %567
    %v569 = vsel %vm290, %v547, 0.0
    %570 = vadd.xlane.f32.xlu0 %v569
    %v571 = vpop.xlane.xlu0 %570
    %v572 = vrcp.pop %v550
    %v573 = vmul.f32 %v533, %v572
    %v574 = vrcp.pop %v553
    %v575 = vmul.f32 %v535, %v574
    %v576 = vrcp.pop %v556
    %v577 = vmul.f32 %v537, %v576
    %v578 = vrcp.pop %v559
    %v579 = vmul.f32 %v539, %v578
    %v580 = vrcp.pop %v562
    %v581 = vmul.f32 %v541, %v580
    %v582 = vrcp.pop %v565
    %v583 = vmul.f32 %v543, %v582
    %v584 = vrcp.pop %v568
    %v585 = vmul.f32 %v545, %v584
    %v586 = vrcp.pop %v571
    %v587 = vmul.f32 %v547, %v586
    %v588 = vpack.c.bf16 %v575, %v573
    %v589 = vpack.c.bf16 %v579, %v577
    %v590 = vpack.c.bf16 %v583, %v581
    %v591 = vpack.c.bf16 %v587, %v585
    %v593 = vsel %vm290, %v588, 0
    %595 = vmatprep.subr.bf16.mxu0 0
    %596 = vmatpush1.bf16.msra.mxu0 %v286
    %597 = vmatprep.subr.bf16.mxu0 0
    %598 = vmatpush1.bf16.msra.mxu0 0
    %599 = vmatprep.subr.bf16.mxu0 0
    %600 = vmatpush1.bf16.msra.mxu0 0
    %601 = vmatprep.subr.bf16.mxu0 0
    %602 = vmatpush1.bf16.msra.mxu0 0
    %603 = vmatprep.subr.bf16.mxu0 0
    %604 = vmatpush1.bf16.msra.mxu0 0
    %605 = vmatprep.subr.bf16.mxu0 0
    %606 = vmatpush1.bf16.msra.mxu0 0
    %607 = vmatprep.subr.bf16.mxu0 0
    %608 = vmatpush1.bf16.msra.mxu0 0
    %609 = vmatprep.subr.bf16.mxu0 0
    %610 = vmatpush1.bf16.msra.mxu0 0
    %611 = vmatprep.subr.bf16.mxu0 0
    %612 = vmatpush1.bf16.msra.mxu0 0
    %613 = vmatprep.subr.bf16.mxu0 0
    %614 = vmatpush1.bf16.msra.mxu0 0
    %615 = vmatprep.subr.bf16.mxu0 0
    %616 = vmatpush1.bf16.msra.mxu0 0
    %617 = vmatprep.subr.bf16.mxu0 0
    %618 = vmatpush1.bf16.msra.mxu0 0
    %619 = vmatprep.subr.bf16.mxu0 0
    %620 = vmatpush1.bf16.msra.mxu0 0
    %621 = vmatprep.subr.bf16.mxu0 0
    %622 = vmatpush1.bf16.msra.mxu0 0
    %623 = vmatprep.subr.bf16.mxu0 0
    %624 = vmatpush1.bf16.msra.mxu0 0
    %625 = vmatprep.subr.bf16.mxu0 0
    %626 = vmatpush1.bf16.msra.mxu0 0
    %627 = vmatprep.mubr.bf16.mxu0 0
    %628 = vmatmul.mubr.bf16.gmra.mrb[0].mxu0 %v593
    %v629 = vpop.f32.mrb[0].mxu0
    %v630 = vadd.f32 0.0, %v629
    %v631 = vpop.f32.mrb[0].mxu0
    %v632 = vpop.f32.mrb[0].mxu0
    %v633 = vadd.f32 0.0, %v632
    %v634 = vpop.f32.mrb[0].mxu0
    %635 = vdwg.mxu0
    %637 = vrot.lane.b32.xlu0 %v286, 112
    %v638 = vpop.permute.xlu0 %637
    %v641 = vsel %vm290, %v589, 0
    %643 = vmatprep.subr.bf16.mxu0 0
    %644 = vmatpush1.bf16.msra.mxu0 %v638
    %645 = vmatprep.subr.bf16.mxu0 0
    %646 = vmatpush1.bf16.msra.mxu0 0
    %647 = vmatprep.subr.bf16.mxu0 0
    %648 = vmatpush1.bf16.msra.mxu0 0
    %649 = vmatprep.subr.bf16.mxu0 0
    %650 = vmatpush1.bf16.msra.mxu0 0
    %651 = vmatprep.subr.bf16.mxu0 0
    %652 = vmatpush1.bf16.msra.mxu0 0
    %653 = vmatprep.subr.bf16.mxu0 0
    %654 = vmatpush1.bf16.msra.mxu0 0
    %655 = vmatprep.subr.bf16.mxu0 0
    %656 = vmatpush1.bf16.msra.mxu0 0
    %657 = vmatprep.subr.bf16.mxu0 0
    %658 = vmatpush1.bf16.msra.mxu0 0
    %659 = vmatprep.subr.bf16.mxu0 0
    %660 = vmatpush1.bf16.msra.mxu0 0
    %661 = vmatprep.subr.bf16.mxu0 0
    %662 = vmatpush1.bf16.msra.mxu0 0
    %663 = vmatprep.subr.bf16.mxu0 0
    %664 = vmatpush1.bf16.msra.mxu0 0
    %665 = vmatprep.subr.bf16.mxu0 0
    %666 = vmatpush1.bf16.msra.mxu0 0
    %667 = vmatprep.subr.bf16.mxu0 0
    %668 = vmatpush1.bf16.msra.mxu0 0
    %669 = vmatprep.subr.bf16.mxu0 0
    %670 = vmatpush1.bf16.msra.mxu0 0
    %671 = vmatprep.subr.bf16.mxu0 0
    %672 = vmatpush1.bf16.msra.mxu0 0
    %673 = vmatprep.subr.bf16.mxu0 0
    %674 = vmatpush1.bf16.msra.mxu0 0
    %675 = vmatprep.mubr.bf16.mxu0 0
    %676 = vmatmul.mubr.bf16.gmra.mrb[0].mxu0 %v641
    %v677 = vpop.f32.mrb[0].mxu0
    %v678 = vadd.f32 0.0, %v677
    %v679 = vpop.f32.mrb[0].mxu0
    %v680 = vpop.f32.mrb[0].mxu0
    %v681 = vadd.f32 0.0, %v680
    %v682 = vpop.f32.mrb[0].mxu0
    %683 = vdwg.mxu0
    %684 = vrot.lane.b32.xlu0 %v286, 96
    %v685 = vpop.permute.xlu0 %684
    %v688 = vsel %vm290, %v590, 0
    %690 = vmatprep.subr.bf16.mxu0 0
    %691 = vmatpush1.bf16.msra.mxu0 %v685
    %692 = vmatprep.subr.bf16.mxu0 0
    %693 = vmatpush1.bf16.msra.mxu0 0
    %694 = vmatprep.subr.bf16.mxu0 0
    %695 = vmatpush1.bf16.msra.mxu0 0
    %696 = vmatprep.subr.bf16.mxu0 0
    %697 = vmatpush1.bf16.msra.mxu0 0
    %698 = vmatprep.subr.bf16.mxu0 0
    %699 = vmatpush1.bf16.msra.mxu0 0
    %700 = vmatprep.subr.bf16.mxu0 0
    %701 = vmatpush1.bf16.msra.mxu0 0
    %702 = vmatprep.subr.bf16.mxu0 0
    %703 = vmatpush1.bf16.msra.mxu0 0
    %704 = vmatprep.subr.bf16.mxu0 0
    %705 = vmatpush1.bf16.msra.mxu0 0
    %706 = vmatprep.subr.bf16.mxu0 0
    %707 = vmatpush1.bf16.msra.mxu0 0
    %708 = vmatprep.subr.bf16.mxu0 0
    %709 = vmatpush1.bf16.msra.mxu0 0
    %710 = vmatprep.subr.bf16.mxu0 0
    %711 = vmatpush1.bf16.msra.mxu0 0
    %712 = vmatprep.subr.bf16.mxu0 0
    %713 = vmatpush1.bf16.msra.mxu0 0
    %714 = vmatprep.subr.bf16.mxu0 0
    %715 = vmatpush1.bf16.msra.mxu0 0
    %716 = vmatprep.subr.bf16.mxu0 0
    %717 = vmatpush1.bf16.msra.mxu0 0
    %718 = vmatprep.subr.bf16.mxu0 0
    %719 = vmatpush1.bf16.msra.mxu0 0
    %720 = vmatprep.subr.bf16.mxu0 0
    %721 = vmatpush1.bf16.msra.mxu0 0
    %722 = vmatprep.mubr.bf16.mxu0 0
    %723 = vmatmul.mubr.bf16.gmra.mrb[0].mxu0 %v688
    %v724 = vpop.f32.mrb[0].mxu0
    %v725 = vadd.f32 0.0, %v724
    %v726 = vpop.f32.mrb[0].mxu0
    %v727 = vpop.f32.mrb[0].mxu0
    %v728 = vadd.f32 0.0, %v727
    %v729 = vpop.f32.mrb[0].mxu0
    %730 = vdwg.mxu0
    %731 = vrot.lane.b32.xlu0 %v286, 80
    %v732 = vpop.permute.xlu0 %731
    %v735 = vsel %vm290, %v591, 0
    %737 = vmatprep.subr.bf16.mxu0 0
    %738 = vmatpush1.bf16.msra.mxu0 %v732
    %739 = vmatprep.subr.bf16.mxu0 0
    %740 = vmatpush1.bf16.msra.mxu0 0
    %741 = vmatprep.subr.bf16.mxu0 0
    %742 = vmatpush1.bf16.msra.mxu0 0
    %743 = vmatprep.subr.bf16.mxu0 0
    %744 = vmatpush1.bf16.msra.mxu0 0
    %745 = vmatprep.subr.bf16.mxu0 0
    %746 = vmatpush1.bf16.msra.mxu0 0
    %747 = vmatprep.subr.bf16.mxu0 0
    %748 = vmatpush1.bf16.msra.mxu0 0
    %749 = vmatprep.subr.bf16.mxu0 0
    %750 = vmatpush1.bf16.msra.mxu0 0
    %751 = vmatprep.subr.bf16.mxu0 0
    %752 = vmatpush1.bf16.msra.mxu0 0
    %753 = vmatprep.subr.bf16.mxu0 0
    %754 = vmatpush1.bf16.msra.mxu0 0
    %755 = vmatprep.subr.bf16.mxu0 0
    %756 = vmatpush1.bf16.msra.mxu0 0
    %757 = vmatprep.subr.bf16.mxu0 0
    %758 = vmatpush1.bf16.msra.mxu0 0
    %759 = vmatprep.subr.bf16.mxu0 0
    %760 = vmatpush1.bf16.msra.mxu0 0
    %761 = vmatprep.subr.bf16.mxu0 0
    %762 = vmatpush1.bf16.msra.mxu0 0
    %763 = vmatprep.subr.bf16.mxu0 0
    %764 = vmatpush1.bf16.msra.mxu0 0
    %765 = vmatprep.subr.bf16.mxu0 0
    %766 = vmatpush1.bf16.msra.mxu0 0
    %767 = vmatprep.subr.bf16.mxu0 0
    %768 = vmatpush1.bf16.msra.mxu0 0
    %769 = vmatprep.mubr.bf16.mxu0 0
    %770 = vmatmul.mubr.bf16.gmra.mrb[0].mxu0 %v735
    %v771 = vpop.f32.mrb[0].mxu0
    %v772 = vadd.f32 0.0, %v771
    %v773 = vpop.f32.mrb[0].mxu0
    %v774 = vpop.f32.mrb[0].mxu0
    %v775 = vadd.f32 0.0, %v774
    %v776 = vpop.f32.mrb[0].mxu0
    %777 = vdwg.mxu0
    %780 = vrot.lane.b32.xlu0 %v678, 16
    %v781 = vpop.permute.xlu0 %780
    %782 = vrot.lane.b32.xlu0 %v681, 16
    %v783 = vpop.permute.xlu0 %782
    %788 = vrot.lane.b32.xlu0 %v725, 32
    %v789 = vpop.permute.xlu0 %788
    %790 = vrot.lane.b32.xlu0 %v728, 32
    %v791 = vpop.permute.xlu0 %790
    %796 = vrot.lane.b32.xlu0 %v772, 48
    %v797 = vpop.permute.xlu0 %796
    %798 = vrot.lane.b32.xlu0 %v775, 48
    %v799 = vpop.permute.xlu0 %798
    %v802 = vsel %vm290, %v630, %v781
    %v803 = vsel %vm290, %v633, %v783
    %vm804 = vcmask 261120
    %v805 = vsel %vm804, %v802, %v789
    %v806 = vsel %vm804, %v803, %v791
    %vm807 = vcmask 392192
    %v808 = vsel %vm807, %v805, %v797
    %v809 = vsel %vm807, %v806, %v799
    %v810 = vpack.c.bf16 %v809, %v808
    %v811 = vlaneseq
    %v812 = vshrl.u32 %v811, 7
    %v813 = vsub.s32 0, %v812
    %v814 = vrot.slane %v182, %v813
    %v823 = vunpack.c.l.b16 %v149
    %v824 = vunpack.c.l.b16 %v150
    %v825 = vunpack.c.l.b16 %v151
    %v826 = vunpack.c.l.b16 %v152
    %v827 = vunpack.c.l.b16 %v153
    %v828 = vunpack.c.l.b16 %v154
    %v829 = vunpack.c.l.b16 %v155
    %v830 = vunpack.c.l.b16 %v156
    %v831 = vpack.c.b16 %v824, %v823
    %v832 = vpack.c.b16 %v826, %v825
    %v833 = vpack.c.b16 %v828, %v827
    %v834 = vpack.c.b16 %v830, %v829
    %v840 = vsel %vm93, %v810, 0
    %842 = vmatprep.subr.bf16.mxu0 0
    %843 = vmatpush1.bf16.msra.mxu0 %v831
    %844 = vmatprep.subr.bf16.mxu0 0
    %845 = vmatpush1.bf16.msra.mxu0 %v832
    %846 = vmatprep.subr.bf16.mxu0 0
    %847 = vmatpush1.bf16.msra.mxu0 %v833
    %848 = vmatprep.subr.bf16.mxu0 0
    %849 = vmatpush1.bf16.msra.mxu0 %v834
    %850 = vmatprep.subr.bf16.mxu0 0
    %851 = vmatpush1.bf16.msra.mxu0 0
    %852 = vmatprep.subr.bf16.mxu0 0
    %853 = vmatpush1.bf16.msra.mxu0 0
    %854 = vmatprep.subr.bf16.mxu0 0
    %855 = vmatpush1.bf16.msra.mxu0 0
    %856 = vmatprep.subr.bf16.mxu0 0
    %857 = vmatpush1.bf16.msra.mxu0 0
    %858 = vmatprep.subr.bf16.mxu0 0
    %859 = vmatpush1.bf16.msra.mxu0 0
    %860 = vmatprep.subr.bf16.mxu0 0
    %861 = vmatpush1.bf16.msra.mxu0 0
    %862 = vmatprep.subr.bf16.mxu0 0
    %863 = vmatpush1.bf16.msra.mxu0 0
    %864 = vmatprep.subr.bf16.mxu0 0
    %865 = vmatpush1.bf16.msra.mxu0 0
    %866 = vmatprep.subr.bf16.mxu0 0
    %867 = vmatpush1.bf16.msra.mxu0 0
    %868 = vmatprep.subr.bf16.mxu0 0
    %869 = vmatpush1.bf16.msra.mxu0 0
    %870 = vmatprep.subr.bf16.mxu0 0
    %871 = vmatpush1.bf16.msra.mxu0 0
    %872 = vmatprep.subr.bf16.mxu0 0
    %873 = vmatpush1.bf16.msra.mxu0 0
    %874 = vmatprep.mubr.bf16.mxu0 0
    %875 = vmatmul.mubr.bf16.gmra.mrb[0].mxu0 %v840
    %v876 = vpop.f32.mrb[0].mxu0
    %v877 = vadd.f32 %v814, %v876
    %v878 = vpop.f32.mrb[0].mxu0
    %v879 = vpop.f32.mrb[0].mxu0
    %v880 = vadd.f32 %v814, %v879
    %v881 = vpop.f32.mrb[0].mxu0
    %882 = vdwg.mxu0
    %v883 = vadd.f32 %v131, %v877
    %v884 = vadd.f32 %v132, %v880
    %v885 = vsel %vm93, %v883, 0.0
    %886 = vadd.xlane.f32.xlu0 %v885
    %v887 = vpop.xlane.xlu0 %886
    %v888 = vsel %vm93, %v884, 0.0
    %889 = vadd.xlane.f32.xlu0 %v888
    %v890 = vpop.xlane.xlu0 %889
    %v891 = vmul.f32 %v887, %v100
    %v892 = vmul.f32 %v890, %v100
    %v893 = vsub.f32 %v883, %v891
    %v894 = vsub.f32 %v884, %v892
    %v895 = vmul.f32 %v893, %v893
    %v896 = vmul.f32 %v894, %v894
    %v897 = vsel %vm93, %v895, 0.0
    %898 = vadd.xlane.f32.xlu0 %v897
    %v899 = vpop.xlane.xlu0 %898
    %v900 = vsel %vm93, %v896, 0.0
    %901 = vadd.xlane.f32.xlu0 %v900
    %v902 = vpop.xlane.xlu0 %901
    %v903 = vmul.f32 %v899, %v100
    %v904 = vmul.f32 %v902, %v100
    %v905 = vadd.f32 %v903, 1e-05
    %v906 = vadd.f32 %v904, 1e-05
    %v907 = vrsqrt.pop %v905
    %v908 = vrsqrt.pop %v906
    %v909 = vmul.f32 %v893, %v907
    %v910 = vmul.f32 %v894, %v908
    %v911 = vlaneseq
    %v912 = vshrl.u32 %v911, 7
    %v913 = vsub.s32 1, %v912
    %v914 = vrot.slane %v182, %v913
    %v915 = vmul.f32 %v909, %v914
    %v916 = vmul.f32 %v910, %v914
    %v917 = vlaneseq
    %v918 = vshrl.u32 %v917, 7
    %v919 = vsub.s32 2, %v918
    %v920 = vrot.slane %v182, %v919
    %v921 = vadd.f32 %v915, %v920
    %v922 = vadd.f32 %v916, %v920
    %v923 = vpack.c.bf16 %v922, %v921
    %v925 = vlaneseq
    %v926 = vshrl.u32 %v925, 7
    %v927 = vsub.s32 0, %v926
    %v928 = vrot.slane %v183, %v927
    %v938 = vunpack.c.l.b16 %v157
    %v939 = vunpack.c.l.b16 %v158
    %v940 = vunpack.c.l.b16 %v159
    %v941 = vunpack.c.l.b16 %v160
    %v942 = vunpack.c.l.b16 %v161
    %v943 = vunpack.c.l.b16 %v162
    %v944 = vunpack.c.l.b16 %v163
    %v945 = vunpack.c.l.b16 %v164
    %v946 = vpack.c.b16 %v939, %v938
    %v947 = vpack.c.b16 %v941, %v940
    %v948 = vpack.c.b16 %v943, %v942
    %v949 = vpack.c.b16 %v945, %v944
    %v955 = vsel %vm93, %v923, 0
    %957 = vmatprep.subr.bf16.mxu0 0
    %958 = vmatpush1.bf16.msra.mxu0 %v946
    %959 = vmatprep.subr.bf16.mxu0 0
    %960 = vmatpush1.bf16.msra.mxu0 %v947
    %961 = vmatprep.subr.bf16.mxu0 0
    %962 = vmatpush1.bf16.msra.mxu0 %v948
    %963 = vmatprep.subr.bf16.mxu0 0
    %964 = vmatpush1.bf16.msra.mxu0 %v949
    %965 = vmatprep.subr.bf16.mxu0 0
    %966 = vmatpush1.bf16.msra.mxu0 0
    %967 = vmatprep.subr.bf16.mxu0 0
    %968 = vmatpush1.bf16.msra.mxu0 0
    %969 = vmatprep.subr.bf16.mxu0 0
    %970 = vmatpush1.bf16.msra.mxu0 0
    %971 = vmatprep.subr.bf16.mxu0 0
    %972 = vmatpush1.bf16.msra.mxu0 0
    %973 = vmatprep.subr.bf16.mxu0 0
    %974 = vmatpush1.bf16.msra.mxu0 0
    %975 = vmatprep.subr.bf16.mxu0 0
    %976 = vmatpush1.bf16.msra.mxu0 0
    %977 = vmatprep.subr.bf16.mxu0 0
    %978 = vmatpush1.bf16.msra.mxu0 0
    %979 = vmatprep.subr.bf16.mxu0 0
    %980 = vmatpush1.bf16.msra.mxu0 0
    %981 = vmatprep.subr.bf16.mxu0 0
    %982 = vmatpush1.bf16.msra.mxu0 0
    %983 = vmatprep.subr.bf16.mxu0 0
    %984 = vmatpush1.bf16.msra.mxu0 0
    %985 = vmatprep.subr.bf16.mxu0 0
    %986 = vmatpush1.bf16.msra.mxu0 0
    %987 = vmatprep.subr.bf16.mxu0 0
    %988 = vmatpush1.bf16.msra.mxu0 0
    %989 = vmatprep.mubr.bf16.mxu0 0
    %990 = vmatmul.mubr.bf16.gmra.mrb[0].mxu0 %v955
    %v991 = vpop.f32.mrb[0].mxu0
    %v992 = vadd.f32 %v928, %v991
    %v993 = vpop.f32.mrb[0].mxu0
    %v994 = vpop.f32.mrb[0].mxu0
    %v995 = vadd.f32 %v928, %v994
    %v996 = vpop.f32.mrb[0].mxu0
    %997 = vdwg.mxu0
    %v998 = vmul.f32 %v992, 0.5
    %v999 = vmul.f32 %v995, 0.5
    %v1000 = vmul.f32 %v992, 0.70710677
    %v1001 = vmul.f32 %v995, 0.70710677
    %vm1002 = vcmp.ge.f32.partialorder %v1000, 0.0
    %vm1003 = vcmp.ge.f32.partialorder %v1001, 0.0
    %v1004 = vsel %vm1002, 1.0, -1.0
    %v1005 = vsel %vm1003, 1.0, -1.0
    %v1006 = vand.u32 2147483647, %v1000
    %v1007 = vand.u32 2147483647, %v1001
    %v1008 = vmul.f32 %v1006, 0.3275911
    %v1009 = vmul.f32 %v1007, 0.3275911
    %v1010 = vadd.f32 %v1008, 1.0
    %v1011 = vadd.f32 %v1009, 1.0
    %v1012 = vrcp.pop %v1010
    %v1013 = vmul.f32 1.0, %v1012
    %v1014 = vrcp.pop %v1011
    %v1015 = vmul.f32 1.0, %v1014
    %v1016 = vmul.f32 %v1013, 1.0614054
    %v1017 = vmul.f32 %v1015, 1.0614054
    %v1018 = vadd.f32 %v1016, -1.4531521
    %v1019 = vadd.f32 %v1017, -1.4531521
    %v1020 = vmul.f32 %v1018, %v1013
    %v1021 = vmul.f32 %v1019, %v1015
    %v1022 = vadd.f32 %v1020, 1.4214138
    %v1023 = vadd.f32 %v1021, 1.4214138
    %v1024 = vmul.f32 %v1022, %v1013
    %v1025 = vmul.f32 %v1023, %v1015
    %v1026 = vadd.f32 %v1024, -0.28449672
    %v1027 = vadd.f32 %v1025, -0.28449672
    %v1028 = vmul.f32 %v1026, %v1013
    %v1029 = vmul.f32 %v1027, %v1015
    %v1030 = vadd.f32 %v1028, 0.2548296
    %v1031 = vadd.f32 %v1029, 0.2548296
    %v1032 = vmul.f32 %v1030, %v1013
    %v1033 = vmul.f32 %v1031, %v1015
    %v1034 = vsub.f32 0.0, %v1006
    %v1035 = vsub.f32 0.0, %v1007
    %v1036 = vmul.f32 %v1034, %v1006
    %v1037 = vmul.f32 %v1035, %v1007
    %v1038 = vmul.f32 %v1036, 1.442695
    %v1039 = vpow.pop %v1038
    %v1040 = vmul.f32 %v1037, 1.442695
    %v1041 = vpow.pop %v1040
    %v1042 = vmul.f32 %v1032, %v1039
    %v1043 = vmul.f32 %v1033, %v1041
    %v1044 = vsub.f32 1.0, %v1042
    %v1045 = vsub.f32 1.0, %v1043
    %v1046 = vmul.f32 %v1004, %v1044
    %v1047 = vmul.f32 %v1005, %v1045
    %v1048 = vadd.f32 %v1046, 1.0
    %v1049 = vadd.f32 %v1047, 1.0
    %v1050 = vmul.f32 %v998, %v1048
    %v1051 = vmul.f32 %v999, %v1049
    %v1052 = vpack.c.bf16 %v1051, %v1050
    %v1053 = vlaneseq
    %v1054 = vshrl.u32 %v1053, 7
    %v1055 = vsub.s32 3, %v1054
    %v1056 = vrot.slane %v182, %v1055
    %v1073 = vunpack.c.l.b16 %v165
    %v1074 = vunpack.c.l.b16 %v166
    %v1075 = vunpack.c.l.b16 %v167
    %v1076 = vunpack.c.l.b16 %v168
    %v1077 = vunpack.c.l.b16 %v169
    %v1078 = vunpack.c.l.b16 %v170
    %v1079 = vunpack.c.l.b16 %v171
    %v1080 = vunpack.c.l.b16 %v172
    %v1081 = vunpack.c.l.b16 %v173
    %v1082 = vunpack.c.l.b16 %v174
    %v1083 = vunpack.c.l.b16 %v175
    %v1084 = vunpack.c.l.b16 %v176
    %v1085 = vunpack.c.l.b16 %v177
    %v1086 = vunpack.c.l.b16 %v178
    %v1087 = vunpack.c.l.b16 %v179
    %v1088 = vunpack.c.l.b16 %v180
    %v1089 = vpack.c.b16 %v1074, %v1073
    %v1090 = vpack.c.b16 %v1076, %v1075
    %v1091 = vpack.c.b16 %v1078, %v1077
    %v1092 = vpack.c.b16 %v1080, %v1079
    %v1093 = vpack.c.b16 %v1082, %v1081
    %v1094 = vpack.c.b16 %v1084, %v1083
    %v1095 = vpack.c.b16 %v1086, %v1085
    %v1096 = vpack.c.b16 %v1088, %v1087
    %1105 = vmatprep.subr.bf16.mxu0 0
    %1106 = vmatpush1.bf16.msra.mxu0 %v1089
    %1107 = vmatprep.subr.bf16.mxu0 0
    %1108 = vmatpush1.bf16.msra.mxu0 %v1090
    %1109 = vmatprep.subr.bf16.mxu0 0
    %1110 = vmatpush1.bf16.msra.mxu0 %v1091
    %1111 = vmatprep.subr.bf16.mxu0 0
    %1112 = vmatpush1.bf16.msra.mxu0 %v1092
    %1113 = vmatprep.subr.bf16.mxu0 0
    %1114 = vmatpush1.bf16.msra.mxu0 %v1093
    %1115 = vmatprep.subr.bf16.mxu0 0
    %1116 = vmatpush1.bf16.msra.mxu0 %v1094
    %1117 = vmatprep.subr.bf16.mxu0 0
    %1118 = vmatpush1.bf16.msra.mxu0 %v1095
    %1119 = vmatprep.subr.bf16.mxu0 0
    %1120 = vmatpush1.bf16.msra.mxu0 %v1096
    %1121 = vmatprep.subr.bf16.mxu0 0
    %1122 = vmatpush1.bf16.msra.mxu0 0
    %1123 = vmatprep.subr.bf16.mxu0 0
    %1124 = vmatpush1.bf16.msra.mxu0 0
    %1125 = vmatprep.subr.bf16.mxu0 0
    %1126 = vmatpush1.bf16.msra.mxu0 0
    %1127 = vmatprep.subr.bf16.mxu0 0
    %1128 = vmatpush1.bf16.msra.mxu0 0
    %1129 = vmatprep.subr.bf16.mxu0 0
    %1130 = vmatpush1.bf16.msra.mxu0 0
    %1131 = vmatprep.subr.bf16.mxu0 0
    %1132 = vmatpush1.bf16.msra.mxu0 0
    %1133 = vmatprep.subr.bf16.mxu0 0
    %1134 = vmatpush1.bf16.msra.mxu0 0
    %1135 = vmatprep.subr.bf16.mxu0 0
    %1136 = vmatpush1.bf16.msra.mxu0 0
    %1137 = vmatprep.mubr.bf16.mxu0 0
    %1138 = vmatmul.mubr.bf16.gmra.mrb[0].mxu0 %v1052
    %v1139 = vpop.f32.mrb[0].mxu0
    %v1140 = vadd.f32 %v1056, %v1139
    %v1141 = vpop.f32.mrb[0].mxu0
    %v1142 = vpop.f32.mrb[0].mxu0
    %v1143 = vadd.f32 %v1056, %v1142
    %v1144 = vpop.f32.mrb[0].mxu0
    %1145 = vdwg.mxu0
    %v1146 = vadd.f32 %v921, %v1140
    %v1147 = vadd.f32 %v922, %v1143
    %v1148 = vsel %vm93, %v1146, 0.0
    %1149 = vadd.xlane.f32.xlu0 %v1148
    %v1150 = vpop.xlane.xlu0 %1149
    %v1151 = vsel %vm93, %v1147, 0.0
    %1152 = vadd.xlane.f32.xlu0 %v1151
    %v1153 = vpop.xlane.xlu0 %1152
    %v1154 = vmul.f32 %v1150, %v100
    %v1155 = vmul.f32 %v1153, %v100
    %v1156 = vsub.f32 %v1146, %v1154
    %v1157 = vsub.f32 %v1147, %v1155
    %v1158 = vmul.f32 %v1156, %v1156
    %v1159 = vmul.f32 %v1157, %v1157
    %v1160 = vsel %vm93, %v1158, 0.0
    %1161 = vadd.xlane.f32.xlu0 %v1160
    %v1162 = vpop.xlane.xlu0 %1161
    %v1163 = vsel %vm93, %v1159, 0.0
    %1164 = vadd.xlane.f32.xlu0 %v1163
    %v1165 = vpop.xlane.xlu0 %1164
    %v1166 = vmul.f32 %v1162, %v100
    %v1167 = vmul.f32 %v1165, %v100
    %v1168 = vadd.f32 %v1166, 1e-05
    %v1169 = vadd.f32 %v1167, 1e-05
    %v1170 = vrsqrt.pop %v1168
    %v1171 = vrsqrt.pop %v1169
    %v1172 = vmul.f32 %v1156, %v1170
    %v1173 = vmul.f32 %v1157, %v1171
    %v1174 = vlaneseq
    %v1175 = vshrl.u32 %v1174, 7
    %v1176 = vsub.s32 4, %v1175
    %v1177 = vrot.slane %v182, %v1176
    %v1178 = vmul.f32 %v1172, %v1177
    %v1179 = vmul.f32 %v1173, %v1177
    %v1180 = vlaneseq
    %v1181 = vshrl.u32 %v1180, 7
    %v1182 = vsub.s32 5, %v1181
    %v1183 = vrot.slane %v182, %v1182
    %v1184 = vadd.f32 %v1178, %v1183
    %v1185 = vadd.f32 %v1179, %v1183
    %s1186 = scalar_lea.vmem %s4, 64
    %v1187 = vld [vmem:[%s1186] sm:$0xff]
    %v1188 = vld [vmem:[%s1186 + $0x8] sm:$0xff]
    %v1189 = vld [vmem:[%s1186 + $0x10] sm:$0xff]
    %v1190 = vld [vmem:[%s1186 + $0x18] sm:$0xff]
    %v1191 = vld [vmem:[%s1186 + $0x20] sm:$0xff]
    %v1192 = vld [vmem:[%s1186 + $0x28] sm:$0xff]
    %v1193 = vld [vmem:[%s1186 + $0x30] sm:$0xff]
    %v1194 = vld [vmem:[%s1186 + $0x38] sm:$0xff]
    %s1195 = scalar_lea.vmem %s5, 32
    %v1196 = vld [vmem:[%s1195] sm:$0xf]
    %v1197 = vld [vmem:[%s1195 + $0x4] sm:$0xf]
    %v1198 = vld [vmem:[%s1195 + $0x8] sm:$0xf]
    %v1199 = vld [vmem:[%s1195 + $0xc] sm:$0xf]
    %v1200 = vld [vmem:[%s1195 + $0x10] sm:$0xf]
    %v1201 = vld [vmem:[%s1195 + $0x14] sm:$0xf]
    %v1202 = vld [vmem:[%s1195 + $0x18] sm:$0xf]
    %v1203 = vld [vmem:[%s1195 + $0x1c] sm:$0xf]
    %s1204 = scalar_lea.vmem %s6, 32
    %v1205 = vld [vmem:[%s1204] sm:$0xf]
    %v1206 = vld [vmem:[%s1204 + $0x4] sm:$0xf]
    %v1207 = vld [vmem:[%s1204 + $0x8] sm:$0xf]
    %v1208 = vld [vmem:[%s1204 + $0xc] sm:$0xf]
    %v1209 = vld [vmem:[%s1204 + $0x10] sm:$0xf]
    %v1210 = vld [vmem:[%s1204 + $0x14] sm:$0xf]
    %v1211 = vld [vmem:[%s1204 + $0x18] sm:$0xf]
    %v1212 = vld [vmem:[%s1204 + $0x1c] sm:$0xf]
    %s1213 = scalar_lea.vmem %s7, 64
    %v1214 = vld [vmem:[%s1213] sm:$0xf]
    %v1215 = vld [vmem:[%s1213 + $0x4] sm:$0xf]
    %v1216 = vld [vmem:[%s1213 + $0x8] sm:$0xf]
    %v1217 = vld [vmem:[%s1213 + $0xc] sm:$0xf]
    %v1218 = vld [vmem:[%s1213 + $0x10] sm:$0xf]
    %v1219 = vld [vmem:[%s1213 + $0x14] sm:$0xf]
    %v1220 = vld [vmem:[%s1213 + $0x18] sm:$0xf]
    %v1221 = vld [vmem:[%s1213 + $0x1c] sm:$0xf]
    %v1222 = vld [vmem:[%s1213 + $0x20] sm:$0xf]
    %v1223 = vld [vmem:[%s1213 + $0x24] sm:$0xf]
    %v1224 = vld [vmem:[%s1213 + $0x28] sm:$0xf]
    %v1225 = vld [vmem:[%s1213 + $0x2c] sm:$0xf]
    %v1226 = vld [vmem:[%s1213 + $0x30] sm:$0xf]
    %v1227 = vld [vmem:[%s1213 + $0x34] sm:$0xf]
    %v1228 = vld [vmem:[%s1213 + $0x38] sm:$0xf]
    %v1229 = vld [vmem:[%s1213 + $0x3c] sm:$0xf]
    %s1230 = scalar_lea.vmem [#allocation5], 2
    %v1231 = vld [vmem:[%s1230] sm:$0x3]
    %s1232 = scalar_lea.vmem %s9, 8
    %v1233 = vld [vmem:[%s1232] sm:$0x3f]
    %s1234 = scalar_lea.vmem %s10, 1
    %v1235 = vld [vmem:[%s1234] sm:$0x1]
    %v1236 = vpack.c.bf16 %v1185, %v1184
    %v1238 = vlaneseq
    %v1239 = vshrl.u32 %v1238, 7
    %v1240 = vsub.s32 0, %v1239
    %v1241 = vrot.slane %v1231, %v1240
    %v1242 = vlaneseq
    %v1243 = vshrl.u32 %v1242, 7
    %v1244 = vsub.s32 1, %v1243
    %v1245 = vrot.slane %v1231, %v1244
    %v1256 = vunpack.c.l.b16 %v1187
    %v1257 = vunpack.c.h.b16 %v1187
    %v1258 = vunpack.c.l.b16 %v1188
    %v1259 = vunpack.c.h.b16 %v1188
    %v1260 = vunpack.c.l.b16 %v1189
    %v1261 = vunpack.c.h.b16 %v1189
    %v1262 = vunpack.c.l.b16 %v1190
    %v1263 = vunpack.c.h.b16 %v1190
    %v1264 = vunpack.c.l.b16 %v1191
    %v1265 = vunpack.c.h.b16 %v1191
    %v1266 = vunpack.c.l.b16 %v1192
    %v1267 = vunpack.c.h.b16 %v1192
    %v1268 = vunpack.c.l.b16 %v1193
    %v1269 = vunpack.c.h.b16 %v1193
    %v1270 = vunpack.c.l.b16 %v1194
    %v1271 = vunpack.c.h.b16 %v1194
    %v1272 = vpack.c.b16 %v1258, %v1256
    %v1273 = vpack.c.b16 %v1259, %v1257
    %v1274 = vpack.c.b16 %v1262, %v1260
    %v1275 = vpack.c.b16 %v1263, %v1261
    %v1276 = vpack.c.b16 %v1266, %v1264
    %v1277 = vpack.c.b16 %v1267, %v1265
    %v1278 = vpack.c.b16 %v1270, %v1268
    %v1279 = vpack.c.b16 %v1271, %v1269
    %v1289 = vsel %vm93, %v1236, 0
    %1291 = vmatprep.subr.bf16.mxu0 %v1273
    %1292 = vmatpush1.bf16.msra.mxu0 %v1272
    %1293 = vmatprep.subr.bf16.mxu0 %v1275
    %1294 = vmatpush1.bf16.msra.mxu0 %v1274
    %1295 = vmatprep.subr.bf16.mxu0 %v1277
    %1296 = vmatpush1.bf16.msra.mxu0 %v1276
    %1297 = vmatprep.subr.bf16.mxu0 %v1279
    %1298 = vmatpush1.bf16.msra.mxu0 %v1278
    %1299 = vmatprep.subr.bf16.mxu0 0
    %1300 = vmatpush1.bf16.msra.mxu0 0
    %1301 = vmatprep.subr.bf16.mxu0 0
    %1302 = vmatpush1.bf16.msra.mxu0 0
    %1303 = vmatprep.subr.bf16.mxu0 0
    %1304 = vmatpush1.bf16.msra.mxu0 0
    %1305 = vmatprep.subr.bf16.mxu0 0
    %1306 = vmatpush1.bf16.msra.mxu0 0
    %1307 = vmatprep.subr.bf16.mxu0 0
    %1308 = vmatpush1.bf16.msra.mxu0 0
    %1309 = vmatprep.subr.bf16.mxu0 0
    %1310 = vmatpush1.bf16.msra.mxu0 0
    %1311 = vmatprep.subr.bf16.mxu0 0
    %1312 = vmatpush1.bf16.msra.mxu0 0
    %1313 = vmatprep.subr.bf16.mxu0 0
    %1314 = vmatpush1.bf16.msra.mxu0 0
    %1315 = vmatprep.subr.bf16.mxu0 0
    %1316 = vmatpush1.bf16.msra.mxu0 0
    %1317 = vmatprep.subr.bf16.mxu0 0
    %1318 = vmatpush1.bf16.msra.mxu0 0
    %1319 = vmatprep.subr.bf16.mxu0 0
    %1320 = vmatpush1.bf16.msra.mxu0 0
    %1321 = vmatprep.subr.bf16.mxu0 0
    %1322 = vmatpush1.bf16.msra.mxu0 0
    %1323 = vmatprep.mubr.bf16.mxu0 0
    %1324 = vmatmul.mubr.bf16.gmra.mrb[0].mxu0 %v1289
    %v1325 = vpop.f32.mrb[0].mxu0
    %v1326 = vadd.f32 %v1241, %v1325
    %v1327 = vpop.f32.mrb[0].mxu0
    %v1328 = vadd.f32 %v1245, %v1327
    %v1329 = vpop.f32.mrb[0].mxu0
    %v1330 = vadd.f32 %v1241, %v1329
    %v1331 = vpop.f32.mrb[0].mxu0
    %v1332 = vadd.f32 %v1245, %v1331
    %1333 = vdwg.mxu0
    %v1334 = vmul.f32 %v1326, 0.25
    %v1335 = vmul.f32 %v1330, 0.25
    %v1336 = vpack.c.bf16 %v1335, %v1334
    %v1337 = vpack.c.bf16 %v1330, %v1326
    %v1338 = vpack.c.bf16 %v1332, %v1328
    %1340 = vrot.lane.b32.xlu0 %v1337, 64
    %v1341 = vpop.permute.xlu0 %1340
    %v1343 = vsel %vm290, %v1336, 0
    %v1346 = vsel %vm290, %v1341, 0
    %1348 = vmatprep.subr.bf16.mxu0 0
    %1349 = vmatpush1.bf16.xpose.msra.mxu0 %v1346
    %1350 = vmatprep.subr.bf16.mxu0 0
    %1351 = vmatpush1.bf16.xpose.msra.mxu0 0
    %1352 = vmatprep.subr.bf16.mxu0 0
    %1353 = vmatpush1.bf16.xpose.msra.mxu0 0
    %1354 = vmatprep.subr.bf16.mxu0 0
    %1355 = vmatpush1.bf16.xpose.msra.mxu0 0
    %1356 = vmatprep.subr.bf16.mxu0 0
    %1357 = vmatpush1.bf16.xpose.msra.mxu0 0
    %1358 = vmatprep.subr.bf16.mxu0 0
    %1359 = vmatpush1.bf16.xpose.msra.mxu0 0
    %1360 = vmatprep.subr.bf16.mxu0 0
    %1361 = vmatpush1.bf16.xpose.msra.mxu0 0
    %1362 = vmatprep.subr.bf16.mxu0 0
    %1363 = vmatpush1.bf16.xpose.msra.mxu0 0
    %1364 = vmatprep.subr.bf16.mxu0 0
    %1365 = vmatpush1.bf16.xpose.msra.mxu0 0
    %1366 = vmatprep.subr.bf16.mxu0 0
    %1367 = vmatpush1.bf16.xpose.msra.mxu0 0
    %1368 = vmatprep.subr.bf16.mxu0 0
    %1369 = vmatpush1.bf16.xpose.msra.mxu0 0
    %1370 = vmatprep.subr.bf16.mxu0 0
    %1371 = vmatpush1.bf16.xpose.msra.mxu0 0
    %1372 = vmatprep.subr.bf16.mxu0 0
    %1373 = vmatpush1.bf16.xpose.msra.mxu0 0
    %1374 = vmatprep.subr.bf16.mxu0 0
    %1375 = vmatpush1.bf16.xpose.msra.mxu0 0
    %1376 = vmatprep.subr.bf16.mxu0 0
    %1377 = vmatpush1.bf16.xpose.msra.mxu0 0
    %1378 = vmatprep.subr.bf16.mxu0 0
    %1379 = vmatpush1.bf16.xpose.msra.mxu0 0
    %1380 = vmatprep.mubr.bf16.mxu0 0
    %1381 = vmatmul.mubr.bf16.gmra.mrb[0].mxu0 %v1343
    %v1382 = vpop.f32.mrb[0].mxu0
    %v1383 = vadd.f32 0.0, %v1382
    %v1384 = vpop.f32.mrb[0].mxu0
    %v1385 = vpop.f32.mrb[0].mxu0
    %v1386 = vadd.f32 0.0, %v1385
    %v1387 = vpop.f32.mrb[0].mxu0
    %1388 = vdwg.mxu0
    %1390 = vrot.lane.b32.xlu0 %v1336, 112
    %v1391 = vpop.permute.xlu0 %1390
    %1392 = vrot.lane.b32.xlu0 %v1337, 48
    %v1393 = vpop.permute.xlu0 %1392
    %v1395 = vsel %vm290, %v1391, 0
    %v1398 = vsel %vm290, %v1393, 0
    %1400 = vmatprep.subr.bf16.mxu0 0
    %1401 = vmatpush1.bf16.xpose.msra.mxu0 %v1398
    %1402 = vmatprep.subr.bf16.mxu0 0
    %1403 = vmatpush1.bf16.xpose.msra.mxu0 0
    %1404 = vmatprep.subr.bf16.mxu0 0
    %1405 = vmatpush1.bf16.xpose.msra.mxu0 0
    %1406 = vmatprep.subr.bf16.mxu0 0
    %1407 = vmatpush1.bf16.xpose.msra.mxu0 0
    %1408 = vmatprep.subr.bf16.mxu0 0
    %1409 = vmatpush1.bf16.xpose.msra.mxu0 0
    %1410 = vmatprep.subr.bf16.mxu0 0
    %1411 = vmatpush1.bf16.xpose.msra.mxu0 0
    %1412 = vmatprep.subr.bf16.mxu0 0
    %1413 = vmatpush1.bf16.xpose.msra.mxu0 0
    %1414 = vmatprep.subr.bf16.mxu0 0
    %1415 = vmatpush1.bf16.xpose.msra.mxu0 0
    %1416 = vmatprep.subr.bf16.mxu0 0
    %1417 = vmatpush1.bf16.xpose.msra.mxu0 0
    %1418 = vmatprep.subr.bf16.mxu0 0
    %1419 = vmatpush1.bf16.xpose.msra.mxu0 0
    %1420 = vmatprep.subr.bf16.mxu0 0
    %1421 = vmatpush1.bf16.xpose.msra.mxu0 0
    %1422 = vmatprep.subr.bf16.mxu0 0
    %1423 = vmatpush1.bf16.xpose.msra.mxu0 0
    %1424 = vmatprep.subr.bf16.mxu0 0
    %1425 = vmatpush1.bf16.xpose.msra.mxu0 0
    %1426 = vmatprep.subr.bf16.mxu0 0
    %1427 = vmatpush1.bf16.xpose.msra.mxu0 0
    %1428 = vmatprep.subr.bf16.mxu0 0
    %1429 = vmatpush1.bf16.xpose.msra.mxu0 0
    %1430 = vmatprep.subr.bf16.mxu0 0
    %1431 = vmatpush1.bf16.xpose.msra.mxu0 0
    %1432 = vmatprep.mubr.bf16.mxu0 0
    %1433 = vmatmul.mubr.bf16.gmra.mrb[0].mxu0 %v1395
    %v1434 = vpop.f32.mrb[0].mxu0
    %v1435 = vadd.f32 0.0, %v1434
    %v1436 = vpop.f32.mrb[0].mxu0
    %v1437 = vpop.f32.mrb[0].mxu0
    %v1438 = vadd.f32 0.0, %v1437
    %v1439 = vpop.f32.mrb[0].mxu0
    %1440 = vdwg.mxu0
    %1441 = vrot.lane.b32.xlu0 %v1336, 96
    %v1442 = vpop.permute.xlu0 %1441
    %1443 = vrot.lane.b32.xlu0 %v1337, 32
    %v1444 = vpop.permute.xlu0 %1443
    %v1446 = vsel %vm290, %v1442, 0
    %v1449 = vsel %vm290, %v1444, 0
    %1451 = vmatprep.subr.bf16.mxu0 0
    %1452 = vmatpush1.bf16.xpose.msra.mxu0 %v1449
    %1453 = vmatprep.subr.bf16.mxu0 0
    %1454 = vmatpush1.bf16.xpose.msra.mxu0 0
    %1455 = vmatprep.subr.bf16.mxu0 0
    %1456 = vmatpush1.bf16.xpose.msra.mxu0 0
    %1457 = vmatprep.subr.bf16.mxu0 0
    %1458 = vmatpush1.bf16.xpose.msra.mxu0 0
    %1459 = vmatprep.subr.bf16.mxu0 0
    %1460 = vmatpush1.bf16.xpose.msra.mxu0 0
    %1461 = vmatprep.subr.bf16.mxu0 0
    %1462 = vmatpush1.bf16.xpose.msra.mxu0 0
    %1463 = vmatprep.subr.bf16.mxu0 0
    %1464 = vmatpush1.bf16.xpose.msra.mxu0 0
    %1465 = vmatprep.subr.bf16.mxu0 0
    %1466 = vmatpush1.bf16.xpose.msra.mxu0 0
    %1467 = vmatprep.subr.bf16.mxu0 0
    %1468 = vmatpush1.bf16.xpose.msra.mxu0 0
    %1469 = vmatprep.subr.bf16.mxu0 0
    %1470 = vmatpush1.bf16.xpose.msra.mxu0 0
    %1471 = vmatprep.subr.bf16.mxu0 0
    %1472 = vmatpush1.bf16.xpose.msra.mxu0 0
    %1473 = vmatprep.subr.bf16.mxu0 0
    %1474 = vmatpush1.bf16.xpose.msra.mxu0 0
    %1475 = vmatprep.subr.bf16.mxu0 0
    %1476 = vmatpush1.bf16.xpose.msra.mxu0 0
    %1477 = vmatprep.subr.bf16.mxu0 0
    %1478 = vmatpush1.bf16.xpose.msra.mxu0 0
    %1479 = vmatprep.subr.bf16.mxu0 0
    %1480 = vmatpush1.bf16.xpose.msra.mxu0 0
    %1481 = vmatprep.subr.bf16.mxu0 0
    %1482 = vmatpush1.bf16.xpose.msra.mxu0 0
    %1483 = vmatprep.mubr.bf16.mxu0 0
    %1484 = vmatmul.mubr.bf16.gmra.mrb[0].mxu0 %v1446
    %v1485 = vpop.f32.mrb[0].mxu0
    %v1486 = vadd.f32 0.0, %v1485
    %v1487 = vpop.f32.mrb[0].mxu0
    %v1488 = vpop.f32.mrb[0].mxu0
    %v1489 = vadd.f32 0.0, %v1488
    %v1490 = vpop.f32.mrb[0].mxu0
    %1491 = vdwg.mxu0
    %1492 = vrot.lane.b32.xlu0 %v1336, 80
    %v1493 = vpop.permute.xlu0 %1492
    %1494 = vrot.lane.b32.xlu0 %v1337, 16
    %v1495 = vpop.permute.xlu0 %1494
    %v1497 = vsel %vm290, %v1493, 0
    %v1500 = vsel %vm290, %v1495, 0
    %1502 = vmatprep.subr.bf16.mxu0 0
    %1503 = vmatpush1.bf16.xpose.msra.mxu0 %v1500
    %1504 = vmatprep.subr.bf16.mxu0 0
    %1505 = vmatpush1.bf16.xpose.msra.mxu0 0
    %1506 = vmatprep.subr.bf16.mxu0 0
    %1507 = vmatpush1.bf16.xpose.msra.mxu0 0
    %1508 = vmatprep.subr.bf16.mxu0 0
    %1509 = vmatpush1.bf16.xpose.msra.mxu0 0
    %1510 = vmatprep.subr.bf16.mxu0 0
    %1511 = vmatpush1.bf16.xpose.msra.mxu0 0
    %1512 = vmatprep.subr.bf16.mxu0 0
    %1513 = vmatpush1.bf16.xpose.msra.mxu0 0
    %1514 = vmatprep.subr.bf16.mxu0 0
    %1515 = vmatpush1.bf16.xpose.msra.mxu0 0
    %1516 = vmatprep.subr.bf16.mxu0 0
    %1517 = vmatpush1.bf16.xpose.msra.mxu0 0
    %1518 = vmatprep.subr.bf16.mxu0 0
    %1519 = vmatpush1.bf16.xpose.msra.mxu0 0
    %1520 = vmatprep.subr.bf16.mxu0 0
    %1521 = vmatpush1.bf16.xpose.msra.mxu0 0
    %1522 = vmatprep.subr.bf16.mxu0 0
    %1523 = vmatpush1.bf16.xpose.msra.mxu0 0
    %1524 = vmatprep.subr.bf16.mxu0 0
    %1525 = vmatpush1.bf16.xpose.msra.mxu0 0
    %1526 = vmatprep.subr.bf16.mxu0 0
    %1527 = vmatpush1.bf16.xpose.msra.mxu0 0
    %1528 = vmatprep.subr.bf16.mxu0 0
    %1529 = vmatpush1.bf16.xpose.msra.mxu0 0
    %1530 = vmatprep.subr.bf16.mxu0 0
    %1531 = vmatpush1.bf16.xpose.msra.mxu0 0
    %1532 = vmatprep.subr.bf16.mxu0 0
    %1533 = vmatpush1.bf16.xpose.msra.mxu0 0
    %1534 = vmatprep.mubr.bf16.mxu0 0
    %1535 = vmatmul.mubr.bf16.gmra.mrb[0].mxu0 %v1497
    %v1536 = vpop.f32.mrb[0].mxu0
    %v1537 = vadd.f32 0.0, %v1536
    %v1538 = vpop.f32.mrb[0].mxu0
    %v1539 = vpop.f32.mrb[0].mxu0
    %v1540 = vadd.f32 0.0, %v1539
    %v1541 = vpop.f32.mrb[0].mxu0
    %1542 = vdwg.mxu0
    %v1543 = vadd.f32 %v1383, %v133
    %v1544 = vadd.f32 %v1386, %v134
    %v1545 = vadd.f32 %v1435, %v135
    %v1546 = vadd.f32 %v1438, %v136
    %v1547 = vadd.f32 %v1486, %v137
    %v1548 = vadd.f32 %v1489, %v138
    %v1549 = vadd.f32 %v1537, %v139
    %v1550 = vadd.f32 %v1540, %v140
    %v1551 = vsel %vm290, %v1543, -inf
    %1552 = vmax.xlane.f32.xlu0 %v1551
    %v1553 = vpop.xlane.xlu0 %1552
    %v1554 = vsel %vm290, %v1544, -inf
    %1555 = vmax.xlane.f32.xlu0 %v1554
    %v1556 = vpop.xlane.xlu0 %1555
    %v1557 = vsel %vm290, %v1545, -inf
    %1558 = vmax.xlane.f32.xlu0 %v1557
    %v1559 = vpop.xlane.xlu0 %1558
    %v1560 = vsel %vm290, %v1546, -inf
    %1561 = vmax.xlane.f32.xlu0 %v1560
    %v1562 = vpop.xlane.xlu0 %1561
    %v1563 = vsel %vm290, %v1547, -inf
    %1564 = vmax.xlane.f32.xlu0 %v1563
    %v1565 = vpop.xlane.xlu0 %1564
    %v1566 = vsel %vm290, %v1548, -inf
    %1567 = vmax.xlane.f32.xlu0 %v1566
    %v1568 = vpop.xlane.xlu0 %1567
    %v1569 = vsel %vm290, %v1549, -inf
    %1570 = vmax.xlane.f32.xlu0 %v1569
    %v1571 = vpop.xlane.xlu0 %1570
    %v1572 = vsel %vm290, %v1550, -inf
    %1573 = vmax.xlane.f32.xlu0 %v1572
    %v1574 = vpop.xlane.xlu0 %1573
    %v1575 = vsub.f32 %v1543, %v1553
    %v1576 = vsub.f32 %v1544, %v1556
    %v1577 = vsub.f32 %v1545, %v1559
    %v1578 = vsub.f32 %v1546, %v1562
    %v1579 = vsub.f32 %v1547, %v1565
    %v1580 = vsub.f32 %v1548, %v1568
    %v1581 = vsub.f32 %v1549, %v1571
    %v1582 = vsub.f32 %v1550, %v1574
    %v1583 = vmul.f32 %v1575, 1.442695
    %v1584 = vpow.pop %v1583
    %v1585 = vmul.f32 %v1576, 1.442695
    %v1586 = vpow.pop %v1585
    %v1587 = vmul.f32 %v1577, 1.442695
    %v1588 = vpow.pop %v1587
    %v1589 = vmul.f32 %v1578, 1.442695
    %v1590 = vpow.pop %v1589
    %v1591 = vmul.f32 %v1579, 1.442695
    %v1592 = vpow.pop %v1591
    %v1593 = vmul.f32 %v1580, 1.442695
    %v1594 = vpow.pop %v1593
    %v1595 = vmul.f32 %v1581, 1.442695
    %v1596 = vpow.pop %v1595
    %v1597 = vmul.f32 %v1582, 1.442695
    %v1598 = vpow.pop %v1597
    %v1599 = vsel %vm290, %v1584, 0.0
    %1600 = vadd.xlane.f32.xlu0 %v1599
    %v1601 = vpop.xlane.xlu0 %1600
    %v1602 = vsel %vm290, %v1586, 0.0
    %1603 = vadd.xlane.f32.xlu0 %v1602
    %v1604 = vpop.xlane.xlu0 %1603
    %v1605 = vsel %vm290, %v1588, 0.0
    %1606 = vadd.xlane.f32.xlu0 %v1605
    %v1607 = vpop.xlane.xlu0 %1606
    %v1608 = vsel %vm290, %v1590, 0.0
    %1609 = vadd.xlane.f32.xlu0 %v1608
    %v1610 = vpop.xlane.xlu0 %1609
    %v1611 = vsel %vm290, %v1592, 0.0
    %1612 = vadd.xlane.f32.xlu0 %v1611
    %v1613 = vpop.xlane.xlu0 %1612
    %v1614 = vsel %vm290, %v1594, 0.0
    %1615 = vadd.xlane.f32.xlu0 %v1614
    %v1616 = vpop.xlane.xlu0 %1615
    %v1617 = vsel %vm290, %v1596, 0.0
    %1618 = vadd.xlane.f32.xlu0 %v1617
    %v1619 = vpop.xlane.xlu0 %1618
    %v1620 = vsel %vm290, %v1598, 0.0
    %1621 = vadd.xlane.f32.xlu0 %v1620
    %v1622 = vpop.xlane.xlu0 %1621
    %v1623 = vrcp.pop %v1601
    %v1624 = vmul.f32 %v1584, %v1623
    %v1625 = vrcp.pop %v1604
    %v1626 = vmul.f32 %v1586, %v1625
    %v1627 = vrcp.pop %v1607
    %v1628 = vmul.f32 %v1588, %v1627
    %v1629 = vrcp.pop %v1610
    %v1630 = vmul.f32 %v1590, %v1629
    %v1631 = vrcp.pop %v1613
    %v1632 = vmul.f32 %v1592, %v1631
    %v1633 = vrcp.pop %v1616
    %v1634 = vmul.f32 %v1594, %v1633
    %v1635 = vrcp.pop %v1619
    %v1636 = vmul.f32 %v1596, %v1635
    %v1637 = vrcp.pop %v1622
    %v1638 = vmul.f32 %v1598, %v1637
    %v1639 = vpack.c.bf16 %v1626, %v1624
    %v1640 = vpack.c.bf16 %v1630, %v1628
    %v1641 = vpack.c.bf16 %v1634, %v1632
    %v1642 = vpack.c.bf16 %v1638, %v1636
    %v1644 = vsel %vm290, %v1639, 0
    %1646 = vmatprep.subr.bf16.mxu0 0
    %1647 = vmatpush1.bf16.msra.mxu0 %v1338
    %1648 = vmatprep.subr.bf16.mxu0 0
    %1649 = vmatpush1.bf16.msra.mxu0 0
    %1650 = vmatprep.subr.bf16.mxu0 0
    %1651 = vmatpush1.bf16.msra.mxu0 0
    %1652 = vmatprep.subr.bf16.mxu0 0
    %1653 = vmatpush1.bf16.msra.mxu0 0
    %1654 = vmatprep.subr.bf16.mxu0 0
    %1655 = vmatpush1.bf16.msra.mxu0 0
    %1656 = vmatprep.subr.bf16.mxu0 0
    %1657 = vmatpush1.bf16.msra.mxu0 0
    %1658 = vmatprep.subr.bf16.mxu0 0
    %1659 = vmatpush1.bf16.msra.mxu0 0
    %1660 = vmatprep.subr.bf16.mxu0 0
    %1661 = vmatpush1.bf16.msra.mxu0 0
    %1662 = vmatprep.subr.bf16.mxu0 0
    %1663 = vmatpush1.bf16.msra.mxu0 0
    %1664 = vmatprep.subr.bf16.mxu0 0
    %1665 = vmatpush1.bf16.msra.mxu0 0
    %1666 = vmatprep.subr.bf16.mxu0 0
    %1667 = vmatpush1.bf16.msra.mxu0 0
    %1668 = vmatprep.subr.bf16.mxu0 0
    %1669 = vmatpush1.bf16.msra.mxu0 0
    %1670 = vmatprep.subr.bf16.mxu0 0
    %1671 = vmatpush1.bf16.msra.mxu0 0
    %1672 = vmatprep.subr.bf16.mxu0 0
    %1673 = vmatpush1.bf16.msra.mxu0 0
    %1674 = vmatprep.subr.bf16.mxu0 0
    %1675 = vmatpush1.bf16.msra.mxu0 0
    %1676 = vmatprep.subr.bf16.mxu0 0
    %1677 = vmatpush1.bf16.msra.mxu0 0
    %1678 = vmatprep.mubr.bf16.mxu0 0
    %1679 = vmatmul.mubr.bf16.gmra.mrb[0].mxu0 %v1644
    %v1680 = vpop.f32.mrb[0].mxu0
    %v1681 = vadd.f32 0.0, %v1680
    %v1682 = vpop.f32.mrb[0].mxu0
    %v1683 = vpop.f32.mrb[0].mxu0
    %v1684 = vadd.f32 0.0, %v1683
    %v1685 = vpop.f32.mrb[0].mxu0
    %1686 = vdwg.mxu0
    %1688 = vrot.lane.b32.xlu0 %v1338, 112
    %v1689 = vpop.permute.xlu0 %1688
    %v1692 = vsel %vm290, %v1640, 0
    %1694 = vmatprep.subr.bf16.mxu0 0
    %1695 = vmatpush1.bf16.msra.mxu0 %v1689
    %1696 = vmatprep.subr.bf16.mxu0 0
    %1697 = vmatpush1.bf16.msra.mxu0 0
    %1698 = vmatprep.subr.bf16.mxu0 0
    %1699 = vmatpush1.bf16.msra.mxu0 0
    %1700 = vmatprep.subr.bf16.mxu0 0
    %1701 = vmatpush1.bf16.msra.mxu0 0
    %1702 = vmatprep.subr.bf16.mxu0 0
    %1703 = vmatpush1.bf16.msra.mxu0 0
    %1704 = vmatprep.subr.bf16.mxu0 0
    %1705 = vmatpush1.bf16.msra.mxu0 0
    %1706 = vmatprep.subr.bf16.mxu0 0
    %1707 = vmatpush1.bf16.msra.mxu0 0
    %1708 = vmatprep.subr.bf16.mxu0 0
    %1709 = vmatpush1.bf16.msra.mxu0 0
    %1710 = vmatprep.subr.bf16.mxu0 0
    %1711 = vmatpush1.bf16.msra.mxu0 0
    %1712 = vmatprep.subr.bf16.mxu0 0
    %1713 = vmatpush1.bf16.msra.mxu0 0
    %1714 = vmatprep.subr.bf16.mxu0 0
    %1715 = vmatpush1.bf16.msra.mxu0 0
    %1716 = vmatprep.subr.bf16.mxu0 0
    %1717 = vmatpush1.bf16.msra.mxu0 0
    %1718 = vmatprep.subr.bf16.mxu0 0
    %1719 = vmatpush1.bf16.msra.mxu0 0
    %1720 = vmatprep.subr.bf16.mxu0 0
    %1721 = vmatpush1.bf16.msra.mxu0 0
    %1722 = vmatprep.subr.bf16.mxu0 0
    %1723 = vmatpush1.bf16.msra.mxu0 0
    %1724 = vmatprep.subr.bf16.mxu0 0
    %1725 = vmatpush1.bf16.msra.mxu0 0
    %1726 = vmatprep.mubr.bf16.mxu0 0
    %1727 = vmatmul.mubr.bf16.gmra.mrb[0].mxu0 %v1692
    %v1728 = vpop.f32.mrb[0].mxu0
    %v1729 = vadd.f32 0.0, %v1728
    %v1730 = vpop.f32.mrb[0].mxu0
    %v1731 = vpop.f32.mrb[0].mxu0
    %v1732 = vadd.f32 0.0, %v1731
    %v1733 = vpop.f32.mrb[0].mxu0
    %1734 = vdwg.mxu0
    %1735 = vrot.lane.b32.xlu0 %v1338, 96
    %v1736 = vpop.permute.xlu0 %1735
    %v1739 = vsel %vm290, %v1641, 0
    %1741 = vmatprep.subr.bf16.mxu0 0
    %1742 = vmatpush1.bf16.msra.mxu0 %v1736
    %1743 = vmatprep.subr.bf16.mxu0 0
    %1744 = vmatpush1.bf16.msra.mxu0 0
    %1745 = vmatprep.subr.bf16.mxu0 0
    %1746 = vmatpush1.bf16.msra.mxu0 0
    %1747 = vmatprep.subr.bf16.mxu0 0
    %1748 = vmatpush1.bf16.msra.mxu0 0
    %1749 = vmatprep.subr.bf16.mxu0 0
    %1750 = vmatpush1.bf16.msra.mxu0 0
    %1751 = vmatprep.subr.bf16.mxu0 0
    %1752 = vmatpush1.bf16.msra.mxu0 0
    %1753 = vmatprep.subr.bf16.mxu0 0
    %1754 = vmatpush1.bf16.msra.mxu0 0
    %1755 = vmatprep.subr.bf16.mxu0 0
    %1756 = vmatpush1.bf16.msra.mxu0 0
    %1757 = vmatprep.subr.bf16.mxu0 0
    %1758 = vmatpush1.bf16.msra.mxu0 0
    %1759 = vmatprep.subr.bf16.mxu0 0
    %1760 = vmatpush1.bf16.msra.mxu0 0
    %1761 = vmatprep.subr.bf16.mxu0 0
    %1762 = vmatpush1.bf16.msra.mxu0 0
    %1763 = vmatprep.subr.bf16.mxu0 0
    %1764 = vmatpush1.bf16.msra.mxu0 0
    %1765 = vmatprep.subr.bf16.mxu0 0
    %1766 = vmatpush1.bf16.msra.mxu0 0
    %1767 = vmatprep.subr.bf16.mxu0 0
    %1768 = vmatpush1.bf16.msra.mxu0 0
    %1769 = vmatprep.subr.bf16.mxu0 0
    %1770 = vmatpush1.bf16.msra.mxu0 0
    %1771 = vmatprep.subr.bf16.mxu0 0
    %1772 = vmatpush1.bf16.msra.mxu0 0
    %1773 = vmatprep.mubr.bf16.mxu0 0
    %1774 = vmatmul.mubr.bf16.gmra.mrb[0].mxu0 %v1739
    %v1775 = vpop.f32.mrb[0].mxu0
    %v1776 = vadd.f32 0.0, %v1775
    %v1777 = vpop.f32.mrb[0].mxu0
    %v1778 = vpop.f32.mrb[0].mxu0
    %v1779 = vadd.f32 0.0, %v1778
    %v1780 = vpop.f32.mrb[0].mxu0
    %1781 = vdwg.mxu0
    %1782 = vrot.lane.b32.xlu0 %v1338, 80
    %v1783 = vpop.permute.xlu0 %1782
    %v1786 = vsel %vm290, %v1642, 0
    %1788 = vmatprep.subr.bf16.mxu0 0
    %1789 = vmatpush1.bf16.msra.mxu0 %v1783
    %1790 = vmatprep.subr.bf16.mxu0 0
    %1791 = vmatpush1.bf16.msra.mxu0 0
    %1792 = vmatprep.subr.bf16.mxu0 0
    %1793 = vmatpush1.bf16.msra.mxu0 0
    %1794 = vmatprep.subr.bf16.mxu0 0
    %1795 = vmatpush1.bf16.msra.mxu0 0
    %1796 = vmatprep.subr.bf16.mxu0 0
    %1797 = vmatpush1.bf16.msra.mxu0 0
    %1798 = vmatprep.subr.bf16.mxu0 0
    %1799 = vmatpush1.bf16.msra.mxu0 0
    %1800 = vmatprep.subr.bf16.mxu0 0
    %1801 = vmatpush1.bf16.msra.mxu0 0
    %1802 = vmatprep.subr.bf16.mxu0 0
    %1803 = vmatpush1.bf16.msra.mxu0 0
    %1804 = vmatprep.subr.bf16.mxu0 0
    %1805 = vmatpush1.bf16.msra.mxu0 0
    %1806 = vmatprep.subr.bf16.mxu0 0
    %1807 = vmatpush1.bf16.msra.mxu0 0
    %1808 = vmatprep.subr.bf16.mxu0 0
    %1809 = vmatpush1.bf16.msra.mxu0 0
    %1810 = vmatprep.subr.bf16.mxu0 0
    %1811 = vmatpush1.bf16.msra.mxu0 0
    %1812 = vmatprep.subr.bf16.mxu0 0
    %1813 = vmatpush1.bf16.msra.mxu0 0
    %1814 = vmatprep.subr.bf16.mxu0 0
    %1815 = vmatpush1.bf16.msra.mxu0 0
    %1816 = vmatprep.subr.bf16.mxu0 0
    %1817 = vmatpush1.bf16.msra.mxu0 0
    %1818 = vmatprep.subr.bf16.mxu0 0
    %1819 = vmatpush1.bf16.msra.mxu0 0
    %1820 = vmatprep.mubr.bf16.mxu0 0
    %1821 = vmatmul.mubr.bf16.gmra.mrb[0].mxu0 %v1786
    %v1822 = vpop.f32.mrb[0].mxu0
    %v1823 = vadd.f32 0.0, %v1822
    %v1824 = vpop.f32.mrb[0].mxu0
    %v1825 = vpop.f32.mrb[0].mxu0
    %v1826 = vadd.f32 0.0, %v1825
    %v1827 = vpop.f32.mrb[0].mxu0
    %1828 = vdwg.mxu0
    %1831 = vrot.lane.b32.xlu0 %v1729, 16
    %v1832 = vpop.permute.xlu0 %1831
    %1833 = vrot.lane.b32.xlu0 %v1732, 16
    %v1834 = vpop.permute.xlu0 %1833
    %1839 = vrot.lane.b32.xlu0 %v1776, 32
    %v1840 = vpop.permute.xlu0 %1839
    %1841 = vrot.lane.b32.xlu0 %v1779, 32
    %v1842 = vpop.permute.xlu0 %1841
    %1847 = vrot.lane.b32.xlu0 %v1823, 48
    %v1848 = vpop.permute.xlu0 %1847
    %1849 = vrot.lane.b32.xlu0 %v1826, 48
    %v1850 = vpop.permute.xlu0 %1849
    %v1853 = vsel %vm290, %v1681, %v1832
    %v1854 = vsel %vm290, %v1684, %v1834
    %v1855 = vsel %vm804, %v1853, %v1840
    %v1856 = vsel %vm804, %v1854, %v1842
    %v1857 = vsel %vm807, %v1855, %v1848
    %v1858 = vsel %vm807, %v1856, %v1850
    %v1859 = vpack.c.bf16 %v1858, %v1857
    %v1860 = vlaneseq
    %v1861 = vshrl.u32 %v1860, 7
    %v1862 = vsub.s32 0, %v1861
    %v1863 = vrot.slane %v1233, %v1862
    %v1872 = vunpack.c.l.b16 %v1196
    %v1873 = vunpack.c.l.b16 %v1197
    %v1874 = vunpack.c.l.b16 %v1198
    %v1875 = vunpack.c.l.b16 %v1199
    %v1876 = vunpack.c.l.b16 %v1200
    %v1877 = vunpack.c.l.b16 %v1201
    %v1878 = vunpack.c.l.b16 %v1202
    %v1879 = vunpack.c.l.b16 %v1203
    %v1880 = vpack.c.b16 %v1873, %v1872
    %v1881 = vpack.c.b16 %v1875, %v1874
    %v1882 = vpack.c.b16 %v1877, %v1876
    %v1883 = vpack.c.b16 %v1879, %v1878
    %v1889 = vsel %vm93, %v1859, 0
    %1891 = vmatprep.subr.bf16.mxu0 0
    %1892 = vmatpush1.bf16.msra.mxu0 %v1880
    %1893 = vmatprep.subr.bf16.mxu0 0
    %1894 = vmatpush1.bf16.msra.mxu0 %v1881
    %1895 = vmatprep.subr.bf16.mxu0 0
    %1896 = vmatpush1.bf16.msra.mxu0 %v1882
    %1897 = vmatprep.subr.bf16.mxu0 0
    %1898 = vmatpush1.bf16.msra.mxu0 %v1883
    %1899 = vmatprep.subr.bf16.mxu0 0
    %1900 = vmatpush1.bf16.msra.mxu0 0
    %1901 = vmatprep.subr.bf16.mxu0 0
    %1902 = vmatpush1.bf16.msra.mxu0 0
    %1903 = vmatprep.subr.bf16.mxu0 0
    %1904 = vmatpush1.bf16.msra.mxu0 0
    %1905 = vmatprep.subr.bf16.mxu0 0
    %1906 = vmatpush1.bf16.msra.mxu0 0
    %1907 = vmatprep.subr.bf16.mxu0 0
    %1908 = vmatpush1.bf16.msra.mxu0 0
    %1909 = vmatprep.subr.bf16.mxu0 0
    %1910 = vmatpush1.bf16.msra.mxu0 0
    %1911 = vmatprep.subr.bf16.mxu0 0
    %1912 = vmatpush1.bf16.msra.mxu0 0
    %1913 = vmatprep.subr.bf16.mxu0 0
    %1914 = vmatpush1.bf16.msra.mxu0 0
    %1915 = vmatprep.subr.bf16.mxu0 0
    %1916 = vmatpush1.bf16.msra.mxu0 0
    %1917 = vmatprep.subr.bf16.mxu0 0
    %1918 = vmatpush1.bf16.msra.mxu0 0
    %1919 = vmatprep.subr.bf16.mxu0 0
    %1920 = vmatpush1.bf16.msra.mxu0 0
    %1921 = vmatprep.subr.bf16.mxu0 0
    %1922 = vmatpush1.bf16.msra.mxu0 0
    %1923 = vmatprep.mubr.bf16.mxu0 0
    %1924 = vmatmul.mubr.bf16.gmra.mrb[0].mxu0 %v1889
    %v1925 = vpop.f32.mrb[0].mxu0
    %v1926 = vadd.f32 %v1863, %v1925
    %v1927 = vpop.f32.mrb[0].mxu0
    %v1928 = vpop.f32.mrb[0].mxu0
    %v1929 = vadd.f32 %v1863, %v1928
    %v1930 = vpop.f32.mrb[0].mxu0
    %1931 = vdwg.mxu0
    %v1932 = vadd.f32 %v1184, %v1926
    %v1933 = vadd.f32 %v1185, %v1929
    %v1934 = vsel %vm93, %v1932, 0.0
    %1935 = vadd.xlane.f32.xlu0 %v1934
    %v1936 = vpop.xlane.xlu0 %1935
    %v1937 = vsel %vm93, %v1933, 0.0
    %1938 = vadd.xlane.f32.xlu0 %v1937
    %v1939 = vpop.xlane.xlu0 %1938
    %v1940 = vmul.f32 %v1936, %v100
    %v1941 = vmul.f32 %v1939, %v100
    %v1942 = vsub.f32 %v1932, %v1940
    %v1943 = vsub.f32 %v1933, %v1941
    %v1944 = vmul.f32 %v1942, %v1942
    %v1945 = vmul.f32 %v1943, %v1943
    %v1946 = vsel %vm93, %v1944, 0.0
    %1947 = vadd.xlane.f32.xlu0 %v1946
    %v1948 = vpop.xlane.xlu0 %1947
    %v1949 = vsel %vm93, %v1945, 0.0
    %1950 = vadd.xlane.f32.xlu0 %v1949
    %v1951 = vpop.xlane.xlu0 %1950
    %v1952 = vmul.f32 %v1948, %v100
    %v1953 = vmul.f32 %v1951, %v100
    %v1954 = vadd.f32 %v1952, 1e-05
    %v1955 = vadd.f32 %v1953, 1e-05
    %v1956 = vrsqrt.pop %v1954
    %v1957 = vrsqrt.pop %v1955
    %v1958 = vmul.f32 %v1942, %v1956
    %v1959 = vmul.f32 %v1943, %v1957
    %v1960 = vlaneseq
    %v1961 = vshrl.u32 %v1960, 7
    %v1962 = vsub.s32 1, %v1961
    %v1963 = vrot.slane %v1233, %v1962
    %v1964 = vmul.f32 %v1958, %v1963
    %v1965 = vmul.f32 %v1959, %v1963
    %v1966 = vlaneseq
    %v1967 = vshrl.u32 %v1966, 7
    %v1968 = vsub.s32 2, %v1967
    %v1969 = vrot.slane %v1233, %v1968
    %v1970 = vadd.f32 %v1964, %v1969
    %v1971 = vadd.f32 %v1965, %v1969
    %v1972 = vpack.c.bf16 %v1971, %v1970
    %v1974 = vlaneseq
    %v1975 = vshrl.u32 %v1974, 7
    %v1976 = vsub.s32 0, %v1975
    %v1977 = vrot.slane %v1235, %v1976
    %v1987 = vunpack.c.l.b16 %v1205
    %v1988 = vunpack.c.l.b16 %v1206
    %v1989 = vunpack.c.l.b16 %v1207
    %v1990 = vunpack.c.l.b16 %v1208
    %v1991 = vunpack.c.l.b16 %v1209
    %v1992 = vunpack.c.l.b16 %v1210
    %v1993 = vunpack.c.l.b16 %v1211
    %v1994 = vunpack.c.l.b16 %v1212
    %v1995 = vpack.c.b16 %v1988, %v1987
    %v1996 = vpack.c.b16 %v1990, %v1989
    %v1997 = vpack.c.b16 %v1992, %v1991
    %v1998 = vpack.c.b16 %v1994, %v1993
    %v2004 = vsel %vm93, %v1972, 0
    %2006 = vmatprep.subr.bf16.mxu0 0
    %2007 = vmatpush1.bf16.msra.mxu0 %v1995
    %2008 = vmatprep.subr.bf16.mxu0 0
    %2009 = vmatpush1.bf16.msra.mxu0 %v1996
    %2010 = vmatprep.subr.bf16.mxu0 0
    %2011 = vmatpush1.bf16.msra.mxu0 %v1997
    %2012 = vmatprep.subr.bf16.mxu0 0
    %2013 = vmatpush1.bf16.msra.mxu0 %v1998
    %2014 = vmatprep.subr.bf16.mxu0 0
    %2015 = vmatpush1.bf16.msra.mxu0 0
    %2016 = vmatprep.subr.bf16.mxu0 0
    %2017 = vmatpush1.bf16.msra.mxu0 0
    %2018 = vmatprep.subr.bf16.mxu0 0
    %2019 = vmatpush1.bf16.msra.mxu0 0
    %2020 = vmatprep.subr.bf16.mxu0 0
    %2021 = vmatpush1.bf16.msra.mxu0 0
    %2022 = vmatprep.subr.bf16.mxu0 0
    %2023 = vmatpush1.bf16.msra.mxu0 0
    %2024 = vmatprep.subr.bf16.mxu0 0
    %2025 = vmatpush1.bf16.msra.mxu0 0
    %2026 = vmatprep.subr.bf16.mxu0 0
    %2027 = vmatpush1.bf16.msra.mxu0 0
    %2028 = vmatprep.subr.bf16.mxu0 0
    %2029 = vmatpush1.bf16.msra.mxu0 0
    %2030 = vmatprep.subr.bf16.mxu0 0
    %2031 = vmatpush1.bf16.msra.mxu0 0
    %2032 = vmatprep.subr.bf16.mxu0 0
    %2033 = vmatpush1.bf16.msra.mxu0 0
    %2034 = vmatprep.subr.bf16.mxu0 0
    %2035 = vmatpush1.bf16.msra.mxu0 0
    %2036 = vmatprep.subr.bf16.mxu0 0
    %2037 = vmatpush1.bf16.msra.mxu0 0
    %2038 = vmatprep.mubr.bf16.mxu0 0
    %2039 = vmatmul.mubr.bf16.gmra.mrb[0].mxu0 %v2004
    %v2040 = vpop.f32.mrb[0].mxu0
    %v2041 = vadd.f32 %v1977, %v2040
    %v2042 = vpop.f32.mrb[0].mxu0
    %v2043 = vpop.f32.mrb[0].mxu0
    %v2044 = vadd.f32 %v1977, %v2043
    %v2045 = vpop.f32.mrb[0].mxu0
    %2046 = vdwg.mxu0
    %v2047 = vmul.f32 %v2041, 0.5
    %v2048 = vmul.f32 %v2044, 0.5
    %v2049 = vmul.f32 %v2041, 0.70710677
    %v2050 = vmul.f32 %v2044, 0.70710677
    %vm2051 = vcmp.ge.f32.partialorder %v2049, 0.0
    %vm2052 = vcmp.ge.f32.partialorder %v2050, 0.0
    %v2053 = vsel %vm2051, 1.0, -1.0
    %v2054 = vsel %vm2052, 1.0, -1.0
    %v2055 = vand.u32 2147483647, %v2049
    %v2056 = vand.u32 2147483647, %v2050
    %v2057 = vmul.f32 %v2055, 0.3275911
    %v2058 = vmul.f32 %v2056, 0.3275911
    %v2059 = vadd.f32 %v2057, 1.0
    %v2060 = vadd.f32 %v2058, 1.0
    %v2061 = vrcp.pop %v2059
    %v2062 = vmul.f32 1.0, %v2061
    %v2063 = vrcp.pop %v2060
    %v2064 = vmul.f32 1.0, %v2063
    %v2065 = vmul.f32 %v2062, 1.0614054
    %v2066 = vmul.f32 %v2064, 1.0614054
    %v2067 = vadd.f32 %v2065, -1.4531521
    %v2068 = vadd.f32 %v2066, -1.4531521
    %v2069 = vmul.f32 %v2067, %v2062
    %v2070 = vmul.f32 %v2068, %v2064
    %v2071 = vadd.f32 %v2069, 1.4214138
    %v2072 = vadd.f32 %v2070, 1.4214138
    %v2073 = vmul.f32 %v2071, %v2062
    %v2074 = vmul.f32 %v2072, %v2064
    %v2075 = vadd.f32 %v2073, -0.28449672
    %v2076 = vadd.f32 %v2074, -0.28449672
    %v2077 = vmul.f32 %v2075, %v2062
    %v2078 = vmul.f32 %v2076, %v2064
    %v2079 = vadd.f32 %v2077, 0.2548296
    %v2080 = vadd.f32 %v2078, 0.2548296
    %v2081 = vmul.f32 %v2079, %v2062
    %v2082 = vmul.f32 %v2080, %v2064
    %v2083 = vsub.f32 0.0, %v2055
    %v2084 = vsub.f32 0.0, %v2056
    %v2085 = vmul.f32 %v2083, %v2055
    %v2086 = vmul.f32 %v2084, %v2056
    %v2087 = vmul.f32 %v2085, 1.442695
    %v2088 = vpow.pop %v2087
    %v2089 = vmul.f32 %v2086, 1.442695
    %v2090 = vpow.pop %v2089
    %v2091 = vmul.f32 %v2081, %v2088
    %v2092 = vmul.f32 %v2082, %v2090
    %v2093 = vsub.f32 1.0, %v2091
    %v2094 = vsub.f32 1.0, %v2092
    %v2095 = vmul.f32 %v2053, %v2093
    %v2096 = vmul.f32 %v2054, %v2094
    %v2097 = vadd.f32 %v2095, 1.0
    %v2098 = vadd.f32 %v2096, 1.0
    %v2099 = vmul.f32 %v2047, %v2097
    %v2100 = vmul.f32 %v2048, %v2098
    %v2101 = vpack.c.bf16 %v2100, %v2099
    %v2102 = vlaneseq
    %v2103 = vshrl.u32 %v2102, 7
    %v2104 = vsub.s32 3, %v2103
    %v2105 = vrot.slane %v1233, %v2104
    %v2122 = vunpack.c.l.b16 %v1214
    %v2123 = vunpack.c.l.b16 %v1215
    %v2124 = vunpack.c.l.b16 %v1216
    %v2125 = vunpack.c.l.b16 %v1217
    %v2126 = vunpack.c.l.b16 %v1218
    %v2127 = vunpack.c.l.b16 %v1219
    %v2128 = vunpack.c.l.b16 %v1220
    %v2129 = vunpack.c.l.b16 %v1221
    %v2130 = vunpack.c.l.b16 %v1222
    %v2131 = vunpack.c.l.b16 %v1223
    %v2132 = vunpack.c.l.b16 %v1224
    %v2133 = vunpack.c.l.b16 %v1225
    %v2134 = vunpack.c.l.b16 %v1226
    %v2135 = vunpack.c.l.b16 %v1227
    %v2136 = vunpack.c.l.b16 %v1228
    %v2137 = vunpack.c.l.b16 %v1229
    %v2138 = vpack.c.b16 %v2123, %v2122
    %v2139 = vpack.c.b16 %v2125, %v2124
    %v2140 = vpack.c.b16 %v2127, %v2126
    %v2141 = vpack.c.b16 %v2129, %v2128
    %v2142 = vpack.c.b16 %v2131, %v2130
    %v2143 = vpack.c.b16 %v2133, %v2132
    %v2144 = vpack.c.b16 %v2135, %v2134
    %v2145 = vpack.c.b16 %v2137, %v2136
    %2154 = vmatprep.subr.bf16.mxu0 0
    %2155 = vmatpush1.bf16.msra.mxu0 %v2138
    %2156 = vmatprep.subr.bf16.mxu0 0
    %2157 = vmatpush1.bf16.msra.mxu0 %v2139
    %2158 = vmatprep.subr.bf16.mxu0 0
    %2159 = vmatpush1.bf16.msra.mxu0 %v2140
    %2160 = vmatprep.subr.bf16.mxu0 0
    %2161 = vmatpush1.bf16.msra.mxu0 %v2141
    %2162 = vmatprep.subr.bf16.mxu0 0
    %2163 = vmatpush1.bf16.msra.mxu0 %v2142
    %2164 = vmatprep.subr.bf16.mxu0 0
    %2165 = vmatpush1.bf16.msra.mxu0 %v2143
    %2166 = vmatprep.subr.bf16.mxu0 0
    %2167 = vmatpush1.bf16.msra.mxu0 %v2144
    %2168 = vmatprep.subr.bf16.mxu0 0
    %2169 = vmatpush1.bf16.msra.mxu0 %v2145
    %2170 = vmatprep.subr.bf16.mxu0 0
    %2171 = vmatpush1.bf16.msra.mxu0 0
    %2172 = vmatprep.subr.bf16.mxu0 0
    %2173 = vmatpush1.bf16.msra.mxu0 0
    %2174 = vmatprep.subr.bf16.mxu0 0
    %2175 = vmatpush1.bf16.msra.mxu0 0
    %2176 = vmatprep.subr.bf16.mxu0 0
    %2177 = vmatpush1.bf16.msra.mxu0 0
    %2178 = vmatprep.subr.bf16.mxu0 0
    %2179 = vmatpush1.bf16.msra.mxu0 0
    %2180 = vmatprep.subr.bf16.mxu0 0
    %2181 = vmatpush1.bf16.msra.mxu0 0
    %2182 = vmatprep.subr.bf16.mxu0 0
    %2183 = vmatpush1.bf16.msra.mxu0 0
    %2184 = vmatprep.subr.bf16.mxu0 0
    %2185 = vmatpush1.bf16.msra.mxu0 0
    %2186 = vmatprep.mubr.bf16.mxu0 0
    %2187 = vmatmul.mubr.bf16.gmra.mrb[0].mxu0 %v2101
    %v2188 = vpop.f32.mrb[0].mxu0
    %v2189 = vadd.f32 %v2105, %v2188
    %v2190 = vpop.f32.mrb[0].mxu0
    %v2191 = vpop.f32.mrb[0].mxu0
    %v2192 = vadd.f32 %v2105, %v2191
    %v2193 = vpop.f32.mrb[0].mxu0
    %2194 = vdwg.mxu0
    %v2195 = vadd.f32 %v1970, %v2189
    %v2196 = vadd.f32 %v1971, %v2192
    %v2197 = vsel %vm93, %v2195, 0.0
    %2198 = vadd.xlane.f32.xlu0 %v2197
    %v2199 = vpop.xlane.xlu0 %2198
    %v2200 = vsel %vm93, %v2196, 0.0
    %2201 = vadd.xlane.f32.xlu0 %v2200
    %v2202 = vpop.xlane.xlu0 %2201
    %v2203 = vmul.f32 %v2199, %v100
    %v2204 = vmul.f32 %v2202, %v100
    %v2205 = vsub.f32 %v2195, %v2203
    %v2206 = vsub.f32 %v2196, %v2204
    %v2207 = vmul.f32 %v2205, %v2205
    %v2208 = vmul.f32 %v2206, %v2206
    %v2209 = vsel %vm93, %v2207, 0.0
    %2210 = vadd.xlane.f32.xlu0 %v2209
    %v2211 = vpop.xlane.xlu0 %2210
    %v2212 = vsel %vm93, %v2208, 0.0
    %2213 = vadd.xlane.f32.xlu0 %v2212
    %v2214 = vpop.xlane.xlu0 %2213
    %v2215 = vmul.f32 %v2211, %v100
    %v2216 = vmul.f32 %v2214, %v100
    %v2217 = vadd.f32 %v2215, 1e-05
    %v2218 = vadd.f32 %v2216, 1e-05
    %v2219 = vrsqrt.pop %v2217
    %v2220 = vrsqrt.pop %v2218
    %v2221 = vmul.f32 %v2205, %v2219
    %v2222 = vmul.f32 %v2206, %v2220
    %v2223 = vlaneseq
    %v2224 = vshrl.u32 %v2223, 7
    %v2225 = vsub.s32 4, %v2224
    %v2226 = vrot.slane %v1233, %v2225
    %v2227 = vmul.f32 %v2221, %v2226
    %v2228 = vmul.f32 %v2222, %v2226
    %v2229 = vlaneseq
    %v2230 = vshrl.u32 %v2229, 7
    %v2231 = vsub.s32 5, %v2230
    %v2232 = vrot.slane %v1233, %v2231
    %v2233 = vadd.f32 %v2227, %v2232
    %v2234 = vadd.f32 %v2228, %v2232
    %v2236 = vrot.slane %v2234, 7
    %vm2238 = vcmask 1040384
    %v2239 = vsel %vm2238, %v2233, %v2236
    %v2240 = vpack.c.bf16 %v2239, %v2239
    %v2241 = vld [vmem:[#allocation7] sm:$0xf]
    %v2242 = vld [vmem:[#allocation7 + $0x4] sm:$0xf]
    %v2243 = vld [vmem:[#allocation7 + $0x8] sm:$0xf]
    %v2244 = vld [vmem:[#allocation7 + $0xc] sm:$0xf]
    %v2245 = vld [vmem:[#allocation7 + $0x10] sm:$0xf]
    %v2246 = vld [vmem:[#allocation7 + $0x14] sm:$0xf]
    %v2247 = vld [vmem:[#allocation7 + $0x18] sm:$0xf]
    %v2248 = vld [vmem:[#allocation7 + $0x1c] sm:$0xf]
    %v2249 = vld [vmem:[%s12] sm:$0x1]
    %v2251 = vlaneseq
    %v2252 = vshrl.u32 %v2251, 7
    %v2253 = vsub.s32 0, %v2252
    %v2254 = vrot.slane %v2249, %v2253
    %v2264 = vunpack.c.l.b16 %v2241
    %v2265 = vunpack.c.l.b16 %v2242
    %v2266 = vunpack.c.l.b16 %v2243
    %v2267 = vunpack.c.l.b16 %v2244
    %v2268 = vunpack.c.l.b16 %v2245
    %v2269 = vunpack.c.l.b16 %v2246
    %v2270 = vunpack.c.l.b16 %v2247
    %v2271 = vunpack.c.l.b16 %v2248
    %v2272 = vpack.c.b16 %v2265, %v2264
    %v2273 = vpack.c.b16 %v2267, %v2266
    %v2274 = vpack.c.b16 %v2269, %v2268
    %v2275 = vpack.c.b16 %v2271, %v2270
    %v2281 = vsel %vm93, %v2240, 0
    %2283 = vmatprep.subr.bf16.mxu0 0
    %2284 = vmatpush1.bf16.msra.mxu0 %v2272
    %2285 = vmatprep.subr.bf16.mxu0 0
    %2286 = vmatpush1.bf16.msra.mxu0 %v2273
    %2287 = vmatprep.subr.bf16.mxu0 0
    %2288 = vmatpush1.bf16.msra.mxu0 %v2274
    %2289 = vmatprep.subr.bf16.mxu0 0
    %2290 = vmatpush1.bf16.msra.mxu0 %v2275
    %2291 = vmatprep.subr.bf16.mxu0 0
    %2292 = vmatpush1.bf16.msra.mxu0 0
    %2293 = vmatprep.subr.bf16.mxu0 0
    %2294 = vmatpush1.bf16.msra.mxu0 0
    %2295 = vmatprep.subr.bf16.mxu0 0
    %2296 = vmatpush1.bf16.msra.mxu0 0
    %2297 = vmatprep.subr.bf16.mxu0 0
    %2298 = vmatpush1.bf16.msra.mxu0 0
    %2299 = vmatprep.subr.bf16.mxu0 0
    %2300 = vmatpush1.bf16.msra.mxu0 0
    %2301 = vmatprep.subr.bf16.mxu0 0
    %2302 = vmatpush1.bf16.msra.mxu0 0
    %2303 = vmatprep.subr.bf16.mxu0 0
    %2304 = vmatpush1.bf16.msra.mxu0 0
    %2305 = vmatprep.subr.bf16.mxu0 0
    %2306 = vmatpush1.bf16.msra.mxu0 0
    %2307 = vmatprep.subr.bf16.mxu0 0
    %2308 = vmatpush1.bf16.msra.mxu0 0
    %2309 = vmatprep.subr.bf16.mxu0 0
    %2310 = vmatpush1.bf16.msra.mxu0 0
    %2311 = vmatprep.subr.bf16.mxu0 0
    %2312 = vmatpush1.bf16.msra.mxu0 0
    %2313 = vmatprep.subr.bf16.mxu0 0
    %2314 = vmatpush1.bf16.msra.mxu0 0
    %2315 = vmatprep.mubr.bf16.mxu0 0
    %2316 = vmatmul.mubr.bf16.gmra.mrb[0].mxu0 %v2281
    %v2317 = vpop.f32.mrb[0].mxu0
    %v2318 = vadd.f32 %v2254, %v2317
    %v2319 = vpop.f32.mrb[0].mxu0
    %v2320 = vpop.f32.mrb[0].mxu0
    %v2321 = vpop.f32.mrb[0].mxu0
    %2322 = vdwg.mxu0
    %2323 = vst [vmem:[#allocation8] sm:$0x3] %v2318
    %v2324 = vlaneseq
    %v2325 = vand.u32 %v2324, 127
    %vm2326 = vcmp.lt.s32.totalorder %v2325, 4
    %v2327 = vsel %vm2326, %v2318, -1e+30
    %vm2328 = vcmask 1041408
    %v2329 = vsel %vm2328, %v2327, -inf
    %2330 = vmax.xlane.f32.xlu0 %v2329
    %v2331 = vpop.xlane.xlu0 %2330
    %v2332 = vsub.f32 %v2327, %v2331
    %v2333 = vmul.f32 %v2332, 1.442695
    %v2334 = vpow.pop %v2333
    %v2335 = vsel %vm2328, %v2334, 0.0
    %2336 = vadd.xlane.f32.xlu0 %v2335
    %v2337 = vpop.xlane.xlu0 %2336
    %v2338 = vlog2.pop %v2337
    %v2339 = vmul.f32 %v2338, 0.6931472
    %v2340 = vadd.f32 %v2339, %v2331
    %v2341 = vld [vmem:[%s2] sm:$0x3]
    %2342 = vset.pattern.permute.xlu0 0
    %2343 = vperm.xlu0 %2342, %v2341
    %v2344 = vpop.permute.xlu0 %2343
    %vm2345 = vcmp.eq.s32.totalorder %v2325, %v2344
    %v2346 = vsel %vm2345, %v2318, 0.0
    %v2347 = vsel %vm2328, %v2346, 0.0
    %2348 = vadd.xlane.f32.xlu0 %v2347
    %v2349 = vpop.xlane.xlu0 %2348
    %v2350 = vsub.f32 %v2340, %v2349
    %v2351 = vsel %vm2328, %v2350, 0.0
    %v2352 = vrot.slane %v2351, 4
    %v2353 = vadd.f32 %v2351, %v2352
    %v2354 = vrot.slane %v2353, 2
    %v2355 = vadd.f32 %v2353, %v2354
    %v2356 = vrot.slane %v2355, 1
    %v2357 = vadd.f32 %v2355, %v2356
    %v2358 = vmul.f32 %v2357, 0.5
    %vm2359 = vcmask 0
    %2360 = vst.msk [vmem:[#allocation9] sm:$0x1] %vm2359, %v2358
    // Predicated region
    $region66: #{tpu_custom_call.1} parent=1 // pred_check
      _
    $region67: #{tpu_custom_call.1} parent=1 // pred_check_branch
      %2362 = sbr.rel (0) target = $region69
    $region68: #{tpu_custom_call.1} parent=1 // pred_region
      %s2364 = ssub.s32 32, 32
      %2365 = vsyncadd [#allocation4], %s2364
      %s2367 = sshll.u32 [#allocation8], 4
      %s2368 = int_to_ptr.vmem [resolvable:$true] %s2367
      %2370 = dma.vmem_to_hbm [thread:$0]  %s2368, 32, %s13, [#allocation4]
    $region69: #{tpu_custom_call.1} parent=1 // pred_fallthru
      _
    // Predicated region
    $region70: #{tpu_custom_call.1} parent=1 // pred_check
      _
    $region71: #{tpu_custom_call.1} parent=1 // pred_check_branch
      %2372 = sbr.rel (0) target = $region73
    $region72: #{tpu_custom_call.1} parent=1 // pred_region
      %s2374 = ssub.s32 16, 16
      %2375 = vsyncadd [#allocation10], %s2374
      %s2377 = sshll.u32 [#allocation9], 4
      %s2378 = int_to_ptr.vmem [resolvable:$true] %s2377
      %2380 = dma.vmem_to_hbm [thread:$0]  %s2378, 16, %s14, [#allocation10]
    $region73: #{tpu_custom_call.1} parent=1 // pred_fallthru
      _
    // Predicated region
    $region74: #{tpu_custom_call.1} parent=1 // pred_check
      _
    $region75: #{tpu_custom_call.1} parent=1 // pred_check_branch
      %2382 = sbr.rel (0) target = $region77
    $region76: #{tpu_custom_call.1} parent=1 // pred_region
      %2383 = dma.done [#allocation4], 32
    $region77: #{tpu_custom_call.1} parent=1 // pred_fallthru
      _
    // Predicated region
    $region78: #{tpu_custom_call.1} parent=1 // pred_check
      _
    $region79: #{tpu_custom_call.1} parent=1 // pred_check_branch
      %2385 = sbr.rel (0) target = $region81
    $region80: #{tpu_custom_call.1} parent=1 // pred_region
      %2386 = dma.done [#allocation10], 16
    $region81: #{tpu_custom_call.1} parent=1 // pred_fallthru
      _
    %2387 = vsyncpa [#allocation3], 1
    %2388 = vsyncpa [#allocation6], 1
    %2389 = vsyncpa [#allocation4], 1
    %2390 = vsyncpa [#allocation10], 1

</llo_original>
